<compile_context>
chip_gen: v7x
topology: tpu7x:2x2x1
jax: 0.10.0
libtpu: 0.0.40
codegen_flags: <defaults>
</compile_context>

<pallas_src>
import math
import numpy as np
import jax
import jax.numpy as jnp
from jax.experimental import pallas as pl
from jax.experimental.pallas import tpu as pltpu


# ----------------------------- Pallas kernel --------------------------------
def _make_kernel(n_layers):
    """Fused masked-MLP body: n_layers matmuls (masks pre-baked into the bf16
    weights), f32 MXU accumulation, f32 bias add + ReLU on the VPU, bf16 store."""

    def kernel(*refs):
        x_ref = refs[0]
        o_ref = refs[-1]
        wb = refs[1:-1]                      # interleaved (w, b) refs

        # x arrives as f32 straight from HBM; the bf16 cast here is free VPU
        # filler under the MXU (removes a standalone XLA cast pass over x).
        h = x_ref[...].astype(jnp.bfloat16)

        for i in range(n_layers):
            w_ref = wb[2 * i]
            b_ref = wb[2 * i + 1]
            z = jnp.dot(h, w_ref[...], preferred_element_type=jnp.float32) + b_ref[...]
            if i < n_layers - 1:
                h = jnp.maximum(z, 0.0).astype(jnp.bfloat16)
            else:
                o_ref[...] = z.astype(o_ref.dtype)

    return kernel


# ----------------------------- wrapper ---------------------------------------
def made_forward(x, kernel_params, input_shape, d, tile_batch=512,
                 out_dtype=jnp.bfloat16):
    """x: (batch, *input_shape) -> logits (batch, d, *input_shape).

    kernel_params: list of (w_premasked_bf16 (in, out), bias_f32 (1, out)); the
    final layer's columns are already permuted into (d, nin) order.
    """
    batch = x.shape[0]
    nin = int(np.prod(input_shape))
    nout = nin * d
    n_layers = len(kernel_params)

    x_flat = x.reshape(batch, nin).astype(jnp.float32)

    # Batch tile: big (default 512 rows) so per-grid-step overhead and MXU
    # fill/drain amortize; keep >=2 grid steps when batch allows so both v7x
    # TensorCores are used; round to a multiple of 16 for bf16 sublane packing.
    tb = min(int(tile_batch), max(1, -(-batch // 2)))
    tb = max(16, -(-tb // 16) * 16)

    grid = (pl.cdiv(batch, tb),)             # partial last block masked by Pallas

    flat_args = [x_flat]
    in_specs = [pl.BlockSpec((tb, nin), lambda i: (i, 0))]
    for (w, b) in kernel_params:
        flat_args.extend([w, b])
        # Constant index maps -> weights/biases DMA'd once, resident across steps.
        # TODO(synk): for multi-thousand-wide hidden layers on v7x, single-buffer
        # these resident blocks (pipeline_mode=pl.Buffered(1)) to halve their VMEM.
        in_specs.append(pl.BlockSpec(w.shape, lambda i: (0, 0)))
        in_specs.append(pl.BlockSpec(b.shape, lambda i: (0, 0)))
    out_spec = pl.BlockSpec((tb, nout), lambda i: (i, 0))

    # Exact VMEM budget: weights/biases (x2 default double-buffering),
    # double-buffered x/out tiles, live intermediate activations, + headroom.
    out_itemsize = jnp.dtype(out_dtype).itemsize
    weight_bytes = sum(int(w.size) * w.dtype.itemsize + int(b.size) * b.dtype.itemsize
                       for (w, b) in kernel_params)
    io_bytes = 2 * (tb * nin * 4 + tb * nout * out_itemsize)
    max_width = max(max(int(w.shape[1]) for (w, _) in kernel_params), nin)
    act_bytes = 3 * tb * max_width * 6        # bf16 + f32 copies of a few live layers
    vmem_limit = 2 * weight_bytes + io_bytes + act_bytes + (2 << 20)
    vmem_limit = int(min(max(vmem_limit, 8 << 20), 48 << 20))  # stay below v7x 64 MiB

    out = pl.pallas_call(
        _make_kernel(n_layers),
        out_shape=jax.ShapeDtypeStruct((batch, nout), out_dtype),
        grid=grid,
        in_specs=in_specs,
        out_specs=out_spec,
        compiler_params=pltpu.CompilerParams(
            dimension_semantics=("parallel",),
            vmem_limit_bytes=vmem_limit),
    )(*flat_args)

    # Final-layer columns were pre-permuted into (d, nin) order -> plain reshape.
    return out.reshape(batch, d, *input_shape)


# ----------------------------- parameter setup -------------------------------
def build_made_params(input_shape, d, hidden_sizes, seed=0):
    """Deterministic weights/biases (PyTorch Linear-style uniform init) and the
    MADE autoregressive masks (numpy RNG, same construction as create_mask)."""
    nin = int(np.prod(input_shape))
    nout = nin * d
    hs = [nin] + list(hidden_sizes) + [nout]

    # --- masks (replicates MADE.create_mask, one_hot_input=False) ---
    rng = np.random.RandomState(seed)
    ordering = np.arange(nin)
    L = len(hidden_sizes)
    m = {-1: ordering}
    for l in range(L):
        m[l] = rng.randint(m[l - 1].min(), nin - 1, size=hidden_sizes[l])
    mask_list = [m[l - 1][:, None] <= m[l][None, :] for l in range(L)]
    final = m[L - 1][:, None] < m[-1][None, :]
    final = np.repeat(final, d, axis=1)
    mask_list.append(final)
    masks = [jnp.asarray(mk.astype(np.float32)) for mk in mask_list]

    # --- weights/biases, stored transposed: W (in, out), b (1, out) ---
    key = jax.random.PRNGKey(seed)
    params = []
    for h0, h1 in zip(hs, hs[1:]):
        key, kw, kb = jax.random.split(key, 3)
        bound = 1.0 / math.sqrt(h0)
        w = jax.random.uniform(kw, (h0, h1), jnp.float32, -bound, bound)
        b = jax.random.uniform(kb, (1, h1), jnp.float32, -bound, bound)
        params.append((w, b))
    return params, masks


def prepare_kernel_params(params, masks, nin, d):
    """Bake the static masks into the weights, permute the final layer's
    columns into (d, nin) order (kills the post-kernel transpose) and cast
    weights to bf16 (biases stay f32 for the VPU bias add).
    Note: on v5e an int8 weight variant would double MXU throughput, but v7x's
    MXU has no int path, so bf16 is the portable choice here."""
    nout = nin * d
    # new column c*nin + p  <-  old column p*d + c
    perm = np.arange(nout).reshape(nin, d).T.reshape(-1)
    kparams = []
    n = len(params)
    for i, ((w, b), mk) in enumerate(zip(params, masks)):
        wm = w * mk
        bm = b
        if i == n - 1:
            wm = wm[:, perm]
            bm = bm[:, perm]
        kparams.append((wm.astype(jnp.bfloat16), bm.astype(jnp.float32)))
    return kparams


# ----------------------------- references (plain JAX) ------------------------
def made_forward_ref_f32(x, params, masks, input_shape, d):
    """Exact PyTorch-semantics reference (f32, masked weights, view/permute)."""
    batch = x.shape[0]
    nin = int(np.prod(input_shape))
    h = x.astype(jnp.float32).reshape(batch, nin)
    n_layers = len(params)
    for i, ((w, b), mk) in enumerate(zip(params, masks)):
        h = h @ (mk * w) + b
        if i < n_layers - 1:
            h = jnp.maximum(h, 0.0)
    logits = h.reshape(batch, nin, d).transpose(0, 2, 1)
    return logits.reshape(batch, d, *input_shape)


def made_forward_ref_bf16(x, kernel_params, input_shape, d, out_dtype=jnp.bfloat16):
    """Pure-JAX path with the same pre-masked bf16 weights / permuted columns /
    bf16 output as the kernel (tight numerical check of the kernel itself)."""
    batch = x.shape[0]
    nin = int(np.prod(input_shape))
    h = x.astype(jnp.bfloat16).reshape(batch, nin)
    n_layers = len(kernel_params)
    out = None
    for i, (w, b) in enumerate(kernel_params):
        z = jnp.dot(h, w, preferred_element_type=jnp.float32) + b
        if i < n_layers - 1:
            h = jnp.maximum(z, 0.0).astype(jnp.bfloat16)
        else:
            out = z.astype(out_dtype)
    return out.reshape(batch, d, *input_shape)


# ----------------------------------- main ------------------------------------
if __name__ == "__main__":
    input_shape = (4, 4)             # nin = 16
    d = 8                            # categories per pixel -> nout = 128 (lane-dense)
    hidden_sizes = [256, 256, 256]   # 256-wide layers fill the 256x256 MXU on v6e/v7x
    batch = 1024                     # two full 512-row tiles -> both v7x TCs busy

    nin = int(np.prod(input_shape))
    params, masks = build_made_params(input_shape, d, hidden_sizes, seed=0)
    kparams = prepare_kernel_params(params, masks, nin, d)

    key = jax.random.PRNGKey(0)
    x = jax.random.randint(key, (batch,) + input_shape, 0, d).astype(jnp.float32)

    out = made_forward(x, kparams, input_shape, d)
    out = jax.block_until_ready(out)
    assert out.shape == (batch, d) + input_shape

    # Tight check: kernel vs pure-JAX path using identical bf16 weights/output.
    ref_bf16 = made_forward_ref_bf16(x, kparams, input_shape, d)
    np.testing.assert_allclose(np.asarray(out, dtype=np.float32),
                               np.asarray(ref_bf16, dtype=np.float32),
                               rtol=2e-2, atol=2e-2)

    # Looser sanity check against the full-f32 PyTorch-semantics reference
    # (drift comes only from the deliberate bf16 weight/activation/output cast).
    ref_f32 = made_forward_ref_f32(x, params, masks, input_shape, d)
    np.testing.assert_allclose(np.asarray(out, dtype=np.float32),
                               np.asarray(ref_f32), rtol=0.05, atol=0.15)

    # Ragged batch: exercises pl.cdiv grid + Pallas partial-block masking
    # (no wrapper-side pad/slice passes anymore).
    x_small = jax.random.randint(jax.random.PRNGKey(1), (100,) + input_shape,
                                 0, d).astype(jnp.float32)
    out_small = jax.block_until_ready(made_forward(x_small, kparams, input_shape, d))
    ref_small = made_forward_ref_bf16(x_small, kparams, input_shape, d)
    np.testing.assert_allclose(np.asarray(out_small, dtype=np.float32),
                               np.asarray(ref_small, dtype=np.float32),
                               rtol=2e-2, atol=2e-2)

    print("KERNEL_OK")
</pallas_src>

<mosaic_0001>
module attributes {stable_mosaic.version = 11 : i64} {
  func.func @kernel(%arg0: i32, %arg1: memref<512x16xf32, #tpu.memory_space<vmem>>, %arg2: memref<16x256xbf16, #tpu.memory_space<vmem>>, %arg3: memref<1x256xf32, #tpu.memory_space<vmem>>, %arg4: memref<256x256xbf16, #tpu.memory_space<vmem>>, %arg5: memref<1x256xf32, #tpu.memory_space<vmem>>, %arg6: memref<256x256xbf16, #tpu.memory_space<vmem>>, %arg7: memref<1x256xf32, #tpu.memory_space<vmem>>, %arg8: memref<256x128xbf16, #tpu.memory_space<vmem>>, %arg9: memref<1x128xf32, #tpu.memory_space<vmem>>, %arg10: memref<512x128xbf16, #tpu.memory_space<vmem>>) attributes {dimension_semantics = [#tpu.dimension_semantics<parallel>], iteration_bounds = array<i64: 2>, scalar_prefetch = 0 : i64, scratch_operands = 0 : i64, tpu.core_type = #tpu.core_type<tc>, window_params = [{transform_indices = @transform_0, window_bounds = array<i64: 512, 16>}, {pipeline_mode = #tpu.pipeline_mode<synchronous>, transform_indices = @transform_1, window_bounds = array<i64: 16, 256>}, {pipeline_mode = #tpu.pipeline_mode<synchronous>, transform_indices = @transform_2, window_bounds = array<i64: 1, 256>}, {pipeline_mode = #tpu.pipeline_mode<synchronous>, transform_indices = @transform_3, window_bounds = array<i64: 256, 256>}, {pipeline_mode = #tpu.pipeline_mode<synchronous>, transform_indices = @transform_4, window_bounds = array<i64: 1, 256>}, {pipeline_mode = #tpu.pipeline_mode<synchronous>, transform_indices = @transform_5, window_bounds = array<i64: 256, 256>}, {pipeline_mode = #tpu.pipeline_mode<synchronous>, transform_indices = @transform_6, window_bounds = array<i64: 1, 256>}, {pipeline_mode = #tpu.pipeline_mode<synchronous>, transform_indices = @transform_7, window_bounds = array<i64: 256, 128>}, {pipeline_mode = #tpu.pipeline_mode<synchronous>, transform_indices = @transform_8, window_bounds = array<i64: 1, 128>}, {transform_indices = @transform_9, window_bounds = array<i64: 512, 128>}]} {
    %c0 = arith.constant 0 : index
    %c0_0 = arith.constant 0 : index
    %0 = vector.load %arg1[%c0, %c0_0] : memref<512x16xf32, #tpu.memory_space<vmem>>, vector<512x16xf32>
    %1 = arith.truncf %0 : vector<512x16xf32> to vector<512x16xbf16>
    %c0_1 = arith.constant 0 : index
    %c0_2 = arith.constant 0 : index
    %2 = vector.load %arg2[%c0_1, %c0_2] : memref<16x256xbf16, #tpu.memory_space<vmem>>, vector<16x256xbf16>
    %cst = arith.constant dense<0.000000e+00> : vector<512x256xf32>
    %3 = tpu.matmul %1, %2, %cst {dimension_numbers = #tpu.dot_dimension_numbers<[1], [0], [0], [1], [0, 0, 1, 1], [], []>} : vector<512x16xbf16>, vector<16x256xbf16>, vector<512x256xf32> -> vector<512x256xf32>
    %c0_3 = arith.constant 0 : index
    %c0_4 = arith.constant 0 : index
    %4 = vector.load %arg3[%c0_3, %c0_4] : memref<1x256xf32, #tpu.memory_space<vmem>>, vector<1x256xf32>
    %5 = vector.broadcast %4 : vector<1x256xf32> to vector<512x256xf32>
    %6 = arith.addf %3, %5 : vector<512x256xf32>
    %cst_5 = arith.constant 0.000000e+00 : f32
    %7 = vector.broadcast %cst_5 : f32 to vector<512x256xf32>
    %8 = arith.maximumf %6, %7 : vector<512x256xf32>
    %9 = arith.truncf %8 : vector<512x256xf32> to vector<512x256xbf16>
    %c0_6 = arith.constant 0 : index
    %c0_7 = arith.constant 0 : index
    %10 = vector.load %arg4[%c0_6, %c0_7] : memref<256x256xbf16, #tpu.memory_space<vmem>>, vector<256x256xbf16>
    %cst_8 = arith.constant dense<0.000000e+00> : vector<512x256xf32>
    %11 = tpu.matmul %9, %10, %cst_8 {dimension_numbers = #tpu.dot_dimension_numbers<[1], [0], [0], [1], [0, 0, 1, 1], [], []>} : vector<512x256xbf16>, vector<256x256xbf16>, vector<512x256xf32> -> vector<512x256xf32>
    %c0_9 = arith.constant 0 : index
    %c0_10 = arith.constant 0 : index
    %12 = vector.load %arg5[%c0_9, %c0_10] : memref<1x256xf32, #tpu.memory_space<vmem>>, vector<1x256xf32>
    %13 = vector.broadcast %12 : vector<1x256xf32> to vector<512x256xf32>
    %14 = arith.addf %11, %13 : vector<512x256xf32>
    %cst_11 = arith.constant 0.000000e+00 : f32
    %15 = vector.broadcast %cst_11 : f32 to vector<512x256xf32>
    %16 = arith.maximumf %14, %15 : vector<512x256xf32>
    %17 = arith.truncf %16 : vector<512x256xf32> to vector<512x256xbf16>
    %c0_12 = arith.constant 0 : index
    %c0_13 = arith.constant 0 : index
    %18 = vector.load %arg6[%c0_12, %c0_13] : memref<256x256xbf16, #tpu.memory_space<vmem>>, vector<256x256xbf16>
    %cst_14 = arith.constant dense<0.000000e+00> : vector<512x256xf32>
    %19 = tpu.matmul %17, %18, %cst_14 {dimension_numbers = #tpu.dot_dimension_numbers<[1], [0], [0], [1], [0, 0, 1, 1], [], []>} : vector<512x256xbf16>, vector<256x256xbf16>, vector<512x256xf32> -> vector<512x256xf32>
    %c0_15 = arith.constant 0 : index
    %c0_16 = arith.constant 0 : index
    %20 = vector.load %arg7[%c0_15, %c0_16] : memref<1x256xf32, #tpu.memory_space<vmem>>, vector<1x256xf32>
    %21 = vector.broadcast %20 : vector<1x256xf32> to vector<512x256xf32>
    %22 = arith.addf %19, %21 : vector<512x256xf32>
    %cst_17 = arith.constant 0.000000e+00 : f32
    %23 = vector.broadcast %cst_17 : f32 to vector<512x256xf32>
    %24 = arith.maximumf %22, %23 : vector<512x256xf32>
    %25 = arith.truncf %24 : vector<512x256xf32> to vector<512x256xbf16>
    %c0_18 = arith.constant 0 : index
    %c0_19 = arith.constant 0 : index
    %26 = vector.load %arg8[%c0_18, %c0_19] : memref<256x128xbf16, #tpu.memory_space<vmem>>, vector<256x128xbf16>
    %cst_20 = arith.constant dense<0.000000e+00> : vector<512x128xf32>
    %27 = tpu.matmul %25, %26, %cst_20 {dimension_numbers = #tpu.dot_dimension_numbers<[1], [0], [0], [1], [0, 0, 1, 1], [], []>} : vector<512x256xbf16>, vector<256x128xbf16>, vector<512x128xf32> -> vector<512x128xf32>
    %c0_21 = arith.constant 0 : index
    %c0_22 = arith.constant 0 : index
    %28 = vector.load %arg9[%c0_21, %c0_22] : memref<1x128xf32, #tpu.memory_space<vmem>>, vector<1x128xf32>
    %29 = vector.broadcast %28 : vector<1x128xf32> to vector<512x128xf32>
    %30 = arith.addf %27, %29 : vector<512x128xf32>
    %31 = arith.truncf %30 : vector<512x128xf32> to vector<512x128xbf16>
    %c0_23 = arith.constant 0 : index
    %c0_24 = arith.constant 0 : index
    %32 = vector.load %arg10[%c0_23, %c0_24] : memref<512x128xbf16, #tpu.memory_space<vmem>>, vector<512x128xbf16>
    tpu.vector_store %arg10[%c0_23, %c0_24], %31 {strides = array<i32>} : memref<512x128xbf16, #tpu.memory_space<vmem>>, vector<512x128xbf16>,
    return
  }
  func.func @transform_0(%arg0: i32) -> (i32, i32) {
    %c0_i32 = arith.constant 0 : i32
    %c0_i32_0 = arith.constant 0 : i32
    return %arg0, %c0_i32 : i32, i32
  }
  func.func @transform_1(%arg0: i32) -> (i32, i32) {
    %c0_i32 = arith.constant 0 : i32
    %c0_i32_0 = arith.constant 0 : i32
    %c0_i32_1 = arith.constant 0 : i32
    return %c0_i32, %c0_i32_0 : i32, i32
  }
  func.func @transform_2(%arg0: i32) -> (i32, i32) {
    %c0_i32 = arith.constant 0 : i32
    %c0_i32_0 = arith.constant 0 : i32
    %c0_i32_1 = arith.constant 0 : i32
    return %c0_i32, %c0_i32_0 : i32, i32
  }
  func.func @transform_3(%arg0: i32) -> (i32, i32) {
    %c0_i32 = arith.constant 0 : i32
    %c0_i32_0 = arith.constant 0 : i32
    %c0_i32_1 = arith.constant 0 : i32
    return %c0_i32, %c0_i32_0 : i32, i32
  }
  func.func @transform_4(%arg0: i32) -> (i32, i32) {
    %c0_i32 = arith.constant 0 : i32
    %c0_i32_0 = arith.constant 0 : i32
    %c0_i32_1 = arith.constant 0 : i32
    return %c0_i32, %c0_i32_0 : i32, i32
  }
  func.func @transform_5(%arg0: i32) -> (i32, i32) {
    %c0_i32 = arith.constant 0 : i32
    %c0_i32_0 = arith.constant 0 : i32
    %c0_i32_1 = arith.constant 0 : i32
    return %c0_i32, %c0_i32_0 : i32, i32
  }
  func.func @transform_6(%arg0: i32) -> (i32, i32) {
    %c0_i32 = arith.constant 0 : i32
    %c0_i32_0 = arith.constant 0 : i32
    %c0_i32_1 = arith.constant 0 : i32
    return %c0_i32, %c0_i32_0 : i32, i32
  }
  func.func @transform_7(%arg0: i32) -> (i32, i32) {
    %c0_i32 = arith.constant 0 : i32
    %c0_i32_0 = arith.constant 0 : i32
    %c0_i32_1 = arith.constant 0 : i32
    return %c0_i32, %c0_i32_0 : i32, i32
  }
  func.func @transform_8(%arg0: i32) -> (i32, i32) {
    %c0_i32 = arith.constant 0 : i32
    %c0_i32_0 = arith.constant 0 : i32
    %c0_i32_1 = arith.constant 0 : i32
    return %c0_i32, %c0_i32_0 : i32, i32
  }
  func.func @transform_9(%arg0: i32) -> (i32, i32) {
    %c0_i32 = arith.constant 0 : i32
    %c0_i32_0 = arith.constant 0 : i32
    return %arg0, %c0_i32 : i32, i32
  }
}

</mosaic_0001>

<llo_original>
// kernel: tpu_custom_call.1
$region0: #{tpu_custom_call.1}
  #allocation0 [shape = 'u32[]', space=smem, size = 0x4, offset = 0x4, fixed_abs, tag = 'smem constant byte address 0x4 - core index']
  #allocation1 [shape = 'u32[144,128]{1,0:T(1,128)}', space=vmem, size = 0x12000, scoped, tag = 'internal scratch']
  %s0 = inlined_call_operand.vmem [shape: f32[1024,16], index: 0, kind: input, shape index: {}]
  %s1 = inlined_call_operand.vmem [shape: bf16[16,256], index: 1, kind: input, shape index: {}]
  %s2 = inlined_call_operand.vmem [shape: f32[1,256], index: 2, kind: input, shape index: {}]
  %s3 = inlined_call_operand.vmem [shape: bf16[256,256], index: 3, kind: input, shape index: {}]
  %s4 = inlined_call_operand.vmem [shape: f32[1,256], index: 4, kind: input, shape index: {}]
  %s5 = inlined_call_operand.vmem [shape: bf16[256,256], index: 5, kind: input, shape index: {}]
  %s6 = inlined_call_operand.vmem [shape: f32[1,256], index: 6, kind: input, shape index: {}]
  %s7 = inlined_call_operand.vmem [shape: bf16[256,128], index: 7, kind: input, shape index: {}]
  %s8 = inlined_call_operand.vmem [shape: f32[1,128], index: 8, kind: input, shape index: {}]
  %s9 = inlined_call_operand.hbm [shape: bf16[1024,128], index: 9, kind: output, shape index: {}]
  %s10 = sld [smem:[#allocation0]]
  $region69: #{tpu_custom_call.1} parent=0
    _
  %s12 = ssub.s32 1, %s10
  %s13 = scalar_select 0, %s12, %s10
  $region1: #{tpu_custom_call.1} parent=0
    #allocation2 [shape = 'u8[262144]{0}', space=vmem, size = 0x40000, scoped, tag = 'output window, operand 0']
    #allocation3 [shape = 's32[2]{0}', space=sflag, size = 0x8, scoped, tag = 'scoped memory for tpu_custom_call.1']
    %14 = vsyncpa [#allocation3], 0
    %s15 = scalar_lea.sflag [#allocation3], 1
    %16 = vsyncpa %s15, 0
    loop: start=0, step=1, limit=4
    $region2: #{tpu_custom_call.1} parent=1 // loop_pre_header
      _
    $region3: #{tpu_custom_call.1} parent=1 // loop_header
      %s18 = sphi 0, %s22
      %p19 = scmp.ge.s32.totalorder %s18, 4
      %s28 = sphi 0, %s30
      %s31 = sphi 0, %s28
      %s32 = sphi 0, %s31
      %s48 = sphi 0, %s32
      %s52 = sphi 0, %s52
      %s54 = sphi 0, %s52
      %s55 = sphi 0, %s54
      %s69 = sphi 0, %s55
      %s73 = sphi 0, %s73
      %s75 = sphi 0, %s73
      %s76 = sphi 0, %s75
      %s90 = sphi 0, %s76
      %s94 = sphi 0, %s94
      %s96 = sphi 0, %s94
      %s97 = sphi 0, %s96
      %s111 = sphi 0, %s97
      %s115 = sphi 0, %s115
      %s117 = sphi 0, %s115
      %s118 = sphi 0, %s117
      %s132 = sphi 0, %s118
      %s136 = sphi 0, %s136
      %s138 = sphi 0, %s136
      %s139 = sphi 0, %s138
      %s153 = sphi 0, %s139
      %s157 = sphi 0, %s157
      %s159 = sphi 0, %s157
      %s160 = sphi 0, %s159
      %s174 = sphi 0, %s160
      %s178 = sphi 0, %s178
      %s180 = sphi 0, %s178
      %s181 = sphi 0, %s180
      %s195 = sphi 0, %s181
      %s199 = sphi 0, %s199
      %s201 = sphi 0, %s199
      %s202 = sphi 0, %s201
      %s216 = sphi 0, %s202
      %s222 = sphi 0, %s224
      %s225 = sphi 0, %s222
      %s226 = sphi 0, %s225
      %s242 = sphi 0, %s226
    $region4: #{tpu_custom_call.1} parent=1 // loop_header_branch
      %21 = sbr.rel (%p19) target = $region8
    $region5: #{tpu_custom_call.1} parent=1 // loop_body
      %s23 = ssub.s32 %s18, 1
      %s24 = ssub.s32 %s18, 2
      %s25 = sadd.s32 %s18, 1
      %s26 = ssub.s32 %s18, %s25
      %p27 = scmp.eq.s32.totalorder %s26, 0
      %s29 = sadd.s32 %s28, 1
      %s30 = scalar_select %p27, %s28, %s29
      %p33 = pneg %p27
      %p34 = scmp.eq.s32.totalorder %s18, 1
      %p35 = por %p33, %p34
      %p36 = scmp.ne.s32.totalorder %s28, %s31
      %p37 = scmp.eq.s32.totalorder %s18, 0
      %p38 = por %p36, %p37
      %p39 = scmp.ne.s32.totalorder %s28, %s31
      %p40 = scmp.eq.s32.totalorder %s23, 1
      %p41 = por %p39, %p40
      %p42 = scmp.ne.s32.totalorder %s31, %s32
      %p43 = scmp.eq.s32.totalorder %s23, 0
      %p44 = por %p42, %p43
      %p45 = scmp.ne.s32.totalorder %s31, %s32
      %p46 = scmp.eq.s32.totalorder %s24, 1
      %p47 = por %p45, %p46
      %p49 = scmp.ne.s32.totalorder %s32, %s48
      %p50 = scmp.eq.s32.totalorder %s24, 0
      %p51 = por %p49, %p50
      %s53 = sadd.s32 %s52, 1
      %p56 = scmp.eq.s32.totalorder %s18, 1
      %p57 = scmp.ne.s32.totalorder %s52, %s54
      %p58 = scmp.eq.s32.totalorder %s18, 0
      %p59 = por %p57, %p58
      %p60 = scmp.ne.s32.totalorder %s52, %s54
      %p61 = scmp.eq.s32.totalorder %s23, 1
      %p62 = por %p60, %p61
      %p63 = scmp.ne.s32.totalorder %s54, %s55
      %p64 = scmp.eq.s32.totalorder %s23, 0
      %p65 = por %p63, %p64
      %p66 = scmp.ne.s32.totalorder %s54, %s55
      %p67 = scmp.eq.s32.totalorder %s24, 1
      %p68 = por %p66, %p67
      %p70 = scmp.ne.s32.totalorder %s55, %s69
      %p71 = scmp.eq.s32.totalorder %s24, 0
      %p72 = por %p70, %p71
      %s74 = sadd.s32 %s73, 1
      %p77 = scmp.eq.s32.totalorder %s18, 1
      %p78 = scmp.ne.s32.totalorder %s73, %s75
      %p79 = scmp.eq.s32.totalorder %s18, 0
      %p80 = por %p78, %p79
      %p81 = scmp.ne.s32.totalorder %s73, %s75
      %p82 = scmp.eq.s32.totalorder %s23, 1
      %p83 = por %p81, %p82
      %p84 = scmp.ne.s32.totalorder %s75, %s76
      %p85 = scmp.eq.s32.totalorder %s23, 0
      %p86 = por %p84, %p85
      %p87 = scmp.ne.s32.totalorder %s75, %s76
      %p88 = scmp.eq.s32.totalorder %s24, 1
      %p89 = por %p87, %p88
      %p91 = scmp.ne.s32.totalorder %s76, %s90
      %p92 = scmp.eq.s32.totalorder %s24, 0
      %p93 = por %p91, %p92
      %s95 = sadd.s32 %s94, 1
      %p98 = scmp.eq.s32.totalorder %s18, 1
      %p99 = scmp.ne.s32.totalorder %s94, %s96
      %p100 = scmp.eq.s32.totalorder %s18, 0
      %p101 = por %p99, %p100
      %p102 = scmp.ne.s32.totalorder %s94, %s96
      %p103 = scmp.eq.s32.totalorder %s23, 1
      %p104 = por %p102, %p103
      %p105 = scmp.ne.s32.totalorder %s96, %s97
      %p106 = scmp.eq.s32.totalorder %s23, 0
      %p107 = por %p105, %p106
      %p108 = scmp.ne.s32.totalorder %s96, %s97
      %p109 = scmp.eq.s32.totalorder %s24, 1
      %p110 = por %p108, %p109
      %p112 = scmp.ne.s32.totalorder %s97, %s111
      %p113 = scmp.eq.s32.totalorder %s24, 0
      %p114 = por %p112, %p113
      %s116 = sadd.s32 %s115, 1
      %p119 = scmp.eq.s32.totalorder %s18, 1
      %p120 = scmp.ne.s32.totalorder %s115, %s117
      %p121 = scmp.eq.s32.totalorder %s18, 0
      %p122 = por %p120, %p121
      %p123 = scmp.ne.s32.totalorder %s115, %s117
      %p124 = scmp.eq.s32.totalorder %s23, 1
      %p125 = por %p123, %p124
      %p126 = scmp.ne.s32.totalorder %s117, %s118
      %p127 = scmp.eq.s32.totalorder %s23, 0
      %p128 = por %p126, %p127
      %p129 = scmp.ne.s32.totalorder %s117, %s118
      %p130 = scmp.eq.s32.totalorder %s24, 1
      %p131 = por %p129, %p130
      %p133 = scmp.ne.s32.totalorder %s118, %s132
      %p134 = scmp.eq.s32.totalorder %s24, 0
      %p135 = por %p133, %p134
      %s137 = sadd.s32 %s136, 1
      %p140 = scmp.eq.s32.totalorder %s18, 1
      %p141 = scmp.ne.s32.totalorder %s136, %s138
      %p142 = scmp.eq.s32.totalorder %s18, 0
      %p143 = por %p141, %p142
      %p144 = scmp.ne.s32.totalorder %s136, %s138
      %p145 = scmp.eq.s32.totalorder %s23, 1
      %p146 = por %p144, %p145
      %p147 = scmp.ne.s32.totalorder %s138, %s139
      %p148 = scmp.eq.s32.totalorder %s23, 0
      %p149 = por %p147, %p148
      %p150 = scmp.ne.s32.totalorder %s138, %s139
      %p151 = scmp.eq.s32.totalorder %s24, 1
      %p152 = por %p150, %p151
      %p154 = scmp.ne.s32.totalorder %s139, %s153
      %p155 = scmp.eq.s32.totalorder %s24, 0
      %p156 = por %p154, %p155
      %s158 = sadd.s32 %s157, 1
      %p161 = scmp.eq.s32.totalorder %s18, 1
      %p162 = scmp.ne.s32.totalorder %s157, %s159
      %p163 = scmp.eq.s32.totalorder %s18, 0
      %p164 = por %p162, %p163
      %p165 = scmp.ne.s32.totalorder %s157, %s159
      %p166 = scmp.eq.s32.totalorder %s23, 1
      %p167 = por %p165, %p166
      %p168 = scmp.ne.s32.totalorder %s159, %s160
      %p169 = scmp.eq.s32.totalorder %s23, 0
      %p170 = por %p168, %p169
      %p171 = scmp.ne.s32.totalorder %s159, %s160
      %p172 = scmp.eq.s32.totalorder %s24, 1
      %p173 = por %p171, %p172
      %p175 = scmp.ne.s32.totalorder %s160, %s174
      %p176 = scmp.eq.s32.totalorder %s24, 0
      %p177 = por %p175, %p176
      %s179 = sadd.s32 %s178, 1
      %p182 = scmp.eq.s32.totalorder %s18, 1
      %p183 = scmp.ne.s32.totalorder %s178, %s180
      %p184 = scmp.eq.s32.totalorder %s18, 0
      %p185 = por %p183, %p184
      %p186 = scmp.ne.s32.totalorder %s178, %s180
      %p187 = scmp.eq.s32.totalorder %s23, 1
      %p188 = por %p186, %p187
      %p189 = scmp.ne.s32.totalorder %s180, %s181
      %p190 = scmp.eq.s32.totalorder %s23, 0
      %p191 = por %p189, %p190
      %p192 = scmp.ne.s32.totalorder %s180, %s181
      %p193 = scmp.eq.s32.totalorder %s24, 1
      %p194 = por %p192, %p193
      %p196 = scmp.ne.s32.totalorder %s181, %s195
      %p197 = scmp.eq.s32.totalorder %s24, 0
      %p198 = por %p196, %p197
      %s200 = sadd.s32 %s199, 1
      %p203 = scmp.eq.s32.totalorder %s18, 1
      %p204 = scmp.ne.s32.totalorder %s199, %s201
      %p205 = scmp.eq.s32.totalorder %s18, 0
      %p206 = por %p204, %p205
      %p207 = scmp.ne.s32.totalorder %s199, %s201
      %p208 = scmp.eq.s32.totalorder %s23, 1
      %p209 = por %p207, %p208
      %p210 = scmp.ne.s32.totalorder %s201, %s202
      %p211 = scmp.eq.s32.totalorder %s23, 0
      %p212 = por %p210, %p211
      %p213 = scmp.ne.s32.totalorder %s201, %s202
      %p214 = scmp.eq.s32.totalorder %s24, 1
      %p215 = por %p213, %p214
      %p217 = scmp.ne.s32.totalorder %s202, %s216
      %p218 = scmp.eq.s32.totalorder %s24, 0
      %p219 = por %p217, %p218
      %s220 = ssub.s32 %s18, %s25
      %p221 = scmp.eq.s32.totalorder %s220, 0
      %s223 = sadd.s32 %s222, 1
      %s224 = scalar_select %p221, %s222, %s223
      %p227 = pneg %p221
      %p228 = scmp.eq.s32.totalorder %s18, 1
      %p229 = por %p227, %p228
      %p230 = scmp.ne.s32.totalorder %s222, %s225
      %p231 = scmp.eq.s32.totalorder %s18, 0
      %p232 = por %p230, %p231
      %p233 = scmp.ne.s32.totalorder %s222, %s225
      %p234 = scmp.eq.s32.totalorder %s23, 1
      %p235 = por %p233, %p234
      %p236 = scmp.ne.s32.totalorder %s225, %s226
      %p237 = scmp.eq.s32.totalorder %s23, 0
      %p238 = por %p236, %p237
      %p239 = scmp.ne.s32.totalorder %s225, %s226
      %p240 = scmp.eq.s32.totalorder %s24, 1
      %p241 = por %p239, %p240
      %p243 = scmp.ne.s32.totalorder %s226, %s242
      %p244 = scmp.eq.s32.totalorder %s24, 0
      %p245 = por %p243, %p244
      %p246 = scmp.le.s32.totalorder 1, %s18
      %p247 = scmp.lt.s32.totalorder %s18, 3
      %p248 = pnand %p246, %p247
      %p249 = pneg %p248
      // Predicated region
      $region9: #{tpu_custom_call.1} parent=5 // pred_check
        _
      $region10: #{tpu_custom_call.1} parent=5 // pred_check_branch
        %251 = sbr.rel (%p248) target = $region12
      $region11: #{tpu_custom_call.1} parent=5 // pred_region
        %s252 = ssub.s32 %s18, 1
        // Predicated region
        $region13: #{tpu_custom_call.1} parent=11 // pred_check
          %p253 = pneg %p65
        $region14: #{tpu_custom_call.1} parent=11 // pred_check_branch
          %255 = sbr.rel (%p253) target = $region16
        $region15: #{tpu_custom_call.1} parent=11 // pred_region
          _
        $region16: #{tpu_custom_call.1} parent=11 // pred_fallthru
          _
        // Predicated region
        $region17: #{tpu_custom_call.1} parent=11 // pred_check
          %p256 = pneg %p86
        $region18: #{tpu_custom_call.1} parent=11 // pred_check_branch
          %258 = sbr.rel (%p256) target = $region20
        $region19: #{tpu_custom_call.1} parent=11 // pred_region
          _
        $region20: #{tpu_custom_call.1} parent=11 // pred_fallthru
          _
        // Predicated region
        $region21: #{tpu_custom_call.1} parent=11 // pred_check
          %p259 = pneg %p107
        $region22: #{tpu_custom_call.1} parent=11 // pred_check_branch
          %261 = sbr.rel (%p259) target = $region24
        $region23: #{tpu_custom_call.1} parent=11 // pred_region
          _
        $region24: #{tpu_custom_call.1} parent=11 // pred_fallthru
          _
        // Predicated region
        $region25: #{tpu_custom_call.1} parent=11 // pred_check
          %p262 = pneg %p128
        $region26: #{tpu_custom_call.1} parent=11 // pred_check_branch
          %264 = sbr.rel (%p262) target = $region28
        $region27: #{tpu_custom_call.1} parent=11 // pred_region
          _
        $region28: #{tpu_custom_call.1} parent=11 // pred_fallthru
          _
        // Predicated region
        $region29: #{tpu_custom_call.1} parent=11 // pred_check
          %p265 = pneg %p149
        $region30: #{tpu_custom_call.1} parent=11 // pred_check_branch
          %267 = sbr.rel (%p265) target = $region32
        $region31: #{tpu_custom_call.1} parent=11 // pred_region
          _
        $region32: #{tpu_custom_call.1} parent=11 // pred_fallthru
          _
        // Predicated region
        $region33: #{tpu_custom_call.1} parent=11 // pred_check
          %p268 = pneg %p170
        $region34: #{tpu_custom_call.1} parent=11 // pred_check_branch
          %270 = sbr.rel (%p268) target = $region36
        $region35: #{tpu_custom_call.1} parent=11 // pred_region
          _
        $region36: #{tpu_custom_call.1} parent=11 // pred_fallthru
          _
        // Predicated region
        $region37: #{tpu_custom_call.1} parent=11 // pred_check
          %p271 = pneg %p191
        $region38: #{tpu_custom_call.1} parent=11 // pred_check_branch
          %273 = sbr.rel (%p271) target = $region40
        $region39: #{tpu_custom_call.1} parent=11 // pred_region
          _
        $region40: #{tpu_custom_call.1} parent=11 // pred_fallthru
          _
        // Predicated region
        $region41: #{tpu_custom_call.1} parent=11 // pred_check
          %p274 = pneg %p212
        $region42: #{tpu_custom_call.1} parent=11 // pred_check_branch
          %276 = sbr.rel (%p274) target = $region44
        $region43: #{tpu_custom_call.1} parent=11 // pred_region
          _
        $region44: #{tpu_custom_call.1} parent=11 // pred_fallthru
          _
      $region12: #{tpu_custom_call.1} parent=5 // pred_fallthru
        _
      %p277 = scmp.lt.s32.totalorder %s18, 2
      // Predicated region
      $region45: #{tpu_custom_call.1} parent=5 // pred_check
        %p278 = pneg %p277
      $region46: #{tpu_custom_call.1} parent=5 // pred_check_branch
        %280 = sbr.rel (%p278) target = $region48
      $region47: #{tpu_custom_call.1} parent=5 // pred_region
        // Predicated region
        $region49: #{tpu_custom_call.1} parent=47 // pred_check
          %p281 = pneg %p38
        $region50: #{tpu_custom_call.1} parent=47 // pred_check_branch
          %283 = sbr.rel (%p281) target = $region52
        $region51: #{tpu_custom_call.1} parent=47 // pred_region
          %s284 = smul.u32 64, %s18
          %p285 = scmp.lt.s32.totalorder %s284, 127
          %s286 = scalar_select %p285, %s284, 127
          %s287 = smul.addr %s286, 8
          %s288 = scalar_lea.vmem %s0, %s287
          %s289 = smul.u32 64, %s18
        $region52: #{tpu_custom_call.1} parent=47 // pred_fallthru
          _
      $region48: #{tpu_custom_call.1} parent=5 // pred_fallthru
        _
      %p290 = scmp.le.s32.totalorder 1, %s18
      %p291 = scmp.lt.s32.totalorder %s18, 3
      %p292 = pnand %p290, %p291
      %p293 = pneg %p292
      // Predicated region
      $region53: #{tpu_custom_call.1} parent=5 // pred_check
        _
      $region54: #{tpu_custom_call.1} parent=5 // pred_check_branch
        %295 = sbr.rel (%p292) target = $region56
      $region55: #{tpu_custom_call.1} parent=5 // pred_region
        %s296 = ssub.s32 %s18, 1
        %s297 = smul.u32 64, %s23
        %p298 = scmp.lt.s32.totalorder %s297, 127
        %s299 = scalar_select %p298, %s297, 127
        %s300 = smul.addr %s299, 8
        %s301 = scalar_lea.vmem %s0, %s300
        %p302 = pneg %p44
        %p303 = pneg %p41
        %p304 = pneg %p65
        %p305 = pneg %p62
        %p306 = pneg %p86
        %p307 = pneg %p83
        %p308 = pneg %p107
        %p309 = pneg %p104
        %p310 = pneg %p128
        %p311 = pneg %p125
        %p312 = pneg %p149
        %p313 = pneg %p146
        %p314 = pneg %p170
        %p315 = pneg %p167
        %p316 = pneg %p191
        %p317 = pneg %p188
        %p318 = pneg %p212
        %p319 = pneg %p209
        %p320 = pneg %p238
        %p321 = pneg %p235
        %s322 = sand.u32 %s225, 1
        %s323 = scalar_lea.sflag [#allocation3], %s322
        %s324 = sand.u32 %s225, 1
        %s325 = smul.addr %s324, 256
        %s326 = scalar_lea.vmem [#allocation2], %s325
        %s327 = smul.u32 64, %s23
        %p328 = scmp.lt.s32.totalorder %s327, 127
        %s329 = scalar_select %p328, %s327, 127
        %s330 = smul.addr %s329, 8
        %s331 = scalar_lea.vmem %s0, %s330
        %s332 = smul.u32 64, %s23
        %s333 = smul.u32 64, %s23
        %v335 = vld [vmem:[%s331] sm:$0xff]
        %v336 = vld [vmem:[%s331 + $0x8] sm:$0xff]
        %v337 = vld [vmem:[%s331 + $0x10] sm:$0xff]
        %v338 = vld [vmem:[%s331 + $0x18] sm:$0xff]
        %v339 = vld [vmem:[%s331 + $0x20] sm:$0xff]
        %v340 = vld [vmem:[%s331 + $0x28] sm:$0xff]
        %v341 = vld [vmem:[%s331 + $0x30] sm:$0xff]
        %v342 = vld [vmem:[%s331 + $0x38] sm:$0xff]
        %v343 = vld [vmem:[%s331 + $0x40] sm:$0xff]
        %v344 = vld [vmem:[%s331 + $0x48] sm:$0xff]
        %v345 = vld [vmem:[%s331 + $0x50] sm:$0xff]
        %v346 = vld [vmem:[%s331 + $0x58] sm:$0xff]
        %v347 = vld [vmem:[%s331 + $0x60] sm:$0xff]
        %v348 = vld [vmem:[%s331 + $0x68] sm:$0xff]
        %v349 = vld [vmem:[%s331 + $0x70] sm:$0xff]
        %v350 = vld [vmem:[%s331 + $0x78] sm:$0xff]
        %v351 = vld [vmem:[%s331 + $0x80] sm:$0xff]
        %v352 = vld [vmem:[%s331 + $0x88] sm:$0xff]
        %v353 = vld [vmem:[%s331 + $0x90] sm:$0xff]
        %v354 = vld [vmem:[%s331 + $0x98] sm:$0xff]
        %v355 = vld [vmem:[%s331 + $0xa0] sm:$0xff]
        %v356 = vld [vmem:[%s331 + $0xa8] sm:$0xff]
        %v357 = vld [vmem:[%s331 + $0xb0] sm:$0xff]
        %v358 = vld [vmem:[%s331 + $0xb8] sm:$0xff]
        %v359 = vld [vmem:[%s331 + $0xc0] sm:$0xff]
        %v360 = vld [vmem:[%s331 + $0xc8] sm:$0xff]
        %v361 = vld [vmem:[%s331 + $0xd0] sm:$0xff]
        %v362 = vld [vmem:[%s331 + $0xd8] sm:$0xff]
        %v363 = vld [vmem:[%s331 + $0xe0] sm:$0xff]
        %v364 = vld [vmem:[%s331 + $0xe8] sm:$0xff]
        %v365 = vld [vmem:[%s331 + $0xf0] sm:$0xff]
        %v366 = vld [vmem:[%s331 + $0xf8] sm:$0xff]
        %v367 = vld [vmem:[%s331 + $0x100] sm:$0xff]
        %v368 = vld [vmem:[%s331 + $0x108] sm:$0xff]
        %v369 = vld [vmem:[%s331 + $0x110] sm:$0xff]
        %v370 = vld [vmem:[%s331 + $0x118] sm:$0xff]
        %v371 = vld [vmem:[%s331 + $0x120] sm:$0xff]
        %v372 = vld [vmem:[%s331 + $0x128] sm:$0xff]
        %v373 = vld [vmem:[%s331 + $0x130] sm:$0xff]
        %v374 = vld [vmem:[%s331 + $0x138] sm:$0xff]
        %v375 = vld [vmem:[%s331 + $0x140] sm:$0xff]
        %v376 = vld [vmem:[%s331 + $0x148] sm:$0xff]
        %v377 = vld [vmem:[%s331 + $0x150] sm:$0xff]
        %v378 = vld [vmem:[%s331 + $0x158] sm:$0xff]
        %v379 = vld [vmem:[%s331 + $0x160] sm:$0xff]
        %v380 = vld [vmem:[%s331 + $0x168] sm:$0xff]
        %v381 = vld [vmem:[%s331 + $0x170] sm:$0xff]
        %v382 = vld [vmem:[%s331 + $0x178] sm:$0xff]
        %v383 = vld [vmem:[%s331 + $0x180] sm:$0xff]
        %v384 = vld [vmem:[%s331 + $0x188] sm:$0xff]
        %v385 = vld [vmem:[%s331 + $0x190] sm:$0xff]
        %v386 = vld [vmem:[%s331 + $0x198] sm:$0xff]
        %v387 = vld [vmem:[%s331 + $0x1a0] sm:$0xff]
        %v388 = vld [vmem:[%s331 + $0x1a8] sm:$0xff]
        %v389 = vld [vmem:[%s331 + $0x1b0] sm:$0xff]
        %v390 = vld [vmem:[%s331 + $0x1b8] sm:$0xff]
        %v391 = vld [vmem:[%s331 + $0x1c0] sm:$0xff]
        %v392 = vld [vmem:[%s331 + $0x1c8] sm:$0xff]
        %v393 = vld [vmem:[%s331 + $0x1d0] sm:$0xff]
        %v394 = vld [vmem:[%s331 + $0x1d8] sm:$0xff]
        %v395 = vld [vmem:[%s331 + $0x1e0] sm:$0xff]
        %v396 = vld [vmem:[%s331 + $0x1e8] sm:$0xff]
        %v397 = vld [vmem:[%s331 + $0x1f0] sm:$0xff]
        %v398 = vld [vmem:[%s331 + $0x1f8] sm:$0xff]
        %v399 = vpack.c.bf16 %v336, %v335
        %v400 = vpack.c.bf16 %v338, %v337
        %v401 = vpack.c.bf16 %v340, %v339
        %v402 = vpack.c.bf16 %v342, %v341
        %v403 = vpack.c.bf16 %v344, %v343
        %v404 = vpack.c.bf16 %v346, %v345
        %v405 = vpack.c.bf16 %v348, %v347
        %v406 = vpack.c.bf16 %v350, %v349
        %v407 = vpack.c.bf16 %v352, %v351
        %v408 = vpack.c.bf16 %v354, %v353
        %v409 = vpack.c.bf16 %v356, %v355
        %v410 = vpack.c.bf16 %v358, %v357
        %v411 = vpack.c.bf16 %v360, %v359
        %v412 = vpack.c.bf16 %v362, %v361
        %v413 = vpack.c.bf16 %v364, %v363
        %v414 = vpack.c.bf16 %v366, %v365
        %v415 = vpack.c.bf16 %v368, %v367
        %v416 = vpack.c.bf16 %v370, %v369
        %v417 = vpack.c.bf16 %v372, %v371
        %v418 = vpack.c.bf16 %v374, %v373
        %v419 = vpack.c.bf16 %v376, %v375
        %v420 = vpack.c.bf16 %v378, %v377
        %v421 = vpack.c.bf16 %v380, %v379
        %v422 = vpack.c.bf16 %v382, %v381
        %v423 = vpack.c.bf16 %v384, %v383
        %v424 = vpack.c.bf16 %v386, %v385
        %v425 = vpack.c.bf16 %v388, %v387
        %v426 = vpack.c.bf16 %v390, %v389
        %v427 = vpack.c.bf16 %v392, %v391
        %v428 = vpack.c.bf16 %v394, %v393
        %v429 = vpack.c.bf16 %v396, %v395
        %v430 = vpack.c.bf16 %v398, %v397
        %v431 = vld [vmem:[%s1] sm:$0xff]
        %v432 = vld [vmem:[%s1 + $0x8] sm:$0xff]
        %v433 = vld [vmem:[%s2] sm:$0x3]
        %v435 = vlaneseq
        %v436 = vshrl.u32 %v435, 7
        %v437 = vsub.s32 0, %v436
        %v438 = vrot.slane %v433, %v437
        %v439 = vlaneseq
        %v440 = vshrl.u32 %v439, 7
        %v441 = vsub.s32 1, %v440
        %v442 = vrot.slane %v433, %v441
        %v447 = vunpack.c.l.b16 %v431
        %v448 = vunpack.c.h.b16 %v431
        %v449 = vunpack.c.l.b16 %v432
        %v450 = vunpack.c.h.b16 %v432
        %v451 = vpack.c.b16 %v449, %v447
        %v452 = vpack.c.b16 %v450, %v448
        %vm455 = vcmask 130048
        %v457 = vsel %vm455, %v399, 0
        %v460 = vsel %vm455, %v400, 0
        %v463 = vsel %vm455, %v401, 0
        %v466 = vsel %vm455, %v402, 0
        %v469 = vsel %vm455, %v403, 0
        %v472 = vsel %vm455, %v404, 0
        %v475 = vsel %vm455, %v405, 0
        %v478 = vsel %vm455, %v406, 0
        %v481 = vsel %vm455, %v407, 0
        %v484 = vsel %vm455, %v408, 0
        %v487 = vsel %vm455, %v409, 0
        %v490 = vsel %vm455, %v410, 0
        %v493 = vsel %vm455, %v411, 0
        %v496 = vsel %vm455, %v412, 0
        %v499 = vsel %vm455, %v413, 0
        %v502 = vsel %vm455, %v414, 0
        %v505 = vsel %vm455, %v415, 0
        %v508 = vsel %vm455, %v416, 0
        %v511 = vsel %vm455, %v417, 0
        %v514 = vsel %vm455, %v418, 0
        %v517 = vsel %vm455, %v419, 0
        %v520 = vsel %vm455, %v420, 0
        %v523 = vsel %vm455, %v421, 0
        %v526 = vsel %vm455, %v422, 0
        %v529 = vsel %vm455, %v423, 0
        %v532 = vsel %vm455, %v424, 0
        %v535 = vsel %vm455, %v425, 0
        %v538 = vsel %vm455, %v426, 0
        %v541 = vsel %vm455, %v427, 0
        %v544 = vsel %vm455, %v428, 0
        %v547 = vsel %vm455, %v429, 0
        %v550 = vsel %vm455, %v430, 0
        %552 = vmatprep.subr.bf16.mxu0 %v452
        %553 = vmatpush1.bf16.msra.mxu0 %v451
        %554 = vmatprep.subr.bf16.mxu0 0
        %555 = vmatpush1.bf16.msra.mxu0 0
        %556 = vmatprep.subr.bf16.mxu0 0
        %557 = vmatpush1.bf16.msra.mxu0 0
        %558 = vmatprep.subr.bf16.mxu0 0
        %559 = vmatpush1.bf16.msra.mxu0 0
        %560 = vmatprep.subr.bf16.mxu0 0
        %561 = vmatpush1.bf16.msra.mxu0 0
        %562 = vmatprep.subr.bf16.mxu0 0
        %563 = vmatpush1.bf16.msra.mxu0 0
        %564 = vmatprep.subr.bf16.mxu0 0
        %565 = vmatpush1.bf16.msra.mxu0 0
        %566 = vmatprep.subr.bf16.mxu0 0
        %567 = vmatpush1.bf16.msra.mxu0 0
        %568 = vmatprep.subr.bf16.mxu0 0
        %569 = vmatpush1.bf16.msra.mxu0 0
        %570 = vmatprep.subr.bf16.mxu0 0
        %571 = vmatpush1.bf16.msra.mxu0 0
        %572 = vmatprep.subr.bf16.mxu0 0
        %573 = vmatpush1.bf16.msra.mxu0 0
        %574 = vmatprep.subr.bf16.mxu0 0
        %575 = vmatpush1.bf16.msra.mxu0 0
        %576 = vmatprep.subr.bf16.mxu0 0
        %577 = vmatpush1.bf16.msra.mxu0 0
        %578 = vmatprep.subr.bf16.mxu0 0
        %579 = vmatpush1.bf16.msra.mxu0 0
        %580 = vmatprep.subr.bf16.mxu0 0
        %581 = vmatpush1.bf16.msra.mxu0 0
        %582 = vmatprep.subr.bf16.mxu0 0
        %583 = vmatpush1.bf16.msra.mxu0 0
        %584 = vmatprep.mubr.bf16.mxu0 0
        %585 = vmatmul.mubr.bf16.gmra.mrb[0].mxu0 %v457
        %v586 = vpop.f32.mrb[0].mxu0
        %v587 = vadd.f32 %v438, %v586
        %v588 = vpop.f32.mrb[0].mxu0
        %v589 = vadd.f32 %v442, %v588
        %v590 = vpop.f32.mrb[0].mxu0
        %v591 = vadd.f32 %v438, %v590
        %v592 = vpop.f32.mrb[0].mxu0
        %v593 = vadd.f32 %v442, %v592
        %594 = vmatprep.mubr.bf16.mxu0 0
        %595 = vmatmul.mubr.bf16.gmra.mrb[0].mxu0 %v460
        %v596 = vpop.f32.mrb[0].mxu0
        %v597 = vadd.f32 %v438, %v596
        %v598 = vpop.f32.mrb[0].mxu0
        %v599 = vadd.f32 %v442, %v598
        %v600 = vpop.f32.mrb[0].mxu0
        %v601 = vadd.f32 %v438, %v600
        %v602 = vpop.f32.mrb[0].mxu0
        %v603 = vadd.f32 %v442, %v602
        %604 = vmatprep.mubr.bf16.mxu0 0
        %605 = vmatmul.mubr.bf16.gmra.mrb[0].mxu0 %v463
        %v606 = vpop.f32.mrb[0].mxu0
        %v607 = vadd.f32 %v438, %v606
        %v608 = vpop.f32.mrb[0].mxu0
        %v609 = vadd.f32 %v442, %v608
        %v610 = vpop.f32.mrb[0].mxu0
        %v611 = vadd.f32 %v438, %v610
        %v612 = vpop.f32.mrb[0].mxu0
        %v613 = vadd.f32 %v442, %v612
        %614 = vmatprep.mubr.bf16.mxu0 0
        %615 = vmatmul.mubr.bf16.gmra.mrb[0].mxu0 %v466
        %v616 = vpop.f32.mrb[0].mxu0
        %v617 = vadd.f32 %v438, %v616
        %v618 = vpop.f32.mrb[0].mxu0
        %v619 = vadd.f32 %v442, %v618
        %v620 = vpop.f32.mrb[0].mxu0
        %v621 = vadd.f32 %v438, %v620
        %v622 = vpop.f32.mrb[0].mxu0
        %v623 = vadd.f32 %v442, %v622
        %624 = vmatprep.mubr.bf16.mxu0 0
        %625 = vmatmul.mubr.bf16.gmra.mrb[0].mxu0 %v469
        %v626 = vpop.f32.mrb[0].mxu0
        %v627 = vadd.f32 %v438, %v626
        %v628 = vpop.f32.mrb[0].mxu0
        %v629 = vadd.f32 %v442, %v628
        %v630 = vpop.f32.mrb[0].mxu0
        %v631 = vadd.f32 %v438, %v630
        %v632 = vpop.f32.mrb[0].mxu0
        %v633 = vadd.f32 %v442, %v632
        %634 = vmatprep.mubr.bf16.mxu0 0
        %635 = vmatmul.mubr.bf16.gmra.mrb[0].mxu0 %v472
        %v636 = vpop.f32.mrb[0].mxu0
        %v637 = vadd.f32 %v438, %v636
        %v638 = vpop.f32.mrb[0].mxu0
        %v639 = vadd.f32 %v442, %v638
        %v640 = vpop.f32.mrb[0].mxu0
        %v641 = vadd.f32 %v438, %v640
        %v642 = vpop.f32.mrb[0].mxu0
        %v643 = vadd.f32 %v442, %v642
        %644 = vmatprep.mubr.bf16.mxu0 0
        %645 = vmatmul.mubr.bf16.gmra.mrb[0].mxu0 %v475
        %v646 = vpop.f32.mrb[0].mxu0
        %v647 = vadd.f32 %v438, %v646
        %v648 = vpop.f32.mrb[0].mxu0
        %v649 = vadd.f32 %v442, %v648
        %v650 = vpop.f32.mrb[0].mxu0
        %v651 = vadd.f32 %v438, %v650
        %v652 = vpop.f32.mrb[0].mxu0
        %v653 = vadd.f32 %v442, %v652
        %654 = vmatprep.mubr.bf16.mxu0 0
        %655 = vmatmul.mubr.bf16.gmra.mrb[0].mxu0 %v478
        %v656 = vpop.f32.mrb[0].mxu0
        %v657 = vadd.f32 %v438, %v656
        %v658 = vpop.f32.mrb[0].mxu0
        %v659 = vadd.f32 %v442, %v658
        %v660 = vpop.f32.mrb[0].mxu0
        %v661 = vadd.f32 %v438, %v660
        %v662 = vpop.f32.mrb[0].mxu0
        %v663 = vadd.f32 %v442, %v662
        %664 = vmatprep.mubr.bf16.mxu0 0
        %665 = vmatmul.mubr.bf16.gmra.mrb[0].mxu0 %v481
        %v666 = vpop.f32.mrb[0].mxu0
        %v667 = vadd.f32 %v438, %v666
        %v668 = vpop.f32.mrb[0].mxu0
        %v669 = vadd.f32 %v442, %v668
        %v670 = vpop.f32.mrb[0].mxu0
        %v671 = vadd.f32 %v438, %v670
        %v672 = vpop.f32.mrb[0].mxu0
        %v673 = vadd.f32 %v442, %v672
        %674 = vmatprep.mubr.bf16.mxu0 0
        %675 = vmatmul.mubr.bf16.gmra.mrb[0].mxu0 %v484
        %v676 = vpop.f32.mrb[0].mxu0
        %v677 = vadd.f32 %v438, %v676
        %v678 = vpop.f32.mrb[0].mxu0
        %v679 = vadd.f32 %v442, %v678
        %v680 = vpop.f32.mrb[0].mxu0
        %v681 = vadd.f32 %v438, %v680
        %v682 = vpop.f32.mrb[0].mxu0
        %v683 = vadd.f32 %v442, %v682
        %684 = vmatprep.mubr.bf16.mxu0 0
        %685 = vmatmul.mubr.bf16.gmra.mrb[0].mxu0 %v487
        %v686 = vpop.f32.mrb[0].mxu0
        %v687 = vadd.f32 %v438, %v686
        %v688 = vpop.f32.mrb[0].mxu0
        %v689 = vadd.f32 %v442, %v688
        %v690 = vpop.f32.mrb[0].mxu0
        %v691 = vadd.f32 %v438, %v690
        %v692 = vpop.f32.mrb[0].mxu0
        %v693 = vadd.f32 %v442, %v692
        %694 = vmatprep.mubr.bf16.mxu0 0
        %695 = vmatmul.mubr.bf16.gmra.mrb[0].mxu0 %v490
        %v696 = vpop.f32.mrb[0].mxu0
        %v697 = vadd.f32 %v438, %v696
        %v698 = vpop.f32.mrb[0].mxu0
        %v699 = vadd.f32 %v442, %v698
        %v700 = vpop.f32.mrb[0].mxu0
        %v701 = vadd.f32 %v438, %v700
        %v702 = vpop.f32.mrb[0].mxu0
        %v703 = vadd.f32 %v442, %v702
        %704 = vmatprep.mubr.bf16.mxu0 0
        %705 = vmatmul.mubr.bf16.gmra.mrb[0].mxu0 %v493
        %v706 = vpop.f32.mrb[0].mxu0
        %v707 = vadd.f32 %v438, %v706
        %v708 = vpop.f32.mrb[0].mxu0
        %v709 = vadd.f32 %v442, %v708
        %v710 = vpop.f32.mrb[0].mxu0
        %v711 = vadd.f32 %v438, %v710
        %v712 = vpop.f32.mrb[0].mxu0
        %v713 = vadd.f32 %v442, %v712
        %714 = vmatprep.mubr.bf16.mxu0 0
        %715 = vmatmul.mubr.bf16.gmra.mrb[0].mxu0 %v496
        %v716 = vpop.f32.mrb[0].mxu0
        %v717 = vadd.f32 %v438, %v716
        %v718 = vpop.f32.mrb[0].mxu0
        %v719 = vadd.f32 %v442, %v718
        %v720 = vpop.f32.mrb[0].mxu0
        %v721 = vadd.f32 %v438, %v720
        %v722 = vpop.f32.mrb[0].mxu0
        %v723 = vadd.f32 %v442, %v722
        %724 = vmatprep.mubr.bf16.mxu0 0
        %725 = vmatmul.mubr.bf16.gmra.mrb[0].mxu0 %v499
        %v726 = vpop.f32.mrb[0].mxu0
        %v727 = vadd.f32 %v438, %v726
        %v728 = vpop.f32.mrb[0].mxu0
        %v729 = vadd.f32 %v442, %v728
        %v730 = vpop.f32.mrb[0].mxu0
        %v731 = vadd.f32 %v438, %v730
        %v732 = vpop.f32.mrb[0].mxu0
        %v733 = vadd.f32 %v442, %v732
        %734 = vmatprep.mubr.bf16.mxu0 0
        %735 = vmatmul.mubr.bf16.gmra.mrb[0].mxu0 %v502
        %v736 = vpop.f32.mrb[0].mxu0
        %v737 = vadd.f32 %v438, %v736
        %v738 = vpop.f32.mrb[0].mxu0
        %v739 = vadd.f32 %v442, %v738
        %v740 = vpop.f32.mrb[0].mxu0
        %v741 = vadd.f32 %v438, %v740
        %v742 = vpop.f32.mrb[0].mxu0
        %v743 = vadd.f32 %v442, %v742
        %744 = vmatprep.mubr.bf16.mxu0 0
        %745 = vmatmul.mubr.bf16.gmra.mrb[0].mxu0 %v505
        %v746 = vpop.f32.mrb[0].mxu0
        %v747 = vadd.f32 %v438, %v746
        %v748 = vpop.f32.mrb[0].mxu0
        %v749 = vadd.f32 %v442, %v748
        %v750 = vpop.f32.mrb[0].mxu0
        %v751 = vadd.f32 %v438, %v750
        %v752 = vpop.f32.mrb[0].mxu0
        %v753 = vadd.f32 %v442, %v752
        %754 = vmatprep.mubr.bf16.mxu0 0
        %755 = vmatmul.mubr.bf16.gmra.mrb[0].mxu0 %v508
        %v756 = vpop.f32.mrb[0].mxu0
        %v757 = vadd.f32 %v438, %v756
        %v758 = vpop.f32.mrb[0].mxu0
        %v759 = vadd.f32 %v442, %v758
        %v760 = vpop.f32.mrb[0].mxu0
        %v761 = vadd.f32 %v438, %v760
        %v762 = vpop.f32.mrb[0].mxu0
        %v763 = vadd.f32 %v442, %v762
        %764 = vmatprep.mubr.bf16.mxu0 0
        %765 = vmatmul.mubr.bf16.gmra.mrb[0].mxu0 %v511
        %v766 = vpop.f32.mrb[0].mxu0
        %v767 = vadd.f32 %v438, %v766
        %v768 = vpop.f32.mrb[0].mxu0
        %v769 = vadd.f32 %v442, %v768
        %v770 = vpop.f32.mrb[0].mxu0
        %v771 = vadd.f32 %v438, %v770
        %v772 = vpop.f32.mrb[0].mxu0
        %v773 = vadd.f32 %v442, %v772
        %774 = vmatprep.mubr.bf16.mxu0 0
        %775 = vmatmul.mubr.bf16.gmra.mrb[0].mxu0 %v514
        %v776 = vpop.f32.mrb[0].mxu0
        %v777 = vadd.f32 %v438, %v776
        %v778 = vpop.f32.mrb[0].mxu0
        %v779 = vadd.f32 %v442, %v778
        %v780 = vpop.f32.mrb[0].mxu0
        %v781 = vadd.f32 %v438, %v780
        %v782 = vpop.f32.mrb[0].mxu0
        %v783 = vadd.f32 %v442, %v782
        %784 = vmatprep.mubr.bf16.mxu0 0
        %785 = vmatmul.mubr.bf16.gmra.mrb[0].mxu0 %v517
        %v786 = vpop.f32.mrb[0].mxu0
        %v787 = vadd.f32 %v438, %v786
        %v788 = vpop.f32.mrb[0].mxu0
        %v789 = vadd.f32 %v442, %v788
        %v790 = vpop.f32.mrb[0].mxu0
        %v791 = vadd.f32 %v438, %v790
        %v792 = vpop.f32.mrb[0].mxu0
        %v793 = vadd.f32 %v442, %v792
        %794 = vmatprep.mubr.bf16.mxu0 0
        %795 = vmatmul.mubr.bf16.gmra.mrb[0].mxu0 %v520
        %v796 = vpop.f32.mrb[0].mxu0
        %v797 = vadd.f32 %v438, %v796
        %v798 = vpop.f32.mrb[0].mxu0
        %v799 = vadd.f32 %v442, %v798
        %v800 = vpop.f32.mrb[0].mxu0
        %v801 = vadd.f32 %v438, %v800
        %v802 = vpop.f32.mrb[0].mxu0
        %v803 = vadd.f32 %v442, %v802
        %804 = vmatprep.mubr.bf16.mxu0 0
        %805 = vmatmul.mubr.bf16.gmra.mrb[0].mxu0 %v523
        %v806 = vpop.f32.mrb[0].mxu0
        %v807 = vadd.f32 %v438, %v806
        %v808 = vpop.f32.mrb[0].mxu0
        %v809 = vadd.f32 %v442, %v808
        %v810 = vpop.f32.mrb[0].mxu0
        %v811 = vadd.f32 %v438, %v810
        %v812 = vpop.f32.mrb[0].mxu0
        %v813 = vadd.f32 %v442, %v812
        %814 = vmatprep.mubr.bf16.mxu0 0
        %815 = vmatmul.mubr.bf16.gmra.mrb[0].mxu0 %v526
        %v816 = vpop.f32.mrb[0].mxu0
        %v817 = vadd.f32 %v438, %v816
        %v818 = vpop.f32.mrb[0].mxu0
        %v819 = vadd.f32 %v442, %v818
        %v820 = vpop.f32.mrb[0].mxu0
        %v821 = vadd.f32 %v438, %v820
        %v822 = vpop.f32.mrb[0].mxu0
        %v823 = vadd.f32 %v442, %v822
        %824 = vmatprep.mubr.bf16.mxu0 0
        %825 = vmatmul.mubr.bf16.gmra.mrb[0].mxu0 %v529
        %v826 = vpop.f32.mrb[0].mxu0
        %v827 = vadd.f32 %v438, %v826
        %v828 = vpop.f32.mrb[0].mxu0
        %v829 = vadd.f32 %v442, %v828
        %v830 = vpop.f32.mrb[0].mxu0
        %v831 = vadd.f32 %v438, %v830
        %v832 = vpop.f32.mrb[0].mxu0
        %v833 = vadd.f32 %v442, %v832
        %834 = vmatprep.mubr.bf16.mxu0 0
        %835 = vmatmul.mubr.bf16.gmra.mrb[0].mxu0 %v532
        %v836 = vpop.f32.mrb[0].mxu0
        %v837 = vadd.f32 %v438, %v836
        %v838 = vpop.f32.mrb[0].mxu0
        %v839 = vadd.f32 %v442, %v838
        %v840 = vpop.f32.mrb[0].mxu0
        %v841 = vadd.f32 %v438, %v840
        %v842 = vpop.f32.mrb[0].mxu0
        %v843 = vadd.f32 %v442, %v842
        %844 = vmatprep.mubr.bf16.mxu0 0
        %845 = vmatmul.mubr.bf16.gmra.mrb[0].mxu0 %v535
        %v846 = vpop.f32.mrb[0].mxu0
        %v847 = vadd.f32 %v438, %v846
        %v848 = vpop.f32.mrb[0].mxu0
        %v849 = vadd.f32 %v442, %v848
        %v850 = vpop.f32.mrb[0].mxu0
        %v851 = vadd.f32 %v438, %v850
        %v852 = vpop.f32.mrb[0].mxu0
        %v853 = vadd.f32 %v442, %v852
        %854 = vmatprep.mubr.bf16.mxu0 0
        %855 = vmatmul.mubr.bf16.gmra.mrb[0].mxu0 %v538
        %v856 = vpop.f32.mrb[0].mxu0
        %v857 = vadd.f32 %v438, %v856
        %v858 = vpop.f32.mrb[0].mxu0
        %v859 = vadd.f32 %v442, %v858
        %v860 = vpop.f32.mrb[0].mxu0
        %v861 = vadd.f32 %v438, %v860
        %v862 = vpop.f32.mrb[0].mxu0
        %v863 = vadd.f32 %v442, %v862
        %864 = vmatprep.mubr.bf16.mxu0 0
        %865 = vmatmul.mubr.bf16.gmra.mrb[0].mxu0 %v541
        %v866 = vpop.f32.mrb[0].mxu0
        %v867 = vadd.f32 %v438, %v866
        %v868 = vpop.f32.mrb[0].mxu0
        %v869 = vadd.f32 %v442, %v868
        %v870 = vpop.f32.mrb[0].mxu0
        %v871 = vadd.f32 %v438, %v870
        %v872 = vpop.f32.mrb[0].mxu0
        %v873 = vadd.f32 %v442, %v872
        %874 = vmatprep.mubr.bf16.mxu0 0
        %875 = vmatmul.mubr.bf16.gmra.mrb[0].mxu0 %v544
        %v876 = vpop.f32.mrb[0].mxu0
        %v877 = vadd.f32 %v438, %v876
        %v878 = vpop.f32.mrb[0].mxu0
        %v879 = vadd.f32 %v442, %v878
        %v880 = vpop.f32.mrb[0].mxu0
        %v881 = vadd.f32 %v438, %v880
        %v882 = vpop.f32.mrb[0].mxu0
        %v883 = vadd.f32 %v442, %v882
        %884 = vmatprep.mubr.bf16.mxu0 0
        %885 = vmatmul.mubr.bf16.gmra.mrb[0].mxu0 %v547
        %v886 = vpop.f32.mrb[0].mxu0
        %v887 = vadd.f32 %v438, %v886
        %v888 = vpop.f32.mrb[0].mxu0
        %v889 = vadd.f32 %v442, %v888
        %v890 = vpop.f32.mrb[0].mxu0
        %v891 = vadd.f32 %v438, %v890
        %v892 = vpop.f32.mrb[0].mxu0
        %v893 = vadd.f32 %v442, %v892
        %894 = vmatprep.mubr.bf16.mxu0 0
        %895 = vmatmul.mubr.bf16.gmra.mrb[0].mxu0 %v550
        %v896 = vpop.f32.mrb[0].mxu0
        %v897 = vadd.f32 %v438, %v896
        %v898 = vpop.f32.mrb[0].mxu0
        %v899 = vadd.f32 %v442, %v898
        %v900 = vpop.f32.mrb[0].mxu0
        %v901 = vadd.f32 %v438, %v900
        %v902 = vpop.f32.mrb[0].mxu0
        %v903 = vadd.f32 %v442, %v902
        %904 = vdwg.mxu0
        %v905 = vmax.f32 %v587, 0.0
        %v906 = vmax.f32 %v589, 0.0
        %v907 = vmax.f32 %v591, 0.0
        %v908 = vmax.f32 %v593, 0.0
        %v909 = vmax.f32 %v597, 0.0
        %v910 = vmax.f32 %v599, 0.0
        %v911 = vmax.f32 %v601, 0.0
        %v912 = vmax.f32 %v603, 0.0
        %v913 = vmax.f32 %v607, 0.0
        %v914 = vmax.f32 %v609, 0.0
        %v915 = vmax.f32 %v611, 0.0
        %v916 = vmax.f32 %v613, 0.0
        %v917 = vmax.f32 %v617, 0.0
        %v918 = vmax.f32 %v619, 0.0
        %v919 = vmax.f32 %v621, 0.0
        %v920 = vmax.f32 %v623, 0.0
        %v921 = vmax.f32 %v627, 0.0
        %v922 = vmax.f32 %v629, 0.0
        %v923 = vmax.f32 %v631, 0.0
        %v924 = vmax.f32 %v633, 0.0
        %v925 = vmax.f32 %v637, 0.0
        %v926 = vmax.f32 %v639, 0.0
        %v927 = vmax.f32 %v641, 0.0
        %v928 = vmax.f32 %v643, 0.0
        %v929 = vmax.f32 %v647, 0.0
        %v930 = vmax.f32 %v649, 0.0
        %v931 = vmax.f32 %v651, 0.0
        %v932 = vmax.f32 %v653, 0.0
        %v933 = vmax.f32 %v657, 0.0
        %v934 = vmax.f32 %v659, 0.0
        %v935 = vmax.f32 %v661, 0.0
        %v936 = vmax.f32 %v663, 0.0
        %v937 = vmax.f32 %v667, 0.0
        %v938 = vmax.f32 %v669, 0.0
        %v939 = vmax.f32 %v671, 0.0
        %v940 = vmax.f32 %v673, 0.0
        %v941 = vmax.f32 %v677, 0.0
        %v942 = vmax.f32 %v679, 0.0
        %v943 = vmax.f32 %v681, 0.0
        %v944 = vmax.f32 %v683, 0.0
        %v945 = vmax.f32 %v687, 0.0
        %v946 = vmax.f32 %v689, 0.0
        %v947 = vmax.f32 %v691, 0.0
        %v948 = vmax.f32 %v693, 0.0
        %v949 = vmax.f32 %v697, 0.0
        %v950 = vmax.f32 %v699, 0.0
        %v951 = vmax.f32 %v701, 0.0
        %v952 = vmax.f32 %v703, 0.0
        %v953 = vmax.f32 %v707, 0.0
        %v954 = vmax.f32 %v709, 0.0
        %v955 = vmax.f32 %v711, 0.0
        %v956 = vmax.f32 %v713, 0.0
        %v957 = vmax.f32 %v717, 0.0
        %v958 = vmax.f32 %v719, 0.0
        %v959 = vmax.f32 %v721, 0.0
        %v960 = vmax.f32 %v723, 0.0
        %v961 = vmax.f32 %v727, 0.0
        %v962 = vmax.f32 %v729, 0.0
        %v963 = vmax.f32 %v731, 0.0
        %v964 = vmax.f32 %v733, 0.0
        %v965 = vmax.f32 %v737, 0.0
        %v966 = vmax.f32 %v739, 0.0
        %v967 = vmax.f32 %v741, 0.0
        %v968 = vmax.f32 %v743, 0.0
        %v969 = vmax.f32 %v747, 0.0
        %v970 = vmax.f32 %v749, 0.0
        %v971 = vmax.f32 %v751, 0.0
        %v972 = vmax.f32 %v753, 0.0
        %v973 = vmax.f32 %v757, 0.0
        %v974 = vmax.f32 %v759, 0.0
        %v975 = vmax.f32 %v761, 0.0
        %v976 = vmax.f32 %v763, 0.0
        %v977 = vmax.f32 %v767, 0.0
        %v978 = vmax.f32 %v769, 0.0
        %v979 = vmax.f32 %v771, 0.0
        %v980 = vmax.f32 %v773, 0.0
        %v981 = vmax.f32 %v777, 0.0
        %v982 = vmax.f32 %v779, 0.0
        %v983 = vmax.f32 %v781, 0.0
        %v984 = vmax.f32 %v783, 0.0
        %v985 = vmax.f32 %v787, 0.0
        %v986 = vmax.f32 %v789, 0.0
        %v987 = vmax.f32 %v791, 0.0
        %v988 = vmax.f32 %v793, 0.0
        %v989 = vmax.f32 %v797, 0.0
        %v990 = vmax.f32 %v799, 0.0
        %v991 = vmax.f32 %v801, 0.0
        %v992 = vmax.f32 %v803, 0.0
        %v993 = vmax.f32 %v807, 0.0
        %v994 = vmax.f32 %v809, 0.0
        %v995 = vmax.f32 %v811, 0.0
        %v996 = vmax.f32 %v813, 0.0
        %v997 = vmax.f32 %v817, 0.0
        %v998 = vmax.f32 %v819, 0.0
        %v999 = vmax.f32 %v821, 0.0
        %v1000 = vmax.f32 %v823, 0.0
        %v1001 = vmax.f32 %v827, 0.0
        %v1002 = vmax.f32 %v829, 0.0
        %v1003 = vmax.f32 %v831, 0.0
        %v1004 = vmax.f32 %v833, 0.0
        %v1005 = vmax.f32 %v837, 0.0
        %v1006 = vmax.f32 %v839, 0.0
        %v1007 = vmax.f32 %v841, 0.0
        %v1008 = vmax.f32 %v843, 0.0
        %v1009 = vmax.f32 %v847, 0.0
        %v1010 = vmax.f32 %v849, 0.0
        %v1011 = vmax.f32 %v851, 0.0
        %v1012 = vmax.f32 %v853, 0.0
        %v1013 = vmax.f32 %v857, 0.0
        %v1014 = vmax.f32 %v859, 0.0
        %v1015 = vmax.f32 %v861, 0.0
        %v1016 = vmax.f32 %v863, 0.0
        %v1017 = vmax.f32 %v867, 0.0
        %v1018 = vmax.f32 %v869, 0.0
        %v1019 = vmax.f32 %v871, 0.0
        %v1020 = vmax.f32 %v873, 0.0
        %v1021 = vmax.f32 %v877, 0.0
        %v1022 = vmax.f32 %v879, 0.0
        %v1023 = vmax.f32 %v881, 0.0
        %v1024 = vmax.f32 %v883, 0.0
        %v1025 = vmax.f32 %v887, 0.0
        %v1026 = vmax.f32 %v889, 0.0
        %v1027 = vmax.f32 %v891, 0.0
        %v1028 = vmax.f32 %v893, 0.0
        %v1029 = vmax.f32 %v897, 0.0
        %v1030 = vmax.f32 %v899, 0.0
        %v1031 = vmax.f32 %v901, 0.0
        %v1032 = vmax.f32 %v903, 0.0
        %v1033 = vpack.c.bf16 %v907, %v905
        %v1034 = vpack.c.bf16 %v908, %v906
        %v1035 = vpack.c.bf16 %v911, %v909
        %v1036 = vpack.c.bf16 %v912, %v910
        %v1037 = vpack.c.bf16 %v915, %v913
        %v1038 = vpack.c.bf16 %v916, %v914
        %v1039 = vpack.c.bf16 %v919, %v917
        %v1040 = vpack.c.bf16 %v920, %v918
        %v1041 = vpack.c.bf16 %v923, %v921
        %v1042 = vpack.c.bf16 %v924, %v922
        %v1043 = vpack.c.bf16 %v927, %v925
        %v1044 = vpack.c.bf16 %v928, %v926
        %v1045 = vpack.c.bf16 %v931, %v929
        %v1046 = vpack.c.bf16 %v932, %v930
        %v1047 = vpack.c.bf16 %v935, %v933
        %v1048 = vpack.c.bf16 %v936, %v934
        %v1049 = vpack.c.bf16 %v939, %v937
        %v1050 = vpack.c.bf16 %v940, %v938
        %v1051 = vpack.c.bf16 %v943, %v941
        %v1052 = vpack.c.bf16 %v944, %v942
        %v1053 = vpack.c.bf16 %v947, %v945
        %v1054 = vpack.c.bf16 %v948, %v946
        %v1055 = vpack.c.bf16 %v951, %v949
        %v1056 = vpack.c.bf16 %v952, %v950
        %v1057 = vpack.c.bf16 %v955, %v953
        %v1058 = vpack.c.bf16 %v956, %v954
        %v1059 = vpack.c.bf16 %v959, %v957
        %v1060 = vpack.c.bf16 %v960, %v958
        %v1061 = vpack.c.bf16 %v963, %v961
        %v1062 = vpack.c.bf16 %v964, %v962
        %v1063 = vpack.c.bf16 %v967, %v965
        %v1064 = vpack.c.bf16 %v968, %v966
        %v1065 = vpack.c.bf16 %v971, %v969
        %v1066 = vpack.c.bf16 %v972, %v970
        %v1067 = vpack.c.bf16 %v975, %v973
        %v1068 = vpack.c.bf16 %v976, %v974
        %v1069 = vpack.c.bf16 %v979, %v977
        %v1070 = vpack.c.bf16 %v980, %v978
        %v1071 = vpack.c.bf16 %v983, %v981
        %v1072 = vpack.c.bf16 %v984, %v982
        %v1073 = vpack.c.bf16 %v987, %v985
        %v1074 = vpack.c.bf16 %v988, %v986
        %v1075 = vpack.c.bf16 %v991, %v989
        %v1076 = vpack.c.bf16 %v992, %v990
        %v1077 = vpack.c.bf16 %v995, %v993
        %v1078 = vpack.c.bf16 %v996, %v994
        %v1079 = vpack.c.bf16 %v999, %v997
        %v1080 = vpack.c.bf16 %v1000, %v998
        %v1081 = vpack.c.bf16 %v1003, %v1001
        %v1082 = vpack.c.bf16 %v1004, %v1002
        %v1083 = vpack.c.bf16 %v1007, %v1005
        %v1084 = vpack.c.bf16 %v1008, %v1006
        %v1085 = vpack.c.bf16 %v1011, %v1009
        %v1086 = vpack.c.bf16 %v1012, %v1010
        %v1087 = vpack.c.bf16 %v1015, %v1013
        %v1088 = vpack.c.bf16 %v1016, %v1014
        %v1089 = vpack.c.bf16 %v1019, %v1017
        %v1090 = vpack.c.bf16 %v1020, %v1018
        %v1091 = vpack.c.bf16 %v1023, %v1021
        %v1092 = vpack.c.bf16 %v1024, %v1022
        %v1093 = vpack.c.bf16 %v1027, %v1025
        %v1094 = vpack.c.bf16 %v1028, %v1026
        %v1095 = vpack.c.bf16 %v1031, %v1029
        %v1096 = vpack.c.bf16 %v1032, %v1030
        %v1097 = vld [vmem:[%s3] sm:$0xff]
        %v1098 = vld [vmem:[%s3 + $0x8] sm:$0xff]
        %v1099 = vld [vmem:[%s3 + $0x10] sm:$0xff]
        %v1100 = vld [vmem:[%s3 + $0x18] sm:$0xff]
        %v1101 = vld [vmem:[%s3 + $0x20] sm:$0xff]
        %v1102 = vld [vmem:[%s3 + $0x28] sm:$0xff]
        %v1103 = vld [vmem:[%s3 + $0x30] sm:$0xff]
        %v1104 = vld [vmem:[%s3 + $0x38] sm:$0xff]
        %v1105 = vld [vmem:[%s3 + $0x40] sm:$0xff]
        %v1106 = vld [vmem:[%s3 + $0x48] sm:$0xff]
        %v1107 = vld [vmem:[%s3 + $0x50] sm:$0xff]
        %v1108 = vld [vmem:[%s3 + $0x58] sm:$0xff]
        %v1109 = vld [vmem:[%s3 + $0x60] sm:$0xff]
        %v1110 = vld [vmem:[%s3 + $0x68] sm:$0xff]
        %v1111 = vld [vmem:[%s3 + $0x70] sm:$0xff]
        %v1112 = vld [vmem:[%s3 + $0x78] sm:$0xff]
        %v1113 = vld [vmem:[%s3 + $0x80] sm:$0xff]
        %v1114 = vld [vmem:[%s3 + $0x88] sm:$0xff]
        %v1115 = vld [vmem:[%s3 + $0x90] sm:$0xff]
        %v1116 = vld [vmem:[%s3 + $0x98] sm:$0xff]
        %v1117 = vld [vmem:[%s3 + $0xa0] sm:$0xff]
        %v1118 = vld [vmem:[%s3 + $0xa8] sm:$0xff]
        %v1119 = vld [vmem:[%s3 + $0xb0] sm:$0xff]
        %v1120 = vld [vmem:[%s3 + $0xb8] sm:$0xff]
        %v1121 = vld [vmem:[%s3 + $0xc0] sm:$0xff]
        %v1122 = vld [vmem:[%s3 + $0xc8] sm:$0xff]
        %v1123 = vld [vmem:[%s3 + $0xd0] sm:$0xff]
        %v1124 = vld [vmem:[%s3 + $0xd8] sm:$0xff]
        %v1125 = vld [vmem:[%s3 + $0xe0] sm:$0xff]
        %v1126 = vld [vmem:[%s3 + $0xe8] sm:$0xff]
        %v1127 = vld [vmem:[%s3 + $0xf0] sm:$0xff]
        %v1128 = vld [vmem:[%s3 + $0xf8] sm:$0xff]
        %v1129 = vld [vmem:[%s4] sm:$0x3]
        %v1131 = vlaneseq
        %v1132 = vshrl.u32 %v1131, 7
        %v1133 = vsub.s32 0, %v1132
        %v1134 = vrot.slane %v1129, %v1133
        %v1135 = vlaneseq
        %v1136 = vshrl.u32 %v1135, 7
        %v1137 = vsub.s32 1, %v1136
        %v1138 = vrot.slane %v1129, %v1137
        %v1173 = vunpack.c.l.b16 %v1097
        %v1174 = vunpack.c.h.b16 %v1097
        %v1175 = vunpack.c.l.b16 %v1098
        %v1176 = vunpack.c.h.b16 %v1098
        %v1177 = vunpack.c.l.b16 %v1099
        %v1178 = vunpack.c.h.b16 %v1099
        %v1179 = vunpack.c.l.b16 %v1100
        %v1180 = vunpack.c.h.b16 %v1100
        %v1181 = vunpack.c.l.b16 %v1101
        %v1182 = vunpack.c.h.b16 %v1101
        %v1183 = vunpack.c.l.b16 %v1102
        %v1184 = vunpack.c.h.b16 %v1102
        %v1185 = vunpack.c.l.b16 %v1103
        %v1186 = vunpack.c.h.b16 %v1103
        %v1187 = vunpack.c.l.b16 %v1104
        %v1188 = vunpack.c.h.b16 %v1104
        %v1189 = vunpack.c.l.b16 %v1105
        %v1190 = vunpack.c.h.b16 %v1105
        %v1191 = vunpack.c.l.b16 %v1106
        %v1192 = vunpack.c.h.b16 %v1106
        %v1193 = vunpack.c.l.b16 %v1107
        %v1194 = vunpack.c.h.b16 %v1107
        %v1195 = vunpack.c.l.b16 %v1108
        %v1196 = vunpack.c.h.b16 %v1108
        %v1197 = vunpack.c.l.b16 %v1109
        %v1198 = vunpack.c.h.b16 %v1109
        %v1199 = vunpack.c.l.b16 %v1110
        %v1200 = vunpack.c.h.b16 %v1110
        %v1201 = vunpack.c.l.b16 %v1111
        %v1202 = vunpack.c.h.b16 %v1111
        %v1203 = vunpack.c.l.b16 %v1112
        %v1204 = vunpack.c.h.b16 %v1112
        %v1205 = vunpack.c.l.b16 %v1113
        %v1206 = vunpack.c.h.b16 %v1113
        %v1207 = vunpack.c.l.b16 %v1114
        %v1208 = vunpack.c.h.b16 %v1114
        %v1209 = vunpack.c.l.b16 %v1115
        %v1210 = vunpack.c.h.b16 %v1115
        %v1211 = vunpack.c.l.b16 %v1116
        %v1212 = vunpack.c.h.b16 %v1116
        %v1213 = vunpack.c.l.b16 %v1117
        %v1214 = vunpack.c.h.b16 %v1117
        %v1215 = vunpack.c.l.b16 %v1118
        %v1216 = vunpack.c.h.b16 %v1118
        %v1217 = vunpack.c.l.b16 %v1119
        %v1218 = vunpack.c.h.b16 %v1119
        %v1219 = vunpack.c.l.b16 %v1120
        %v1220 = vunpack.c.h.b16 %v1120
        %v1221 = vunpack.c.l.b16 %v1121
        %v1222 = vunpack.c.h.b16 %v1121
        %v1223 = vunpack.c.l.b16 %v1122
        %v1224 = vunpack.c.h.b16 %v1122
        %v1225 = vunpack.c.l.b16 %v1123
        %v1226 = vunpack.c.h.b16 %v1123
        %v1227 = vunpack.c.l.b16 %v1124
        %v1228 = vunpack.c.h.b16 %v1124
        %v1229 = vunpack.c.l.b16 %v1125
        %v1230 = vunpack.c.h.b16 %v1125
        %v1231 = vunpack.c.l.b16 %v1126
        %v1232 = vunpack.c.h.b16 %v1126
        %v1233 = vunpack.c.l.b16 %v1127
        %v1234 = vunpack.c.h.b16 %v1127
        %v1235 = vunpack.c.l.b16 %v1128
        %v1236 = vunpack.c.h.b16 %v1128
        %v1237 = vpack.c.b16 %v1175, %v1173
        %v1238 = vpack.c.b16 %v1176, %v1174
        %v1239 = vpack.c.b16 %v1179, %v1177
        %v1240 = vpack.c.b16 %v1180, %v1178
        %v1241 = vpack.c.b16 %v1183, %v1181
        %v1242 = vpack.c.b16 %v1184, %v1182
        %v1243 = vpack.c.b16 %v1187, %v1185
        %v1244 = vpack.c.b16 %v1188, %v1186
        %v1245 = vpack.c.b16 %v1191, %v1189
        %v1246 = vpack.c.b16 %v1192, %v1190
        %v1247 = vpack.c.b16 %v1195, %v1193
        %v1248 = vpack.c.b16 %v1196, %v1194
        %v1249 = vpack.c.b16 %v1199, %v1197
        %v1250 = vpack.c.b16 %v1200, %v1198
        %v1251 = vpack.c.b16 %v1203, %v1201
        %v1252 = vpack.c.b16 %v1204, %v1202
        %v1253 = vpack.c.b16 %v1207, %v1205
        %v1254 = vpack.c.b16 %v1208, %v1206
        %v1255 = vpack.c.b16 %v1211, %v1209
        %v1256 = vpack.c.b16 %v1212, %v1210
        %v1257 = vpack.c.b16 %v1215, %v1213
        %v1258 = vpack.c.b16 %v1216, %v1214
        %v1259 = vpack.c.b16 %v1219, %v1217
        %v1260 = vpack.c.b16 %v1220, %v1218
        %v1261 = vpack.c.b16 %v1223, %v1221
        %v1262 = vpack.c.b16 %v1224, %v1222
        %v1263 = vpack.c.b16 %v1227, %v1225
        %v1264 = vpack.c.b16 %v1228, %v1226
        %v1265 = vpack.c.b16 %v1231, %v1229
        %v1266 = vpack.c.b16 %v1232, %v1230
        %v1267 = vpack.c.b16 %v1235, %v1233
        %v1268 = vpack.c.b16 %v1236, %v1234
        %1301 = vmatprep.subr.bf16.mxu0 %v1238
        %1302 = vmatpush1.bf16.msra.mxu0 %v1237
        %1303 = vmatprep.subr.bf16.mxu0 %v1240
        %1304 = vmatpush1.bf16.msra.mxu0 %v1239
        %1305 = vmatprep.subr.bf16.mxu0 %v1242
        %1306 = vmatpush1.bf16.msra.mxu0 %v1241
        %1307 = vmatprep.subr.bf16.mxu0 %v1244
        %1308 = vmatpush1.bf16.msra.mxu0 %v1243
        %1309 = vmatprep.subr.bf16.mxu0 %v1246
        %1310 = vmatpush1.bf16.msra.mxu0 %v1245
        %1311 = vmatprep.subr.bf16.mxu0 %v1248
        %1312 = vmatpush1.bf16.msra.mxu0 %v1247
        %1313 = vmatprep.subr.bf16.mxu0 %v1250
        %1314 = vmatpush1.bf16.msra.mxu0 %v1249
        %1315 = vmatprep.subr.bf16.mxu0 %v1252
        %1316 = vmatpush1.bf16.msra.mxu0 %v1251
        %1317 = vmatprep.subr.bf16.mxu0 %v1254
        %1318 = vmatpush1.bf16.msra.mxu0 %v1253
        %1319 = vmatprep.subr.bf16.mxu0 %v1256
        %1320 = vmatpush1.bf16.msra.mxu0 %v1255
        %1321 = vmatprep.subr.bf16.mxu0 %v1258
        %1322 = vmatpush1.bf16.msra.mxu0 %v1257
        %1323 = vmatprep.subr.bf16.mxu0 %v1260
        %1324 = vmatpush1.bf16.msra.mxu0 %v1259
        %1325 = vmatprep.subr.bf16.mxu0 %v1262
        %1326 = vmatpush1.bf16.msra.mxu0 %v1261
        %1327 = vmatprep.subr.bf16.mxu0 %v1264
        %1328 = vmatpush1.bf16.msra.mxu0 %v1263
        %1329 = vmatprep.subr.bf16.mxu0 %v1266
        %1330 = vmatpush1.bf16.msra.mxu0 %v1265
        %1331 = vmatprep.subr.bf16.mxu0 %v1268
        %1332 = vmatpush1.bf16.msra.mxu0 %v1267
        %1333 = vmatprep.mubr.bf16.mxu0 %v1034
        %1334 = vmatmul.mubr.bf16.gmra.mrb[0].mxu0 %v1033
        %v1335 = vpop.f32.mrb[0].mxu0
        %v1336 = vadd.f32 %v1134, %v1335
        %v1337 = vpop.f32.mrb[0].mxu0
        %v1338 = vadd.f32 %v1138, %v1337
        %v1339 = vpop.f32.mrb[0].mxu0
        %v1340 = vadd.f32 %v1134, %v1339
        %v1341 = vpop.f32.mrb[0].mxu0
        %v1342 = vadd.f32 %v1138, %v1341
        %1343 = vmatprep.mubr.bf16.mxu0 %v1036
        %1344 = vmatmul.mubr.bf16.gmra.mrb[0].mxu0 %v1035
        %v1345 = vpop.f32.mrb[0].mxu0
        %v1346 = vadd.f32 %v1134, %v1345
        %v1347 = vpop.f32.mrb[0].mxu0
        %v1348 = vadd.f32 %v1138, %v1347
        %v1349 = vpop.f32.mrb[0].mxu0
        %v1350 = vadd.f32 %v1134, %v1349
        %v1351 = vpop.f32.mrb[0].mxu0
        %v1352 = vadd.f32 %v1138, %v1351
        %1353 = vmatprep.mubr.bf16.mxu0 %v1038
        %1354 = vmatmul.mubr.bf16.gmra.mrb[0].mxu0 %v1037
        %v1355 = vpop.f32.mrb[0].mxu0
        %v1356 = vadd.f32 %v1134, %v1355
        %v1357 = vpop.f32.mrb[0].mxu0
        %v1358 = vadd.f32 %v1138, %v1357
        %v1359 = vpop.f32.mrb[0].mxu0
        %v1360 = vadd.f32 %v1134, %v1359
        %v1361 = vpop.f32.mrb[0].mxu0
        %v1362 = vadd.f32 %v1138, %v1361
        %1363 = vmatprep.mubr.bf16.mxu0 %v1040
        %1364 = vmatmul.mubr.bf16.gmra.mrb[0].mxu0 %v1039
        %v1365 = vpop.f32.mrb[0].mxu0
        %v1366 = vadd.f32 %v1134, %v1365
        %v1367 = vpop.f32.mrb[0].mxu0
        %v1368 = vadd.f32 %v1138, %v1367
        %v1369 = vpop.f32.mrb[0].mxu0
        %v1370 = vadd.f32 %v1134, %v1369
        %v1371 = vpop.f32.mrb[0].mxu0
        %v1372 = vadd.f32 %v1138, %v1371
        %1373 = vmatprep.mubr.bf16.mxu0 %v1042
        %1374 = vmatmul.mubr.bf16.gmra.mrb[0].mxu0 %v1041
        %v1375 = vpop.f32.mrb[0].mxu0
        %v1376 = vadd.f32 %v1134, %v1375
        %v1377 = vpop.f32.mrb[0].mxu0
        %v1378 = vadd.f32 %v1138, %v1377
        %v1379 = vpop.f32.mrb[0].mxu0
        %v1380 = vadd.f32 %v1134, %v1379
        %v1381 = vpop.f32.mrb[0].mxu0
        %v1382 = vadd.f32 %v1138, %v1381
        %1383 = vmatprep.mubr.bf16.mxu0 %v1044
        %1384 = vmatmul.mubr.bf16.gmra.mrb[0].mxu0 %v1043
        %v1385 = vpop.f32.mrb[0].mxu0
        %v1386 = vadd.f32 %v1134, %v1385
        %v1387 = vpop.f32.mrb[0].mxu0
        %v1388 = vadd.f32 %v1138, %v1387
        %v1389 = vpop.f32.mrb[0].mxu0
        %v1390 = vadd.f32 %v1134, %v1389
        %v1391 = vpop.f32.mrb[0].mxu0
        %v1392 = vadd.f32 %v1138, %v1391
        %1393 = vmatprep.mubr.bf16.mxu0 %v1046
        %1394 = vmatmul.mubr.bf16.gmra.mrb[0].mxu0 %v1045
        %v1395 = vpop.f32.mrb[0].mxu0
        %v1396 = vadd.f32 %v1134, %v1395
        %v1397 = vpop.f32.mrb[0].mxu0
        %v1398 = vadd.f32 %v1138, %v1397
        %v1399 = vpop.f32.mrb[0].mxu0
        %v1400 = vadd.f32 %v1134, %v1399
        %v1401 = vpop.f32.mrb[0].mxu0
        %v1402 = vadd.f32 %v1138, %v1401
        %1403 = vmatprep.mubr.bf16.mxu0 %v1048
        %1404 = vmatmul.mubr.bf16.gmra.mrb[0].mxu0 %v1047
        %v1405 = vpop.f32.mrb[0].mxu0
        %v1406 = vadd.f32 %v1134, %v1405
        %v1407 = vpop.f32.mrb[0].mxu0
        %v1408 = vadd.f32 %v1138, %v1407
        %v1409 = vpop.f32.mrb[0].mxu0
        %v1410 = vadd.f32 %v1134, %v1409
        %v1411 = vpop.f32.mrb[0].mxu0
        %v1412 = vadd.f32 %v1138, %v1411
        %1413 = vmatprep.mubr.bf16.mxu0 %v1050
        %1414 = vmatmul.mubr.bf16.gmra.mrb[0].mxu0 %v1049
        %v1415 = vpop.f32.mrb[0].mxu0
        %v1416 = vadd.f32 %v1134, %v1415
        %v1417 = vpop.f32.mrb[0].mxu0
        %v1418 = vadd.f32 %v1138, %v1417
        %v1419 = vpop.f32.mrb[0].mxu0
        %v1420 = vadd.f32 %v1134, %v1419
        %v1421 = vpop.f32.mrb[0].mxu0
        %v1422 = vadd.f32 %v1138, %v1421
        %1423 = vmatprep.mubr.bf16.mxu0 %v1052
        %1424 = vmatmul.mubr.bf16.gmra.mrb[0].mxu0 %v1051
        %v1425 = vpop.f32.mrb[0].mxu0
        %v1426 = vadd.f32 %v1134, %v1425
        %v1427 = vpop.f32.mrb[0].mxu0
        %v1428 = vadd.f32 %v1138, %v1427
        %v1429 = vpop.f32.mrb[0].mxu0
        %v1430 = vadd.f32 %v1134, %v1429
        %v1431 = vpop.f32.mrb[0].mxu0
        %v1432 = vadd.f32 %v1138, %v1431
        %1433 = vmatprep.mubr.bf16.mxu0 %v1054
        %1434 = vmatmul.mubr.bf16.gmra.mrb[0].mxu0 %v1053
        %v1435 = vpop.f32.mrb[0].mxu0
        %v1436 = vadd.f32 %v1134, %v1435
        %v1437 = vpop.f32.mrb[0].mxu0
        %v1438 = vadd.f32 %v1138, %v1437
        %v1439 = vpop.f32.mrb[0].mxu0
        %v1440 = vadd.f32 %v1134, %v1439
        %v1441 = vpop.f32.mrb[0].mxu0
        %v1442 = vadd.f32 %v1138, %v1441
        %1443 = vmatprep.mubr.bf16.mxu0 %v1056
        %1444 = vmatmul.mubr.bf16.gmra.mrb[0].mxu0 %v1055
        %v1445 = vpop.f32.mrb[0].mxu0
        %v1446 = vadd.f32 %v1134, %v1445
        %v1447 = vpop.f32.mrb[0].mxu0
        %v1448 = vadd.f32 %v1138, %v1447
        %v1449 = vpop.f32.mrb[0].mxu0
        %v1450 = vadd.f32 %v1134, %v1449
        %v1451 = vpop.f32.mrb[0].mxu0
        %v1452 = vadd.f32 %v1138, %v1451
        %1453 = vmatprep.mubr.bf16.mxu0 %v1058
        %1454 = vmatmul.mubr.bf16.gmra.mrb[0].mxu0 %v1057
        %v1455 = vpop.f32.mrb[0].mxu0
        %v1456 = vadd.f32 %v1134, %v1455
        %v1457 = vpop.f32.mrb[0].mxu0
        %v1458 = vadd.f32 %v1138, %v1457
        %v1459 = vpop.f32.mrb[0].mxu0
        %v1460 = vadd.f32 %v1134, %v1459
        %v1461 = vpop.f32.mrb[0].mxu0
        %v1462 = vadd.f32 %v1138, %v1461
        %1463 = vmatprep.mubr.bf16.mxu0 %v1060
        %1464 = vmatmul.mubr.bf16.gmra.mrb[0].mxu0 %v1059
        %v1465 = vpop.f32.mrb[0].mxu0
        %v1466 = vadd.f32 %v1134, %v1465
        %v1467 = vpop.f32.mrb[0].mxu0
        %v1468 = vadd.f32 %v1138, %v1467
        %v1469 = vpop.f32.mrb[0].mxu0
        %v1470 = vadd.f32 %v1134, %v1469
        %v1471 = vpop.f32.mrb[0].mxu0
        %v1472 = vadd.f32 %v1138, %v1471
        %1473 = vmatprep.mubr.bf16.mxu0 %v1062
        %1474 = vmatmul.mubr.bf16.gmra.mrb[0].mxu0 %v1061
        %v1475 = vpop.f32.mrb[0].mxu0
        %v1476 = vadd.f32 %v1134, %v1475
        %v1477 = vpop.f32.mrb[0].mxu0
        %v1478 = vadd.f32 %v1138, %v1477
        %v1479 = vpop.f32.mrb[0].mxu0
        %v1480 = vadd.f32 %v1134, %v1479
        %v1481 = vpop.f32.mrb[0].mxu0
        %v1482 = vadd.f32 %v1138, %v1481
        %1483 = vmatprep.mubr.bf16.mxu0 %v1064
        %1484 = vmatmul.mubr.bf16.gmra.mrb[0].mxu0 %v1063
        %v1485 = vpop.f32.mrb[0].mxu0
        %v1486 = vadd.f32 %v1134, %v1485
        %v1487 = vpop.f32.mrb[0].mxu0
        %v1488 = vadd.f32 %v1138, %v1487
        %v1489 = vpop.f32.mrb[0].mxu0
        %v1490 = vadd.f32 %v1134, %v1489
        %v1491 = vpop.f32.mrb[0].mxu0
        %v1492 = vadd.f32 %v1138, %v1491
        %1493 = vmatprep.mubr.bf16.mxu0 %v1066
        %1494 = vmatmul.mubr.bf16.gmra.mrb[0].mxu0 %v1065
        %v1495 = vpop.f32.mrb[0].mxu0
        %v1496 = vadd.f32 %v1134, %v1495
        %v1497 = vpop.f32.mrb[0].mxu0
        %v1498 = vadd.f32 %v1138, %v1497
        %v1499 = vpop.f32.mrb[0].mxu0
        %v1500 = vadd.f32 %v1134, %v1499
        %v1501 = vpop.f32.mrb[0].mxu0
        %v1502 = vadd.f32 %v1138, %v1501
        %1503 = vmatprep.mubr.bf16.mxu0 %v1068
        %1504 = vmatmul.mubr.bf16.gmra.mrb[0].mxu0 %v1067
        %v1505 = vpop.f32.mrb[0].mxu0
        %v1506 = vadd.f32 %v1134, %v1505
        %v1507 = vpop.f32.mrb[0].mxu0
        %v1508 = vadd.f32 %v1138, %v1507
        %v1509 = vpop.f32.mrb[0].mxu0
        %v1510 = vadd.f32 %v1134, %v1509
        %v1511 = vpop.f32.mrb[0].mxu0
        %v1512 = vadd.f32 %v1138, %v1511
        %1513 = vmatprep.mubr.bf16.mxu0 %v1070
        %1514 = vmatmul.mubr.bf16.gmra.mrb[0].mxu0 %v1069
        %v1515 = vpop.f32.mrb[0].mxu0
        %v1516 = vadd.f32 %v1134, %v1515
        %v1517 = vpop.f32.mrb[0].mxu0
        %v1518 = vadd.f32 %v1138, %v1517
        %v1519 = vpop.f32.mrb[0].mxu0
        %v1520 = vadd.f32 %v1134, %v1519
        %v1521 = vpop.f32.mrb[0].mxu0
        %v1522 = vadd.f32 %v1138, %v1521
        %1523 = vmatprep.mubr.bf16.mxu0 %v1072
        %1524 = vmatmul.mubr.bf16.gmra.mrb[0].mxu0 %v1071
        %v1525 = vpop.f32.mrb[0].mxu0
        %v1526 = vadd.f32 %v1134, %v1525
        %v1527 = vpop.f32.mrb[0].mxu0
        %v1528 = vadd.f32 %v1138, %v1527
        %v1529 = vpop.f32.mrb[0].mxu0
        %v1530 = vadd.f32 %v1134, %v1529
        %v1531 = vpop.f32.mrb[0].mxu0
        %v1532 = vadd.f32 %v1138, %v1531
        %1533 = vmatprep.mubr.bf16.mxu0 %v1074
        %1534 = vmatmul.mubr.bf16.gmra.mrb[0].mxu0 %v1073
        %v1535 = vpop.f32.mrb[0].mxu0
        %v1536 = vadd.f32 %v1134, %v1535
        %v1537 = vpop.f32.mrb[0].mxu0
        %v1538 = vadd.f32 %v1138, %v1537
        %v1539 = vpop.f32.mrb[0].mxu0
        %v1540 = vadd.f32 %v1134, %v1539
        %v1541 = vpop.f32.mrb[0].mxu0
        %v1542 = vadd.f32 %v1138, %v1541
        %1543 = vmatprep.mubr.bf16.mxu0 %v1076
        %1544 = vmatmul.mubr.bf16.gmra.mrb[0].mxu0 %v1075
        %v1545 = vpop.f32.mrb[0].mxu0
        %v1546 = vadd.f32 %v1134, %v1545
        %v1547 = vpop.f32.mrb[0].mxu0
        %v1548 = vadd.f32 %v1138, %v1547
        %v1549 = vpop.f32.mrb[0].mxu0
        %v1550 = vadd.f32 %v1134, %v1549
        %v1551 = vpop.f32.mrb[0].mxu0
        %v1552 = vadd.f32 %v1138, %v1551
        %1553 = vmatprep.mubr.bf16.mxu0 %v1078
        %1554 = vmatmul.mubr.bf16.gmra.mrb[0].mxu0 %v1077
        %v1555 = vpop.f32.mrb[0].mxu0
        %v1556 = vadd.f32 %v1134, %v1555
        %v1557 = vpop.f32.mrb[0].mxu0
        %v1558 = vadd.f32 %v1138, %v1557
        %v1559 = vpop.f32.mrb[0].mxu0
        %v1560 = vadd.f32 %v1134, %v1559
        %v1561 = vpop.f32.mrb[0].mxu0
        %v1562 = vadd.f32 %v1138, %v1561
        %1563 = vmatprep.mubr.bf16.mxu0 %v1080
        %1564 = vmatmul.mubr.bf16.gmra.mrb[0].mxu0 %v1079
        %v1565 = vpop.f32.mrb[0].mxu0
        %v1566 = vadd.f32 %v1134, %v1565
        %v1567 = vpop.f32.mrb[0].mxu0
        %v1568 = vadd.f32 %v1138, %v1567
        %v1569 = vpop.f32.mrb[0].mxu0
        %v1570 = vadd.f32 %v1134, %v1569
        %v1571 = vpop.f32.mrb[0].mxu0
        %v1572 = vadd.f32 %v1138, %v1571
        %1573 = vmatprep.mubr.bf16.mxu0 %v1082
        %1574 = vmatmul.mubr.bf16.gmra.mrb[0].mxu0 %v1081
        %v1575 = vpop.f32.mrb[0].mxu0
        %v1576 = vadd.f32 %v1134, %v1575
        %v1577 = vpop.f32.mrb[0].mxu0
        %v1578 = vadd.f32 %v1138, %v1577
        %v1579 = vpop.f32.mrb[0].mxu0
        %v1580 = vadd.f32 %v1134, %v1579
        %v1581 = vpop.f32.mrb[0].mxu0
        %v1582 = vadd.f32 %v1138, %v1581
        %1583 = vmatprep.mubr.bf16.mxu0 %v1084
        %1584 = vmatmul.mubr.bf16.gmra.mrb[0].mxu0 %v1083
        %v1585 = vpop.f32.mrb[0].mxu0
        %v1586 = vadd.f32 %v1134, %v1585
        %v1587 = vpop.f32.mrb[0].mxu0
        %v1588 = vadd.f32 %v1138, %v1587
        %v1589 = vpop.f32.mrb[0].mxu0
        %v1590 = vadd.f32 %v1134, %v1589
        %v1591 = vpop.f32.mrb[0].mxu0
        %v1592 = vadd.f32 %v1138, %v1591
        %1593 = vmatprep.mubr.bf16.mxu0 %v1086
        %1594 = vmatmul.mubr.bf16.gmra.mrb[0].mxu0 %v1085
        %v1595 = vpop.f32.mrb[0].mxu0
        %v1596 = vadd.f32 %v1134, %v1595
        %v1597 = vpop.f32.mrb[0].mxu0
        %v1598 = vadd.f32 %v1138, %v1597
        %v1599 = vpop.f32.mrb[0].mxu0
        %v1600 = vadd.f32 %v1134, %v1599
        %v1601 = vpop.f32.mrb[0].mxu0
        %v1602 = vadd.f32 %v1138, %v1601
        %1603 = vmatprep.mubr.bf16.mxu0 %v1088
        %1604 = vmatmul.mubr.bf16.gmra.mrb[0].mxu0 %v1087
        %v1605 = vpop.f32.mrb[0].mxu0
        %v1606 = vadd.f32 %v1134, %v1605
        %v1607 = vpop.f32.mrb[0].mxu0
        %v1608 = vadd.f32 %v1138, %v1607
        %v1609 = vpop.f32.mrb[0].mxu0
        %v1610 = vadd.f32 %v1134, %v1609
        %v1611 = vpop.f32.mrb[0].mxu0
        %v1612 = vadd.f32 %v1138, %v1611
        %1613 = vmatprep.mubr.bf16.mxu0 %v1090
        %1614 = vmatmul.mubr.bf16.gmra.mrb[0].mxu0 %v1089
        %v1615 = vpop.f32.mrb[0].mxu0
        %v1616 = vadd.f32 %v1134, %v1615
        %v1617 = vpop.f32.mrb[0].mxu0
        %v1618 = vadd.f32 %v1138, %v1617
        %v1619 = vpop.f32.mrb[0].mxu0
        %v1620 = vadd.f32 %v1134, %v1619
        %v1621 = vpop.f32.mrb[0].mxu0
        %v1622 = vadd.f32 %v1138, %v1621
        %1623 = vmatprep.mubr.bf16.mxu0 %v1092
        %1624 = vmatmul.mubr.bf16.gmra.mrb[0].mxu0 %v1091
        %v1625 = vpop.f32.mrb[0].mxu0
        %v1626 = vadd.f32 %v1134, %v1625
        %v1627 = vpop.f32.mrb[0].mxu0
        %v1628 = vadd.f32 %v1138, %v1627
        %v1629 = vpop.f32.mrb[0].mxu0
        %v1630 = vadd.f32 %v1134, %v1629
        %v1631 = vpop.f32.mrb[0].mxu0
        %v1632 = vadd.f32 %v1138, %v1631
        %1633 = vmatprep.mubr.bf16.mxu0 %v1094
        %1634 = vmatmul.mubr.bf16.gmra.mrb[0].mxu0 %v1093
        %v1635 = vpop.f32.mrb[0].mxu0
        %v1636 = vadd.f32 %v1134, %v1635
        %v1637 = vpop.f32.mrb[0].mxu0
        %v1638 = vadd.f32 %v1138, %v1637
        %v1639 = vpop.f32.mrb[0].mxu0
        %v1640 = vadd.f32 %v1134, %v1639
        %v1641 = vpop.f32.mrb[0].mxu0
        %v1642 = vadd.f32 %v1138, %v1641
        %1643 = vmatprep.mubr.bf16.mxu0 %v1096
        %1644 = vmatmul.mubr.bf16.gmra.mrb[0].mxu0 %v1095
        %v1645 = vpop.f32.mrb[0].mxu0
        %v1646 = vadd.f32 %v1134, %v1645
        %v1647 = vpop.f32.mrb[0].mxu0
        %v1648 = vadd.f32 %v1138, %v1647
        %v1649 = vpop.f32.mrb[0].mxu0
        %v1650 = vadd.f32 %v1134, %v1649
        %v1651 = vpop.f32.mrb[0].mxu0
        %v1652 = vadd.f32 %v1138, %v1651
        %1653 = vdwg.mxu0
        %v1654 = vmax.f32 %v1336, 0.0
        %v1655 = vmax.f32 %v1338, 0.0
        %v1656 = vmax.f32 %v1340, 0.0
        %v1657 = vmax.f32 %v1342, 0.0
        %v1658 = vmax.f32 %v1346, 0.0
        %v1659 = vmax.f32 %v1348, 0.0
        %v1660 = vmax.f32 %v1350, 0.0
        %v1661 = vmax.f32 %v1352, 0.0
        %v1662 = vmax.f32 %v1356, 0.0
        %v1663 = vmax.f32 %v1358, 0.0
        %v1664 = vmax.f32 %v1360, 0.0
        %v1665 = vmax.f32 %v1362, 0.0
        %v1666 = vmax.f32 %v1366, 0.0
        %v1667 = vmax.f32 %v1368, 0.0
        %v1668 = vmax.f32 %v1370, 0.0
        %v1669 = vmax.f32 %v1372, 0.0
        %v1670 = vmax.f32 %v1376, 0.0
        %v1671 = vmax.f32 %v1378, 0.0
        %v1672 = vmax.f32 %v1380, 0.0
        %v1673 = vmax.f32 %v1382, 0.0
        %v1674 = vmax.f32 %v1386, 0.0
        %v1675 = vmax.f32 %v1388, 0.0
        %v1676 = vmax.f32 %v1390, 0.0
        %v1677 = vmax.f32 %v1392, 0.0
        %v1678 = vmax.f32 %v1396, 0.0
        %v1679 = vmax.f32 %v1398, 0.0
        %v1680 = vmax.f32 %v1400, 0.0
        %v1681 = vmax.f32 %v1402, 0.0
        %v1682 = vmax.f32 %v1406, 0.0
        %v1683 = vmax.f32 %v1408, 0.0
        %v1684 = vmax.f32 %v1410, 0.0
        %v1685 = vmax.f32 %v1412, 0.0
        %v1686 = vmax.f32 %v1416, 0.0
        %v1687 = vmax.f32 %v1418, 0.0
        %v1688 = vmax.f32 %v1420, 0.0
        %v1689 = vmax.f32 %v1422, 0.0
        %v1690 = vmax.f32 %v1426, 0.0
        %v1691 = vmax.f32 %v1428, 0.0
        %v1692 = vmax.f32 %v1430, 0.0
        %v1693 = vmax.f32 %v1432, 0.0
        %v1694 = vmax.f32 %v1436, 0.0
        %v1695 = vmax.f32 %v1438, 0.0
        %v1696 = vmax.f32 %v1440, 0.0
        %v1697 = vmax.f32 %v1442, 0.0
        %v1698 = vmax.f32 %v1446, 0.0
        %v1699 = vmax.f32 %v1448, 0.0
        %v1700 = vmax.f32 %v1450, 0.0
        %v1701 = vmax.f32 %v1452, 0.0
        %v1702 = vmax.f32 %v1456, 0.0
        %v1703 = vmax.f32 %v1458, 0.0
        %v1704 = vmax.f32 %v1460, 0.0
        %v1705 = vmax.f32 %v1462, 0.0
        %v1706 = vmax.f32 %v1466, 0.0
        %v1707 = vmax.f32 %v1468, 0.0
        %v1708 = vmax.f32 %v1470, 0.0
        %v1709 = vmax.f32 %v1472, 0.0
        %v1710 = vmax.f32 %v1476, 0.0
        %v1711 = vmax.f32 %v1478, 0.0
        %v1712 = vmax.f32 %v1480, 0.0
        %v1713 = vmax.f32 %v1482, 0.0
        %v1714 = vmax.f32 %v1486, 0.0
        %v1715 = vmax.f32 %v1488, 0.0
        %v1716 = vmax.f32 %v1490, 0.0
        %v1717 = vmax.f32 %v1492, 0.0
        %v1718 = vmax.f32 %v1496, 0.0
        %v1719 = vmax.f32 %v1498, 0.0
        %v1720 = vmax.f32 %v1500, 0.0
        %v1721 = vmax.f32 %v1502, 0.0
        %v1722 = vmax.f32 %v1506, 0.0
        %v1723 = vmax.f32 %v1508, 0.0
        %v1724 = vmax.f32 %v1510, 0.0
        %v1725 = vmax.f32 %v1512, 0.0
        %v1726 = vmax.f32 %v1516, 0.0
        %v1727 = vmax.f32 %v1518, 0.0
        %v1728 = vmax.f32 %v1520, 0.0
        %v1729 = vmax.f32 %v1522, 0.0
        %v1730 = vmax.f32 %v1526, 0.0
        %v1731 = vmax.f32 %v1528, 0.0
        %v1732 = vmax.f32 %v1530, 0.0
        %v1733 = vmax.f32 %v1532, 0.0
        %v1734 = vmax.f32 %v1536, 0.0
        %v1735 = vmax.f32 %v1538, 0.0
        %v1736 = vmax.f32 %v1540, 0.0
        %v1737 = vmax.f32 %v1542, 0.0
        %v1738 = vmax.f32 %v1546, 0.0
        %v1739 = vmax.f32 %v1548, 0.0
        %v1740 = vmax.f32 %v1550, 0.0
        %v1741 = vmax.f32 %v1552, 0.0
        %v1742 = vmax.f32 %v1556, 0.0
        %v1743 = vmax.f32 %v1558, 0.0
        %v1744 = vmax.f32 %v1560, 0.0
        %v1745 = vmax.f32 %v1562, 0.0
        %v1746 = vmax.f32 %v1566, 0.0
        %v1747 = vmax.f32 %v1568, 0.0
        %v1748 = vmax.f32 %v1570, 0.0
        %v1749 = vmax.f32 %v1572, 0.0
        %v1750 = vmax.f32 %v1576, 0.0
        %v1751 = vmax.f32 %v1578, 0.0
        %v1752 = vmax.f32 %v1580, 0.0
        %v1753 = vmax.f32 %v1582, 0.0
        %v1754 = vmax.f32 %v1586, 0.0
        %v1755 = vmax.f32 %v1588, 0.0
        %v1756 = vmax.f32 %v1590, 0.0
        %v1757 = vmax.f32 %v1592, 0.0
        %v1758 = vmax.f32 %v1596, 0.0
        %v1759 = vmax.f32 %v1598, 0.0
        %v1760 = vmax.f32 %v1600, 0.0
        %v1761 = vmax.f32 %v1602, 0.0
        %v1762 = vmax.f32 %v1606, 0.0
        %v1763 = vmax.f32 %v1608, 0.0
        %v1764 = vmax.f32 %v1610, 0.0
        %v1765 = vmax.f32 %v1612, 0.0
        %v1766 = vmax.f32 %v1616, 0.0
        %v1767 = vmax.f32 %v1618, 0.0
        %v1768 = vmax.f32 %v1620, 0.0
        %v1769 = vmax.f32 %v1622, 0.0
        %v1770 = vmax.f32 %v1626, 0.0
        %v1771 = vmax.f32 %v1628, 0.0
        %v1772 = vmax.f32 %v1630, 0.0
        %v1773 = vmax.f32 %v1632, 0.0
        %v1774 = vmax.f32 %v1636, 0.0
        %v1775 = vmax.f32 %v1638, 0.0
        %v1776 = vmax.f32 %v1640, 0.0
        %v1777 = vmax.f32 %v1642, 0.0
        %v1778 = vmax.f32 %v1646, 0.0
        %v1779 = vmax.f32 %v1648, 0.0
        %v1780 = vmax.f32 %v1650, 0.0
        %v1781 = vmax.f32 %v1652, 0.0
        %v1782 = vpack.c.bf16 %v1656, %v1654
        %v1783 = vpack.c.bf16 %v1657, %v1655
        %v1784 = vpack.c.bf16 %v1660, %v1658
        %v1785 = vpack.c.bf16 %v1661, %v1659
        %v1786 = vpack.c.bf16 %v1664, %v1662
        %v1787 = vpack.c.bf16 %v1665, %v1663
        %v1788 = vpack.c.bf16 %v1668, %v1666
        %v1789 = vpack.c.bf16 %v1669, %v1667
        %v1790 = vpack.c.bf16 %v1672, %v1670
        %v1791 = vpack.c.bf16 %v1673, %v1671
        %v1792 = vpack.c.bf16 %v1676, %v1674
        %v1793 = vpack.c.bf16 %v1677, %v1675
        %v1794 = vpack.c.bf16 %v1680, %v1678
        %v1795 = vpack.c.bf16 %v1681, %v1679
        %v1796 = vpack.c.bf16 %v1684, %v1682
        %v1797 = vpack.c.bf16 %v1685, %v1683
        %v1798 = vpack.c.bf16 %v1688, %v1686
        %v1799 = vpack.c.bf16 %v1689, %v1687
        %v1800 = vpack.c.bf16 %v1692, %v1690
        %v1801 = vpack.c.bf16 %v1693, %v1691
        %v1802 = vpack.c.bf16 %v1696, %v1694
        %v1803 = vpack.c.bf16 %v1697, %v1695
        %v1804 = vpack.c.bf16 %v1700, %v1698
        %v1805 = vpack.c.bf16 %v1701, %v1699
        %v1806 = vpack.c.bf16 %v1704, %v1702
        %v1807 = vpack.c.bf16 %v1705, %v1703
        %v1808 = vpack.c.bf16 %v1708, %v1706
        %v1809 = vpack.c.bf16 %v1709, %v1707
        %v1810 = vpack.c.bf16 %v1712, %v1710
        %v1811 = vpack.c.bf16 %v1713, %v1711
        %v1812 = vpack.c.bf16 %v1716, %v1714
        %v1813 = vpack.c.bf16 %v1717, %v1715
        %v1814 = vpack.c.bf16 %v1720, %v1718
        %v1815 = vpack.c.bf16 %v1721, %v1719
        %v1816 = vpack.c.bf16 %v1724, %v1722
        %v1817 = vpack.c.bf16 %v1725, %v1723
        %v1818 = vpack.c.bf16 %v1728, %v1726
        %v1819 = vpack.c.bf16 %v1729, %v1727
        %v1820 = vpack.c.bf16 %v1732, %v1730
        %v1821 = vpack.c.bf16 %v1733, %v1731
        %v1822 = vpack.c.bf16 %v1736, %v1734
        %v1823 = vpack.c.bf16 %v1737, %v1735
        %v1824 = vpack.c.bf16 %v1740, %v1738
        %v1825 = vpack.c.bf16 %v1741, %v1739
        %v1826 = vpack.c.bf16 %v1744, %v1742
        %v1827 = vpack.c.bf16 %v1745, %v1743
        %v1828 = vpack.c.bf16 %v1748, %v1746
        %v1829 = vpack.c.bf16 %v1749, %v1747
        %v1830 = vpack.c.bf16 %v1752, %v1750
        %v1831 = vpack.c.bf16 %v1753, %v1751
        %v1832 = vpack.c.bf16 %v1756, %v1754
        %v1833 = vpack.c.bf16 %v1757, %v1755
        %v1834 = vpack.c.bf16 %v1760, %v1758
        %v1835 = vpack.c.bf16 %v1761, %v1759
        %v1836 = vpack.c.bf16 %v1764, %v1762
        %v1837 = vpack.c.bf16 %v1765, %v1763
        %v1838 = vpack.c.bf16 %v1768, %v1766
        %v1839 = vpack.c.bf16 %v1769, %v1767
        %v1840 = vpack.c.bf16 %v1772, %v1770
        %v1841 = vpack.c.bf16 %v1773, %v1771
        %v1842 = vpack.c.bf16 %v1776, %v1774
        %v1843 = vpack.c.bf16 %v1777, %v1775
        %v1844 = vpack.c.bf16 %v1780, %v1778
        %v1845 = vpack.c.bf16 %v1781, %v1779
        %v1846 = vld [vmem:[%s5] sm:$0xff]
        %v1847 = vld [vmem:[%s5 + $0x8] sm:$0xff]
        %v1848 = vld [vmem:[%s5 + $0x10] sm:$0xff]
        %v1849 = vld [vmem:[%s5 + $0x18] sm:$0xff]
        %v1850 = vld [vmem:[%s5 + $0x20] sm:$0xff]
        %v1851 = vld [vmem:[%s5 + $0x28] sm:$0xff]
        %v1852 = vld [vmem:[%s5 + $0x30] sm:$0xff]
        %v1853 = vld [vmem:[%s5 + $0x38] sm:$0xff]
        %v1854 = vld [vmem:[%s5 + $0x40] sm:$0xff]
        %v1855 = vld [vmem:[%s5 + $0x48] sm:$0xff]
        %v1856 = vld [vmem:[%s5 + $0x50] sm:$0xff]
        %v1857 = vld [vmem:[%s5 + $0x58] sm:$0xff]
        %v1858 = vld [vmem:[%s5 + $0x60] sm:$0xff]
        %v1859 = vld [vmem:[%s5 + $0x68] sm:$0xff]
        %v1860 = vld [vmem:[%s5 + $0x70] sm:$0xff]
        %v1861 = vld [vmem:[%s5 + $0x78] sm:$0xff]
        %v1862 = vld [vmem:[%s5 + $0x80] sm:$0xff]
        %v1863 = vld [vmem:[%s5 + $0x88] sm:$0xff]
        %v1864 = vld [vmem:[%s5 + $0x90] sm:$0xff]
        %v1865 = vld [vmem:[%s5 + $0x98] sm:$0xff]
        %v1866 = vld [vmem:[%s5 + $0xa0] sm:$0xff]
        %v1867 = vld [vmem:[%s5 + $0xa8] sm:$0xff]
        %v1868 = vld [vmem:[%s5 + $0xb0] sm:$0xff]
        %v1869 = vld [vmem:[%s5 + $0xb8] sm:$0xff]
        %v1870 = vld [vmem:[%s5 + $0xc0] sm:$0xff]
        %v1871 = vld [vmem:[%s5 + $0xc8] sm:$0xff]
        %v1872 = vld [vmem:[%s5 + $0xd0] sm:$0xff]
        %v1873 = vld [vmem:[%s5 + $0xd8] sm:$0xff]
        %v1874 = vld [vmem:[%s5 + $0xe0] sm:$0xff]
        %v1875 = vld [vmem:[%s5 + $0xe8] sm:$0xff]
        %v1876 = vld [vmem:[%s5 + $0xf0] sm:$0xff]
        %v1877 = vld [vmem:[%s5 + $0xf8] sm:$0xff]
        %v1878 = vld [vmem:[%s6] sm:$0x3]
        %v1880 = vlaneseq
        %v1881 = vshrl.u32 %v1880, 7
        %v1882 = vsub.s32 0, %v1881
        %v1883 = vrot.slane %v1878, %v1882
        %v1884 = vlaneseq
        %v1885 = vshrl.u32 %v1884, 7
        %v1886 = vsub.s32 1, %v1885
        %v1887 = vrot.slane %v1878, %v1886
        %v1922 = vunpack.c.l.b16 %v1846
        %v1923 = vunpack.c.h.b16 %v1846
        %v1924 = vunpack.c.l.b16 %v1847
        %v1925 = vunpack.c.h.b16 %v1847
        %v1926 = vunpack.c.l.b16 %v1848
        %v1927 = vunpack.c.h.b16 %v1848
        %v1928 = vunpack.c.l.b16 %v1849
        %v1929 = vunpack.c.h.b16 %v1849
        %v1930 = vunpack.c.l.b16 %v1850
        %v1931 = vunpack.c.h.b16 %v1850
        %v1932 = vunpack.c.l.b16 %v1851
        %v1933 = vunpack.c.h.b16 %v1851
        %v1934 = vunpack.c.l.b16 %v1852
        %v1935 = vunpack.c.h.b16 %v1852
        %v1936 = vunpack.c.l.b16 %v1853
        %v1937 = vunpack.c.h.b16 %v1853
        %v1938 = vunpack.c.l.b16 %v1854
        %v1939 = vunpack.c.h.b16 %v1854
        %v1940 = vunpack.c.l.b16 %v1855
        %v1941 = vunpack.c.h.b16 %v1855
        %v1942 = vunpack.c.l.b16 %v1856
        %v1943 = vunpack.c.h.b16 %v1856
        %v1944 = vunpack.c.l.b16 %v1857
        %v1945 = vunpack.c.h.b16 %v1857
        %v1946 = vunpack.c.l.b16 %v1858
        %v1947 = vunpack.c.h.b16 %v1858
        %v1948 = vunpack.c.l.b16 %v1859
        %v1949 = vunpack.c.h.b16 %v1859
        %v1950 = vunpack.c.l.b16 %v1860
        %v1951 = vunpack.c.h.b16 %v1860
        %v1952 = vunpack.c.l.b16 %v1861
        %v1953 = vunpack.c.h.b16 %v1861
        %v1954 = vunpack.c.l.b16 %v1862
        %v1955 = vunpack.c.h.b16 %v1862
        %v1956 = vunpack.c.l.b16 %v1863
        %v1957 = vunpack.c.h.b16 %v1863
        %v1958 = vunpack.c.l.b16 %v1864
        %v1959 = vunpack.c.h.b16 %v1864
        %v1960 = vunpack.c.l.b16 %v1865
        %v1961 = vunpack.c.h.b16 %v1865
        %v1962 = vunpack.c.l.b16 %v1866
        %v1963 = vunpack.c.h.b16 %v1866
        %v1964 = vunpack.c.l.b16 %v1867
        %v1965 = vunpack.c.h.b16 %v1867
        %v1966 = vunpack.c.l.b16 %v1868
        %v1967 = vunpack.c.h.b16 %v1868
        %v1968 = vunpack.c.l.b16 %v1869
        %v1969 = vunpack.c.h.b16 %v1869
        %v1970 = vunpack.c.l.b16 %v1870
        %v1971 = vunpack.c.h.b16 %v1870
        %v1972 = vunpack.c.l.b16 %v1871
        %v1973 = vunpack.c.h.b16 %v1871
        %v1974 = vunpack.c.l.b16 %v1872
        %v1975 = vunpack.c.h.b16 %v1872
        %v1976 = vunpack.c.l.b16 %v1873
        %v1977 = vunpack.c.h.b16 %v1873
        %v1978 = vunpack.c.l.b16 %v1874
        %v1979 = vunpack.c.h.b16 %v1874
        %v1980 = vunpack.c.l.b16 %v1875
        %v1981 = vunpack.c.h.b16 %v1875
        %v1982 = vunpack.c.l.b16 %v1876
        %v1983 = vunpack.c.h.b16 %v1876
        %v1984 = vunpack.c.l.b16 %v1877
        %v1985 = vunpack.c.h.b16 %v1877
        %v1986 = vpack.c.b16 %v1924, %v1922
        %v1987 = vpack.c.b16 %v1925, %v1923
        %v1988 = vpack.c.b16 %v1928, %v1926
        %v1989 = vpack.c.b16 %v1929, %v1927
        %v1990 = vpack.c.b16 %v1932, %v1930
        %v1991 = vpack.c.b16 %v1933, %v1931
        %v1992 = vpack.c.b16 %v1936, %v1934
        %v1993 = vpack.c.b16 %v1937, %v1935
        %v1994 = vpack.c.b16 %v1940, %v1938
        %v1995 = vpack.c.b16 %v1941, %v1939
        %v1996 = vpack.c.b16 %v1944, %v1942
        %v1997 = vpack.c.b16 %v1945, %v1943
        %v1998 = vpack.c.b16 %v1948, %v1946
        %v1999 = vpack.c.b16 %v1949, %v1947
        %v2000 = vpack.c.b16 %v1952, %v1950
        %v2001 = vpack.c.b16 %v1953, %v1951
        %v2002 = vpack.c.b16 %v1956, %v1954
        %v2003 = vpack.c.b16 %v1957, %v1955
        %v2004 = vpack.c.b16 %v1960, %v1958
        %v2005 = vpack.c.b16 %v1961, %v1959
        %v2006 = vpack.c.b16 %v1964, %v1962
        %v2007 = vpack.c.b16 %v1965, %v1963
        %v2008 = vpack.c.b16 %v1968, %v1966
        %v2009 = vpack.c.b16 %v1969, %v1967
        %v2010 = vpack.c.b16 %v1972, %v1970
        %v2011 = vpack.c.b16 %v1973, %v1971
        %v2012 = vpack.c.b16 %v1976, %v1974
        %v2013 = vpack.c.b16 %v1977, %v1975
        %v2014 = vpack.c.b16 %v1980, %v1978
        %v2015 = vpack.c.b16 %v1981, %v1979
        %v2016 = vpack.c.b16 %v1984, %v1982
        %v2017 = vpack.c.b16 %v1985, %v1983
        %2050 = vmatprep.subr.bf16.mxu0 %v1987
        %2051 = vmatpush1.bf16.msra.mxu0 %v1986
        %2052 = vmatprep.subr.bf16.mxu0 %v1989
        %2053 = vmatpush1.bf16.msra.mxu0 %v1988
        %2054 = vmatprep.subr.bf16.mxu0 %v1991
        %2055 = vmatpush1.bf16.msra.mxu0 %v1990
        %2056 = vmatprep.subr.bf16.mxu0 %v1993
        %2057 = vmatpush1.bf16.msra.mxu0 %v1992
        %2058 = vmatprep.subr.bf16.mxu0 %v1995
        %2059 = vmatpush1.bf16.msra.mxu0 %v1994
        %2060 = vmatprep.subr.bf16.mxu0 %v1997
        %2061 = vmatpush1.bf16.msra.mxu0 %v1996
        %2062 = vmatprep.subr.bf16.mxu0 %v1999
        %2063 = vmatpush1.bf16.msra.mxu0 %v1998
        %2064 = vmatprep.subr.bf16.mxu0 %v2001
        %2065 = vmatpush1.bf16.msra.mxu0 %v2000
        %2066 = vmatprep.subr.bf16.mxu0 %v2003
        %2067 = vmatpush1.bf16.msra.mxu0 %v2002
        %2068 = vmatprep.subr.bf16.mxu0 %v2005
        %2069 = vmatpush1.bf16.msra.mxu0 %v2004
        %2070 = vmatprep.subr.bf16.mxu0 %v2007
        %2071 = vmatpush1.bf16.msra.mxu0 %v2006
        %2072 = vmatprep.subr.bf16.mxu0 %v2009
        %2073 = vmatpush1.bf16.msra.mxu0 %v2008
        %2074 = vmatprep.subr.bf16.mxu0 %v2011
        %2075 = vmatpush1.bf16.msra.mxu0 %v2010
        %2076 = vmatprep.subr.bf16.mxu0 %v2013
        %2077 = vmatpush1.bf16.msra.mxu0 %v2012
        %2078 = vmatprep.subr.bf16.mxu0 %v2015
        %2079 = vmatpush1.bf16.msra.mxu0 %v2014
        %2080 = vmatprep.subr.bf16.mxu0 %v2017
        %2081 = vmatpush1.bf16.msra.mxu0 %v2016
        %2082 = vmatprep.mubr.bf16.mxu0 %v1783
        %2083 = vmatmul.mubr.bf16.gmra.mrb[0].mxu0 %v1782
        %v2084 = vpop.f32.mrb[0].mxu0
        %v2085 = vadd.f32 %v1883, %v2084
        %v2086 = vpop.f32.mrb[0].mxu0
        %v2087 = vadd.f32 %v1887, %v2086
        %v2088 = vpop.f32.mrb[0].mxu0
        %v2089 = vadd.f32 %v1883, %v2088
        %v2090 = vpop.f32.mrb[0].mxu0
        %v2091 = vadd.f32 %v1887, %v2090
        %2092 = vmatprep.mubr.bf16.mxu0 %v1785
        %2093 = vmatmul.mubr.bf16.gmra.mrb[0].mxu0 %v1784
        %v2094 = vpop.f32.mrb[0].mxu0
        %v2095 = vadd.f32 %v1883, %v2094
        %v2096 = vpop.f32.mrb[0].mxu0
        %v2097 = vadd.f32 %v1887, %v2096
        %v2098 = vpop.f32.mrb[0].mxu0
        %v2099 = vadd.f32 %v1883, %v2098
        %v2100 = vpop.f32.mrb[0].mxu0
        %v2101 = vadd.f32 %v1887, %v2100
        %2102 = vmatprep.mubr.bf16.mxu0 %v1787
        %2103 = vmatmul.mubr.bf16.gmra.mrb[0].mxu0 %v1786
        %v2104 = vpop.f32.mrb[0].mxu0
        %v2105 = vadd.f32 %v1883, %v2104
        %v2106 = vpop.f32.mrb[0].mxu0
        %v2107 = vadd.f32 %v1887, %v2106
        %v2108 = vpop.f32.mrb[0].mxu0
        %v2109 = vadd.f32 %v1883, %v2108
        %v2110 = vpop.f32.mrb[0].mxu0
        %v2111 = vadd.f32 %v1887, %v2110
        %2112 = vmatprep.mubr.bf16.mxu0 %v1789
        %2113 = vmatmul.mubr.bf16.gmra.mrb[0].mxu0 %v1788
        %v2114 = vpop.f32.mrb[0].mxu0
        %v2115 = vadd.f32 %v1883, %v2114
        %v2116 = vpop.f32.mrb[0].mxu0
        %v2117 = vadd.f32 %v1887, %v2116
        %v2118 = vpop.f32.mrb[0].mxu0
        %v2119 = vadd.f32 %v1883, %v2118
        %v2120 = vpop.f32.mrb[0].mxu0
        %v2121 = vadd.f32 %v1887, %v2120
        %2122 = vmatprep.mubr.bf16.mxu0 %v1791
        %2123 = vmatmul.mubr.bf16.gmra.mrb[0].mxu0 %v1790
        %v2124 = vpop.f32.mrb[0].mxu0
        %v2125 = vadd.f32 %v1883, %v2124
        %v2126 = vpop.f32.mrb[0].mxu0
        %v2127 = vadd.f32 %v1887, %v2126
        %v2128 = vpop.f32.mrb[0].mxu0
        %v2129 = vadd.f32 %v1883, %v2128
        %v2130 = vpop.f32.mrb[0].mxu0
        %v2131 = vadd.f32 %v1887, %v2130
        %2132 = vmatprep.mubr.bf16.mxu0 %v1793
        %2133 = vmatmul.mubr.bf16.gmra.mrb[0].mxu0 %v1792
        %v2134 = vpop.f32.mrb[0].mxu0
        %v2135 = vadd.f32 %v1883, %v2134
        %v2136 = vpop.f32.mrb[0].mxu0
        %v2137 = vadd.f32 %v1887, %v2136
        %v2138 = vpop.f32.mrb[0].mxu0
        %v2139 = vadd.f32 %v1883, %v2138
        %v2140 = vpop.f32.mrb[0].mxu0
        %v2141 = vadd.f32 %v1887, %v2140
        %2142 = vmatprep.mubr.bf16.mxu0 %v1795
        %2143 = vmatmul.mubr.bf16.gmra.mrb[0].mxu0 %v1794
        %v2144 = vpop.f32.mrb[0].mxu0
        %v2145 = vadd.f32 %v1883, %v2144
        %v2146 = vpop.f32.mrb[0].mxu0
        %v2147 = vadd.f32 %v1887, %v2146
        %v2148 = vpop.f32.mrb[0].mxu0
        %v2149 = vadd.f32 %v1883, %v2148
        %v2150 = vpop.f32.mrb[0].mxu0
        %v2151 = vadd.f32 %v1887, %v2150
        %2152 = vmatprep.mubr.bf16.mxu0 %v1797
        %2153 = vmatmul.mubr.bf16.gmra.mrb[0].mxu0 %v1796
        %v2154 = vpop.f32.mrb[0].mxu0
        %v2155 = vadd.f32 %v1883, %v2154
        %v2156 = vpop.f32.mrb[0].mxu0
        %v2157 = vadd.f32 %v1887, %v2156
        %v2158 = vpop.f32.mrb[0].mxu0
        %v2159 = vadd.f32 %v1883, %v2158
        %v2160 = vpop.f32.mrb[0].mxu0
        %v2161 = vadd.f32 %v1887, %v2160
        %2162 = vmatprep.mubr.bf16.mxu0 %v1799
        %2163 = vmatmul.mubr.bf16.gmra.mrb[0].mxu0 %v1798
        %v2164 = vpop.f32.mrb[0].mxu0
        %v2165 = vadd.f32 %v1883, %v2164
        %v2166 = vpop.f32.mrb[0].mxu0
        %v2167 = vadd.f32 %v1887, %v2166
        %v2168 = vpop.f32.mrb[0].mxu0
        %v2169 = vadd.f32 %v1883, %v2168
        %v2170 = vpop.f32.mrb[0].mxu0
        %v2171 = vadd.f32 %v1887, %v2170
        %2172 = vmatprep.mubr.bf16.mxu0 %v1801
        %2173 = vmatmul.mubr.bf16.gmra.mrb[0].mxu0 %v1800
        %v2174 = vpop.f32.mrb[0].mxu0
        %v2175 = vadd.f32 %v1883, %v2174
        %v2176 = vpop.f32.mrb[0].mxu0
        %v2177 = vadd.f32 %v1887, %v2176
        %v2178 = vpop.f32.mrb[0].mxu0
        %v2179 = vadd.f32 %v1883, %v2178
        %v2180 = vpop.f32.mrb[0].mxu0
        %v2181 = vadd.f32 %v1887, %v2180
        %2182 = vmatprep.mubr.bf16.mxu0 %v1803
        %2183 = vmatmul.mubr.bf16.gmra.mrb[0].mxu0 %v1802
        %v2184 = vpop.f32.mrb[0].mxu0
        %v2185 = vadd.f32 %v1883, %v2184
        %v2186 = vpop.f32.mrb[0].mxu0
        %v2187 = vadd.f32 %v1887, %v2186
        %v2188 = vpop.f32.mrb[0].mxu0
        %v2189 = vadd.f32 %v1883, %v2188
        %v2190 = vpop.f32.mrb[0].mxu0
        %v2191 = vadd.f32 %v1887, %v2190
        %2192 = vmatprep.mubr.bf16.mxu0 %v1805
        %2193 = vmatmul.mubr.bf16.gmra.mrb[0].mxu0 %v1804
        %v2194 = vpop.f32.mrb[0].mxu0
        %v2195 = vadd.f32 %v1883, %v2194
        %v2196 = vpop.f32.mrb[0].mxu0
        %v2197 = vadd.f32 %v1887, %v2196
        %v2198 = vpop.f32.mrb[0].mxu0
        %v2199 = vadd.f32 %v1883, %v2198
        %v2200 = vpop.f32.mrb[0].mxu0
        %v2201 = vadd.f32 %v1887, %v2200
        %2202 = vmatprep.mubr.bf16.mxu0 %v1807
        %2203 = vmatmul.mubr.bf16.gmra.mrb[0].mxu0 %v1806
        %v2204 = vpop.f32.mrb[0].mxu0
        %v2205 = vadd.f32 %v1883, %v2204
        %v2206 = vpop.f32.mrb[0].mxu0
        %v2207 = vadd.f32 %v1887, %v2206
        %v2208 = vpop.f32.mrb[0].mxu0
        %v2209 = vadd.f32 %v1883, %v2208
        %v2210 = vpop.f32.mrb[0].mxu0
        %v2211 = vadd.f32 %v1887, %v2210
        %2212 = vmatprep.mubr.bf16.mxu0 %v1809
        %2213 = vmatmul.mubr.bf16.gmra.mrb[0].mxu0 %v1808
        %v2214 = vpop.f32.mrb[0].mxu0
        %v2215 = vadd.f32 %v1883, %v2214
        %v2216 = vpop.f32.mrb[0].mxu0
        %v2217 = vadd.f32 %v1887, %v2216
        %v2218 = vpop.f32.mrb[0].mxu0
        %v2219 = vadd.f32 %v1883, %v2218
        %v2220 = vpop.f32.mrb[0].mxu0
        %v2221 = vadd.f32 %v1887, %v2220
        %2222 = vmatprep.mubr.bf16.mxu0 %v1811
        %2223 = vmatmul.mubr.bf16.gmra.mrb[0].mxu0 %v1810
        %v2224 = vpop.f32.mrb[0].mxu0
        %v2225 = vadd.f32 %v1883, %v2224
        %v2226 = vpop.f32.mrb[0].mxu0
        %v2227 = vadd.f32 %v1887, %v2226
        %v2228 = vpop.f32.mrb[0].mxu0
        %v2229 = vadd.f32 %v1883, %v2228
        %v2230 = vpop.f32.mrb[0].mxu0
        %v2231 = vadd.f32 %v1887, %v2230
        %2232 = vmatprep.mubr.bf16.mxu0 %v1813
        %2233 = vmatmul.mubr.bf16.gmra.mrb[0].mxu0 %v1812
        %v2234 = vpop.f32.mrb[0].mxu0
        %v2235 = vadd.f32 %v1883, %v2234
        %v2236 = vpop.f32.mrb[0].mxu0
        %v2237 = vadd.f32 %v1887, %v2236
        %v2238 = vpop.f32.mrb[0].mxu0
        %v2239 = vadd.f32 %v1883, %v2238
        %v2240 = vpop.f32.mrb[0].mxu0
        %v2241 = vadd.f32 %v1887, %v2240
        %2242 = vmatprep.mubr.bf16.mxu0 %v1815
        %2243 = vmatmul.mubr.bf16.gmra.mrb[0].mxu0 %v1814
        %v2244 = vpop.f32.mrb[0].mxu0
        %v2245 = vadd.f32 %v1883, %v2244
        %v2246 = vpop.f32.mrb[0].mxu0
        %v2247 = vadd.f32 %v1887, %v2246
        %v2248 = vpop.f32.mrb[0].mxu0
        %v2249 = vadd.f32 %v1883, %v2248
        %v2250 = vpop.f32.mrb[0].mxu0
        %v2251 = vadd.f32 %v1887, %v2250
        %2252 = vmatprep.mubr.bf16.mxu0 %v1817
        %2253 = vmatmul.mubr.bf16.gmra.mrb[0].mxu0 %v1816
        %v2254 = vpop.f32.mrb[0].mxu0
        %v2255 = vadd.f32 %v1883, %v2254
        %v2256 = vpop.f32.mrb[0].mxu0
        %v2257 = vadd.f32 %v1887, %v2256
        %v2258 = vpop.f32.mrb[0].mxu0
        %v2259 = vadd.f32 %v1883, %v2258
        %v2260 = vpop.f32.mrb[0].mxu0
        %v2261 = vadd.f32 %v1887, %v2260
        %2262 = vmatprep.mubr.bf16.mxu0 %v1819
        %2263 = vmatmul.mubr.bf16.gmra.mrb[0].mxu0 %v1818
        %v2264 = vpop.f32.mrb[0].mxu0
        %v2265 = vadd.f32 %v1883, %v2264
        %v2266 = vpop.f32.mrb[0].mxu0
        %v2267 = vadd.f32 %v1887, %v2266
        %v2268 = vpop.f32.mrb[0].mxu0
        %v2269 = vadd.f32 %v1883, %v2268
        %v2270 = vpop.f32.mrb[0].mxu0
        %v2271 = vadd.f32 %v1887, %v2270
        %2272 = vmatprep.mubr.bf16.mxu0 %v1821
        %2273 = vmatmul.mubr.bf16.gmra.mrb[0].mxu0 %v1820
        %v2274 = vpop.f32.mrb[0].mxu0
        %v2275 = vadd.f32 %v1883, %v2274
        %v2276 = vpop.f32.mrb[0].mxu0
        %v2277 = vadd.f32 %v1887, %v2276
        %v2278 = vpop.f32.mrb[0].mxu0
        %v2279 = vadd.f32 %v1883, %v2278
        %v2280 = vpop.f32.mrb[0].mxu0
        %v2281 = vadd.f32 %v1887, %v2280
        %2282 = vmatprep.mubr.bf16.mxu0 %v1823
        %2283 = vmatmul.mubr.bf16.gmra.mrb[0].mxu0 %v1822
        %v2284 = vpop.f32.mrb[0].mxu0
        %v2285 = vadd.f32 %v1883, %v2284
        %v2286 = vpop.f32.mrb[0].mxu0
        %v2287 = vadd.f32 %v1887, %v2286
        %v2288 = vpop.f32.mrb[0].mxu0
        %v2289 = vadd.f32 %v1883, %v2288
        %v2290 = vpop.f32.mrb[0].mxu0
        %v2291 = vadd.f32 %v1887, %v2290
        %2292 = vmatprep.mubr.bf16.mxu0 %v1825
        %2293 = vmatmul.mubr.bf16.gmra.mrb[0].mxu0 %v1824
        %v2294 = vpop.f32.mrb[0].mxu0
        %v2295 = vadd.f32 %v1883, %v2294
        %v2296 = vpop.f32.mrb[0].mxu0
        %v2297 = vadd.f32 %v1887, %v2296
        %v2298 = vpop.f32.mrb[0].mxu0
        %v2299 = vadd.f32 %v1883, %v2298
        %v2300 = vpop.f32.mrb[0].mxu0
        %v2301 = vadd.f32 %v1887, %v2300
        %2302 = vmatprep.mubr.bf16.mxu0 %v1827
        %2303 = vmatmul.mubr.bf16.gmra.mrb[0].mxu0 %v1826
        %v2304 = vpop.f32.mrb[0].mxu0
        %v2305 = vadd.f32 %v1883, %v2304
        %v2306 = vpop.f32.mrb[0].mxu0
        %v2307 = vadd.f32 %v1887, %v2306
        %v2308 = vpop.f32.mrb[0].mxu0
        %v2309 = vadd.f32 %v1883, %v2308
        %v2310 = vpop.f32.mrb[0].mxu0
        %v2311 = vadd.f32 %v1887, %v2310
        %2312 = vmatprep.mubr.bf16.mxu0 %v1829
        %2313 = vmatmul.mubr.bf16.gmra.mrb[0].mxu0 %v1828
        %v2314 = vpop.f32.mrb[0].mxu0
        %v2315 = vadd.f32 %v1883, %v2314
        %v2316 = vpop.f32.mrb[0].mxu0
        %v2317 = vadd.f32 %v1887, %v2316
        %v2318 = vpop.f32.mrb[0].mxu0
        %v2319 = vadd.f32 %v1883, %v2318
        %v2320 = vpop.f32.mrb[0].mxu0
        %v2321 = vadd.f32 %v1887, %v2320
        %2322 = vmatprep.mubr.bf16.mxu0 %v1831
        %2323 = vmatmul.mubr.bf16.gmra.mrb[0].mxu0 %v1830
        %v2324 = vpop.f32.mrb[0].mxu0
        %v2325 = vadd.f32 %v1883, %v2324
        %v2326 = vpop.f32.mrb[0].mxu0
        %v2327 = vadd.f32 %v1887, %v2326
        %v2328 = vpop.f32.mrb[0].mxu0
        %v2329 = vadd.f32 %v1883, %v2328
        %v2330 = vpop.f32.mrb[0].mxu0
        %v2331 = vadd.f32 %v1887, %v2330
        %2332 = vmatprep.mubr.bf16.mxu0 %v1833
        %2333 = vmatmul.mubr.bf16.gmra.mrb[0].mxu0 %v1832
        %v2334 = vpop.f32.mrb[0].mxu0
        %v2335 = vadd.f32 %v1883, %v2334
        %v2336 = vpop.f32.mrb[0].mxu0
        %v2337 = vadd.f32 %v1887, %v2336
        %v2338 = vpop.f32.mrb[0].mxu0
        %v2339 = vadd.f32 %v1883, %v2338
        %v2340 = vpop.f32.mrb[0].mxu0
        %v2341 = vadd.f32 %v1887, %v2340
        %2342 = vmatprep.mubr.bf16.mxu0 %v1835
        %2343 = vmatmul.mubr.bf16.gmra.mrb[0].mxu0 %v1834
        %v2344 = vpop.f32.mrb[0].mxu0
        %v2345 = vadd.f32 %v1883, %v2344
        %v2346 = vpop.f32.mrb[0].mxu0
        %v2347 = vadd.f32 %v1887, %v2346
        %v2348 = vpop.f32.mrb[0].mxu0
        %v2349 = vadd.f32 %v1883, %v2348
        %v2350 = vpop.f32.mrb[0].mxu0
        %v2351 = vadd.f32 %v1887, %v2350
        %2352 = vmatprep.mubr.bf16.mxu0 %v1837
        %2353 = vmatmul.mubr.bf16.gmra.mrb[0].mxu0 %v1836
        %v2354 = vpop.f32.mrb[0].mxu0
        %v2355 = vadd.f32 %v1883, %v2354
        %v2356 = vpop.f32.mrb[0].mxu0
        %v2357 = vadd.f32 %v1887, %v2356
        %v2358 = vpop.f32.mrb[0].mxu0
        %v2359 = vadd.f32 %v1883, %v2358
        %v2360 = vpop.f32.mrb[0].mxu0
        %v2361 = vadd.f32 %v1887, %v2360
        %2362 = vmatprep.mubr.bf16.mxu0 %v1839
        %2363 = vmatmul.mubr.bf16.gmra.mrb[0].mxu0 %v1838
        %v2364 = vpop.f32.mrb[0].mxu0
        %v2365 = vadd.f32 %v1883, %v2364
        %v2366 = vpop.f32.mrb[0].mxu0
        %v2367 = vadd.f32 %v1887, %v2366
        %v2368 = vpop.f32.mrb[0].mxu0
        %v2369 = vadd.f32 %v1883, %v2368
        %v2370 = vpop.f32.mrb[0].mxu0
        %v2371 = vadd.f32 %v1887, %v2370
        %2372 = vmatprep.mubr.bf16.mxu0 %v1841
        %2373 = vmatmul.mubr.bf16.gmra.mrb[0].mxu0 %v1840
        %v2374 = vpop.f32.mrb[0].mxu0
        %v2375 = vadd.f32 %v1883, %v2374
        %v2376 = vpop.f32.mrb[0].mxu0
        %v2377 = vadd.f32 %v1887, %v2376
        %v2378 = vpop.f32.mrb[0].mxu0
        %v2379 = vadd.f32 %v1883, %v2378
        %v2380 = vpop.f32.mrb[0].mxu0
        %v2381 = vadd.f32 %v1887, %v2380
        %2382 = vmatprep.mubr.bf16.mxu0 %v1843
        %2383 = vmatmul.mubr.bf16.gmra.mrb[0].mxu0 %v1842
        %v2384 = vpop.f32.mrb[0].mxu0
        %v2385 = vadd.f32 %v1883, %v2384
        %v2386 = vpop.f32.mrb[0].mxu0
        %v2387 = vadd.f32 %v1887, %v2386
        %v2388 = vpop.f32.mrb[0].mxu0
        %v2389 = vadd.f32 %v1883, %v2388
        %v2390 = vpop.f32.mrb[0].mxu0
        %v2391 = vadd.f32 %v1887, %v2390
        %2392 = vmatprep.mubr.bf16.mxu0 %v1845
        %2393 = vmatmul.mubr.bf16.gmra.mrb[0].mxu0 %v1844
        %v2394 = vpop.f32.mrb[0].mxu0
        %v2395 = vadd.f32 %v1883, %v2394
        %v2396 = vpop.f32.mrb[0].mxu0
        %v2397 = vadd.f32 %v1887, %v2396
        %v2398 = vpop.f32.mrb[0].mxu0
        %v2399 = vadd.f32 %v1883, %v2398
        %v2400 = vpop.f32.mrb[0].mxu0
        %v2401 = vadd.f32 %v1887, %v2400
        %2402 = vdwg.mxu0
        %v2403 = vmax.f32 %v2085, 0.0
        %v2404 = vmax.f32 %v2087, 0.0
        %v2405 = vmax.f32 %v2089, 0.0
        %v2406 = vmax.f32 %v2091, 0.0
        %v2407 = vmax.f32 %v2095, 0.0
        %v2408 = vmax.f32 %v2097, 0.0
        %v2409 = vmax.f32 %v2099, 0.0
        %v2410 = vmax.f32 %v2101, 0.0
        %v2411 = vmax.f32 %v2105, 0.0
        %v2412 = vmax.f32 %v2107, 0.0
        %v2413 = vmax.f32 %v2109, 0.0
        %v2414 = vmax.f32 %v2111, 0.0
        %v2415 = vmax.f32 %v2115, 0.0
        %v2416 = vmax.f32 %v2117, 0.0
        %v2417 = vmax.f32 %v2119, 0.0
        %v2418 = vmax.f32 %v2121, 0.0
        %v2419 = vmax.f32 %v2125, 0.0
        %v2420 = vmax.f32 %v2127, 0.0
        %v2421 = vmax.f32 %v2129, 0.0
        %v2422 = vmax.f32 %v2131, 0.0
        %v2423 = vmax.f32 %v2135, 0.0
        %v2424 = vmax.f32 %v2137, 0.0
        %v2425 = vmax.f32 %v2139, 0.0
        %v2426 = vmax.f32 %v2141, 0.0
        %v2427 = vmax.f32 %v2145, 0.0
        %v2428 = vmax.f32 %v2147, 0.0
        %v2429 = vmax.f32 %v2149, 0.0
        %v2430 = vmax.f32 %v2151, 0.0
        %v2431 = vmax.f32 %v2155, 0.0
        %v2432 = vmax.f32 %v2157, 0.0
        %v2433 = vmax.f32 %v2159, 0.0
        %v2434 = vmax.f32 %v2161, 0.0
        %v2435 = vmax.f32 %v2165, 0.0
        %v2436 = vmax.f32 %v2167, 0.0
        %v2437 = vmax.f32 %v2169, 0.0
        %v2438 = vmax.f32 %v2171, 0.0
        %v2439 = vmax.f32 %v2175, 0.0
        %v2440 = vmax.f32 %v2177, 0.0
        %v2441 = vmax.f32 %v2179, 0.0
        %v2442 = vmax.f32 %v2181, 0.0
        %v2443 = vmax.f32 %v2185, 0.0
        %v2444 = vmax.f32 %v2187, 0.0
        %v2445 = vmax.f32 %v2189, 0.0
        %v2446 = vmax.f32 %v2191, 0.0
        %v2447 = vmax.f32 %v2195, 0.0
        %v2448 = vmax.f32 %v2197, 0.0
        %v2449 = vmax.f32 %v2199, 0.0
        %v2450 = vmax.f32 %v2201, 0.0
        %v2451 = vmax.f32 %v2205, 0.0
        %v2452 = vmax.f32 %v2207, 0.0
        %v2453 = vmax.f32 %v2209, 0.0
        %v2454 = vmax.f32 %v2211, 0.0
        %v2455 = vmax.f32 %v2215, 0.0
        %v2456 = vmax.f32 %v2217, 0.0
        %v2457 = vmax.f32 %v2219, 0.0
        %v2458 = vmax.f32 %v2221, 0.0
        %v2459 = vmax.f32 %v2225, 0.0
        %v2460 = vmax.f32 %v2227, 0.0
        %v2461 = vmax.f32 %v2229, 0.0
        %v2462 = vmax.f32 %v2231, 0.0
        %v2463 = vmax.f32 %v2235, 0.0
        %v2464 = vmax.f32 %v2237, 0.0
        %v2465 = vmax.f32 %v2239, 0.0
        %v2466 = vmax.f32 %v2241, 0.0
        %v2467 = vmax.f32 %v2245, 0.0
        %v2468 = vmax.f32 %v2247, 0.0
        %v2469 = vmax.f32 %v2249, 0.0
        %v2470 = vmax.f32 %v2251, 0.0
        %v2471 = vmax.f32 %v2255, 0.0
        %v2472 = vmax.f32 %v2257, 0.0
        %v2473 = vmax.f32 %v2259, 0.0
        %v2474 = vmax.f32 %v2261, 0.0
        %v2475 = vmax.f32 %v2265, 0.0
        %v2476 = vmax.f32 %v2267, 0.0
        %v2477 = vmax.f32 %v2269, 0.0
        %v2478 = vmax.f32 %v2271, 0.0
        %v2479 = vmax.f32 %v2275, 0.0
        %v2480 = vmax.f32 %v2277, 0.0
        %v2481 = vmax.f32 %v2279, 0.0
        %v2482 = vmax.f32 %v2281, 0.0
        %v2483 = vmax.f32 %v2285, 0.0
        %v2484 = vmax.f32 %v2287, 0.0
        %v2485 = vmax.f32 %v2289, 0.0
        %v2486 = vmax.f32 %v2291, 0.0
        %v2487 = vmax.f32 %v2295, 0.0
        %v2488 = vmax.f32 %v2297, 0.0
        %v2489 = vmax.f32 %v2299, 0.0
        %v2490 = vmax.f32 %v2301, 0.0
        %v2491 = vmax.f32 %v2305, 0.0
        %v2492 = vmax.f32 %v2307, 0.0
        %v2493 = vmax.f32 %v2309, 0.0
        %v2494 = vmax.f32 %v2311, 0.0
        %v2495 = vmax.f32 %v2315, 0.0
        %v2496 = vmax.f32 %v2317, 0.0
        %v2497 = vmax.f32 %v2319, 0.0
        %v2498 = vmax.f32 %v2321, 0.0
        %v2499 = vmax.f32 %v2325, 0.0
        %v2500 = vmax.f32 %v2327, 0.0
        %v2501 = vmax.f32 %v2329, 0.0
        %v2502 = vmax.f32 %v2331, 0.0
        %v2503 = vmax.f32 %v2335, 0.0
        %v2504 = vmax.f32 %v2337, 0.0
        %v2505 = vmax.f32 %v2339, 0.0
        %v2506 = vmax.f32 %v2341, 0.0
        %v2507 = vmax.f32 %v2345, 0.0
        %v2508 = vmax.f32 %v2347, 0.0
        %v2509 = vmax.f32 %v2349, 0.0
        %v2510 = vmax.f32 %v2351, 0.0
        %v2511 = vmax.f32 %v2355, 0.0
        %v2512 = vmax.f32 %v2357, 0.0
        %v2513 = vmax.f32 %v2359, 0.0
        %v2514 = vmax.f32 %v2361, 0.0
        %v2515 = vmax.f32 %v2365, 0.0
        %v2516 = vmax.f32 %v2367, 0.0
        %v2517 = vmax.f32 %v2369, 0.0
        %v2518 = vmax.f32 %v2371, 0.0
        %v2519 = vmax.f32 %v2375, 0.0
        %v2520 = vmax.f32 %v2377, 0.0
        %v2521 = vmax.f32 %v2379, 0.0
        %v2522 = vmax.f32 %v2381, 0.0
        %v2523 = vmax.f32 %v2385, 0.0
        %v2524 = vmax.f32 %v2387, 0.0
        %v2525 = vmax.f32 %v2389, 0.0
        %v2526 = vmax.f32 %v2391, 0.0
        %v2527 = vmax.f32 %v2395, 0.0
        %v2528 = vmax.f32 %v2397, 0.0
        %v2529 = vmax.f32 %v2399, 0.0
        %v2530 = vmax.f32 %v2401, 0.0
        %v2531 = vpack.c.bf16 %v2405, %v2403
        %v2532 = vpack.c.bf16 %v2406, %v2404
        %v2533 = vpack.c.bf16 %v2409, %v2407
        %v2534 = vpack.c.bf16 %v2410, %v2408
        %v2535 = vpack.c.bf16 %v2413, %v2411
        %v2536 = vpack.c.bf16 %v2414, %v2412
        %v2537 = vpack.c.bf16 %v2417, %v2415
        %v2538 = vpack.c.bf16 %v2418, %v2416
        %v2539 = vpack.c.bf16 %v2421, %v2419
        %v2540 = vpack.c.bf16 %v2422, %v2420
        %v2541 = vpack.c.bf16 %v2425, %v2423
        %v2542 = vpack.c.bf16 %v2426, %v2424
        %v2543 = vpack.c.bf16 %v2429, %v2427
        %v2544 = vpack.c.bf16 %v2430, %v2428
        %v2545 = vpack.c.bf16 %v2433, %v2431
        %v2546 = vpack.c.bf16 %v2434, %v2432
        %v2547 = vpack.c.bf16 %v2437, %v2435
        %v2548 = vpack.c.bf16 %v2438, %v2436
        %v2549 = vpack.c.bf16 %v2441, %v2439
        %v2550 = vpack.c.bf16 %v2442, %v2440
        %v2551 = vpack.c.bf16 %v2445, %v2443
        %v2552 = vpack.c.bf16 %v2446, %v2444
        %v2553 = vpack.c.bf16 %v2449, %v2447
        %v2554 = vpack.c.bf16 %v2450, %v2448
        %v2555 = vpack.c.bf16 %v2453, %v2451
        %v2556 = vpack.c.bf16 %v2454, %v2452
        %v2557 = vpack.c.bf16 %v2457, %v2455
        %v2558 = vpack.c.bf16 %v2458, %v2456
        %v2559 = vpack.c.bf16 %v2461, %v2459
        %v2560 = vpack.c.bf16 %v2462, %v2460
        %v2561 = vpack.c.bf16 %v2465, %v2463
        %v2562 = vpack.c.bf16 %v2466, %v2464
        %v2563 = vpack.c.bf16 %v2469, %v2467
        %v2564 = vpack.c.bf16 %v2470, %v2468
        %v2565 = vpack.c.bf16 %v2473, %v2471
        %v2566 = vpack.c.bf16 %v2474, %v2472
        %v2567 = vpack.c.bf16 %v2477, %v2475
        %v2568 = vpack.c.bf16 %v2478, %v2476
        %v2569 = vpack.c.bf16 %v2481, %v2479
        %v2570 = vpack.c.bf16 %v2482, %v2480
        %v2571 = vpack.c.bf16 %v2485, %v2483
        %v2572 = vpack.c.bf16 %v2486, %v2484
        %v2573 = vpack.c.bf16 %v2489, %v2487
        %v2574 = vpack.c.bf16 %v2490, %v2488
        %v2575 = vpack.c.bf16 %v2493, %v2491
        %v2576 = vpack.c.bf16 %v2494, %v2492
        %v2577 = vpack.c.bf16 %v2497, %v2495
        %v2578 = vpack.c.bf16 %v2498, %v2496
        %v2579 = vpack.c.bf16 %v2501, %v2499
        %v2580 = vpack.c.bf16 %v2502, %v2500
        %v2581 = vpack.c.bf16 %v2505, %v2503
        %v2582 = vpack.c.bf16 %v2506, %v2504
        %v2583 = vpack.c.bf16 %v2509, %v2507
        %v2584 = vpack.c.bf16 %v2510, %v2508
        %v2585 = vpack.c.bf16 %v2513, %v2511
        %v2586 = vpack.c.bf16 %v2514, %v2512
        %v2587 = vpack.c.bf16 %v2517, %v2515
        %v2588 = vpack.c.bf16 %v2518, %v2516
        %v2589 = vpack.c.bf16 %v2521, %v2519
        %v2590 = vpack.c.bf16 %v2522, %v2520
        %v2591 = vpack.c.bf16 %v2525, %v2523
        %v2592 = vpack.c.bf16 %v2526, %v2524
        %v2593 = vpack.c.bf16 %v2529, %v2527
        %v2594 = vpack.c.bf16 %v2530, %v2528
        %v2595 = vld [vmem:[%s7] sm:$0xf]
        %v2596 = vld [vmem:[%s7 + $0x4] sm:$0xf]
        %v2597 = vld [vmem:[%s7 + $0x8] sm:$0xf]
        %v2598 = vld [vmem:[%s7 + $0xc] sm:$0xf]
        %v2599 = vld [vmem:[%s7 + $0x10] sm:$0xf]
        %v2600 = vld [vmem:[%s7 + $0x14] sm:$0xf]
        %v2601 = vld [vmem:[%s7 + $0x18] sm:$0xf]
        %v2602 = vld [vmem:[%s7 + $0x1c] sm:$0xf]
        %v2603 = vld [vmem:[%s7 + $0x20] sm:$0xf]
        %v2604 = vld [vmem:[%s7 + $0x24] sm:$0xf]
        %v2605 = vld [vmem:[%s7 + $0x28] sm:$0xf]
        %v2606 = vld [vmem:[%s7 + $0x2c] sm:$0xf]
        %v2607 = vld [vmem:[%s7 + $0x30] sm:$0xf]
        %v2608 = vld [vmem:[%s7 + $0x34] sm:$0xf]
        %v2609 = vld [vmem:[%s7 + $0x38] sm:$0xf]
        %v2610 = vld [vmem:[%s7 + $0x3c] sm:$0xf]
        %v2611 = vld [vmem:[%s7 + $0x40] sm:$0xf]
        %v2612 = vld [vmem:[%s7 + $0x44] sm:$0xf]
        %v2613 = vld [vmem:[%s7 + $0x48] sm:$0xf]
        %v2614 = vld [vmem:[%s7 + $0x4c] sm:$0xf]
        %v2615 = vld [vmem:[%s7 + $0x50] sm:$0xf]
        %v2616 = vld [vmem:[%s7 + $0x54] sm:$0xf]
        %v2617 = vld [vmem:[%s7 + $0x58] sm:$0xf]
        %v2618 = vld [vmem:[%s7 + $0x5c] sm:$0xf]
        %v2619 = vld [vmem:[%s7 + $0x60] sm:$0xf]
        %v2620 = vld [vmem:[%s7 + $0x64] sm:$0xf]
        %v2621 = vld [vmem:[%s7 + $0x68] sm:$0xf]
        %v2622 = vld [vmem:[%s7 + $0x6c] sm:$0xf]
        %v2623 = vld [vmem:[%s7 + $0x70] sm:$0xf]
        %v2624 = vld [vmem:[%s7 + $0x74] sm:$0xf]
        %v2625 = vld [vmem:[%s7 + $0x78] sm:$0xf]
        %v2626 = vld [vmem:[%s7 + $0x7c] sm:$0xf]
        %v2627 = vld [vmem:[%s8] sm:$0x1]
        %v2629 = vlaneseq
        %v2630 = vshrl.u32 %v2629, 7
        %v2631 = vsub.s32 0, %v2630
        %v2632 = vrot.slane %v2627, %v2631
        %v2666 = vunpack.c.l.b16 %v2595
        %v2667 = vunpack.c.l.b16 %v2596
        %v2668 = vunpack.c.l.b16 %v2597
        %v2669 = vunpack.c.l.b16 %v2598
        %v2670 = vunpack.c.l.b16 %v2599
        %v2671 = vunpack.c.l.b16 %v2600
        %v2672 = vunpack.c.l.b16 %v2601
        %v2673 = vunpack.c.l.b16 %v2602
        %v2674 = vunpack.c.l.b16 %v2603
        %v2675 = vunpack.c.l.b16 %v2604
        %v2676 = vunpack.c.l.b16 %v2605
        %v2677 = vunpack.c.l.b16 %v2606
        %v2678 = vunpack.c.l.b16 %v2607
        %v2679 = vunpack.c.l.b16 %v2608
        %v2680 = vunpack.c.l.b16 %v2609
        %v2681 = vunpack.c.l.b16 %v2610
        %v2682 = vunpack.c.l.b16 %v2611
        %v2683 = vunpack.c.l.b16 %v2612
        %v2684 = vunpack.c.l.b16 %v2613
        %v2685 = vunpack.c.l.b16 %v2614
        %v2686 = vunpack.c.l.b16 %v2615
        %v2687 = vunpack.c.l.b16 %v2616
        %v2688 = vunpack.c.l.b16 %v2617
        %v2689 = vunpack.c.l.b16 %v2618
        %v2690 = vunpack.c.l.b16 %v2619
        %v2691 = vunpack.c.l.b16 %v2620
        %v2692 = vunpack.c.l.b16 %v2621
        %v2693 = vunpack.c.l.b16 %v2622
        %v2694 = vunpack.c.l.b16 %v2623
        %v2695 = vunpack.c.l.b16 %v2624
        %v2696 = vunpack.c.l.b16 %v2625
        %v2697 = vunpack.c.l.b16 %v2626
        %v2698 = vpack.c.b16 %v2667, %v2666
        %v2699 = vpack.c.b16 %v2669, %v2668
        %v2700 = vpack.c.b16 %v2671, %v2670
        %v2701 = vpack.c.b16 %v2673, %v2672
        %v2702 = vpack.c.b16 %v2675, %v2674
        %v2703 = vpack.c.b16 %v2677, %v2676
        %v2704 = vpack.c.b16 %v2679, %v2678
        %v2705 = vpack.c.b16 %v2681, %v2680
        %v2706 = vpack.c.b16 %v2683, %v2682
        %v2707 = vpack.c.b16 %v2685, %v2684
        %v2708 = vpack.c.b16 %v2687, %v2686
        %v2709 = vpack.c.b16 %v2689, %v2688
        %v2710 = vpack.c.b16 %v2691, %v2690
        %v2711 = vpack.c.b16 %v2693, %v2692
        %v2712 = vpack.c.b16 %v2695, %v2694
        %v2713 = vpack.c.b16 %v2697, %v2696
        %2730 = vmatprep.subr.bf16.mxu0 0
        %2731 = vmatpush1.bf16.msra.mxu0 %v2698
        %2732 = vmatprep.subr.bf16.mxu0 0
        %2733 = vmatpush1.bf16.msra.mxu0 %v2699
        %2734 = vmatprep.subr.bf16.mxu0 0
        %2735 = vmatpush1.bf16.msra.mxu0 %v2700
        %2736 = vmatprep.subr.bf16.mxu0 0
        %2737 = vmatpush1.bf16.msra.mxu0 %v2701
        %2738 = vmatprep.subr.bf16.mxu0 0
        %2739 = vmatpush1.bf16.msra.mxu0 %v2702
        %2740 = vmatprep.subr.bf16.mxu0 0
        %2741 = vmatpush1.bf16.msra.mxu0 %v2703
        %2742 = vmatprep.subr.bf16.mxu0 0
        %2743 = vmatpush1.bf16.msra.mxu0 %v2704
        %2744 = vmatprep.subr.bf16.mxu0 0
        %2745 = vmatpush1.bf16.msra.mxu0 %v2705
        %2746 = vmatprep.subr.bf16.mxu0 0
        %2747 = vmatpush1.bf16.msra.mxu0 %v2706
        %2748 = vmatprep.subr.bf16.mxu0 0
        %2749 = vmatpush1.bf16.msra.mxu0 %v2707
        %2750 = vmatprep.subr.bf16.mxu0 0
        %2751 = vmatpush1.bf16.msra.mxu0 %v2708
        %2752 = vmatprep.subr.bf16.mxu0 0
        %2753 = vmatpush1.bf16.msra.mxu0 %v2709
        %2754 = vmatprep.subr.bf16.mxu0 0
        %2755 = vmatpush1.bf16.msra.mxu0 %v2710
        %2756 = vmatprep.subr.bf16.mxu0 0
        %2757 = vmatpush1.bf16.msra.mxu0 %v2711
        %2758 = vmatprep.subr.bf16.mxu0 0
        %2759 = vmatpush1.bf16.msra.mxu0 %v2712
        %2760 = vmatprep.subr.bf16.mxu0 0
        %2761 = vmatpush1.bf16.msra.mxu0 %v2713
        %2762 = vmatprep.mubr.bf16.mxu0 %v2532
        %2763 = vmatmul.mubr.bf16.gmra.mrb[0].mxu0 %v2531
        %v2764 = vpop.f32.mrb[0].mxu0
        %v2765 = vadd.f32 %v2632, %v2764
        %v2766 = vpop.f32.mrb[0].mxu0
        %v2767 = vpop.f32.mrb[0].mxu0
        %v2768 = vadd.f32 %v2632, %v2767
        %v2769 = vpop.f32.mrb[0].mxu0
        %2770 = vmatprep.mubr.bf16.mxu0 %v2534
        %2771 = vmatmul.mubr.bf16.gmra.mrb[0].mxu0 %v2533
        %v2772 = vpop.f32.mrb[0].mxu0
        %v2773 = vadd.f32 %v2632, %v2772
        %v2774 = vpop.f32.mrb[0].mxu0
        %v2775 = vpop.f32.mrb[0].mxu0
        %v2776 = vadd.f32 %v2632, %v2775
        %v2777 = vpop.f32.mrb[0].mxu0
        %2778 = vmatprep.mubr.bf16.mxu0 %v2536
        %2779 = vmatmul.mubr.bf16.gmra.mrb[0].mxu0 %v2535
        %v2780 = vpop.f32.mrb[0].mxu0
        %v2781 = vadd.f32 %v2632, %v2780
        %v2782 = vpop.f32.mrb[0].mxu0
        %v2783 = vpop.f32.mrb[0].mxu0
        %v2784 = vadd.f32 %v2632, %v2783
        %v2785 = vpop.f32.mrb[0].mxu0
        %2786 = vmatprep.mubr.bf16.mxu0 %v2538
        %2787 = vmatmul.mubr.bf16.gmra.mrb[0].mxu0 %v2537
        %v2788 = vpop.f32.mrb[0].mxu0
        %v2789 = vadd.f32 %v2632, %v2788
        %v2790 = vpop.f32.mrb[0].mxu0
        %v2791 = vpop.f32.mrb[0].mxu0
        %v2792 = vadd.f32 %v2632, %v2791
        %v2793 = vpop.f32.mrb[0].mxu0
        %2794 = vmatprep.mubr.bf16.mxu0 %v2540
        %2795 = vmatmul.mubr.bf16.gmra.mrb[0].mxu0 %v2539
        %v2796 = vpop.f32.mrb[0].mxu0
        %v2797 = vadd.f32 %v2632, %v2796
        %v2798 = vpop.f32.mrb[0].mxu0
        %v2799 = vpop.f32.mrb[0].mxu0
        %v2800 = vadd.f32 %v2632, %v2799
        %v2801 = vpop.f32.mrb[0].mxu0
        %2802 = vmatprep.mubr.bf16.mxu0 %v2542
        %2803 = vmatmul.mubr.bf16.gmra.mrb[0].mxu0 %v2541
        %v2804 = vpop.f32.mrb[0].mxu0
        %v2805 = vadd.f32 %v2632, %v2804
        %v2806 = vpop.f32.mrb[0].mxu0
        %v2807 = vpop.f32.mrb[0].mxu0
        %v2808 = vadd.f32 %v2632, %v2807
        %v2809 = vpop.f32.mrb[0].mxu0
        %2810 = vmatprep.mubr.bf16.mxu0 %v2544
        %2811 = vmatmul.mubr.bf16.gmra.mrb[0].mxu0 %v2543
        %v2812 = vpop.f32.mrb[0].mxu0
        %v2813 = vadd.f32 %v2632, %v2812
        %v2814 = vpop.f32.mrb[0].mxu0
        %v2815 = vpop.f32.mrb[0].mxu0
        %v2816 = vadd.f32 %v2632, %v2815
        %v2817 = vpop.f32.mrb[0].mxu0
        %2818 = vmatprep.mubr.bf16.mxu0 %v2546
        %2819 = vmatmul.mubr.bf16.gmra.mrb[0].mxu0 %v2545
        %v2820 = vpop.f32.mrb[0].mxu0
        %v2821 = vadd.f32 %v2632, %v2820
        %v2822 = vpop.f32.mrb[0].mxu0
        %v2823 = vpop.f32.mrb[0].mxu0
        %v2824 = vadd.f32 %v2632, %v2823
        %v2825 = vpop.f32.mrb[0].mxu0
        %2826 = vmatprep.mubr.bf16.mxu0 %v2548
        %2827 = vmatmul.mubr.bf16.gmra.mrb[0].mxu0 %v2547
        %v2828 = vpop.f32.mrb[0].mxu0
        %v2829 = vadd.f32 %v2632, %v2828
        %v2830 = vpop.f32.mrb[0].mxu0
        %v2831 = vpop.f32.mrb[0].mxu0
        %v2832 = vadd.f32 %v2632, %v2831
        %v2833 = vpop.f32.mrb[0].mxu0
        %2834 = vmatprep.mubr.bf16.mxu0 %v2550
        %2835 = vmatmul.mubr.bf16.gmra.mrb[0].mxu0 %v2549
        %v2836 = vpop.f32.mrb[0].mxu0
        %v2837 = vadd.f32 %v2632, %v2836
        %v2838 = vpop.f32.mrb[0].mxu0
        %v2839 = vpop.f32.mrb[0].mxu0
        %v2840 = vadd.f32 %v2632, %v2839
        %v2841 = vpop.f32.mrb[0].mxu0
        %2842 = vmatprep.mubr.bf16.mxu0 %v2552
        %2843 = vmatmul.mubr.bf16.gmra.mrb[0].mxu0 %v2551
        %v2844 = vpop.f32.mrb[0].mxu0
        %v2845 = vadd.f32 %v2632, %v2844
        %v2846 = vpop.f32.mrb[0].mxu0
        %v2847 = vpop.f32.mrb[0].mxu0
        %v2848 = vadd.f32 %v2632, %v2847
        %v2849 = vpop.f32.mrb[0].mxu0
        %2850 = vmatprep.mubr.bf16.mxu0 %v2554
        %2851 = vmatmul.mubr.bf16.gmra.mrb[0].mxu0 %v2553
        %v2852 = vpop.f32.mrb[0].mxu0
        %v2853 = vadd.f32 %v2632, %v2852
        %v2854 = vpop.f32.mrb[0].mxu0
        %v2855 = vpop.f32.mrb[0].mxu0
        %v2856 = vadd.f32 %v2632, %v2855
        %v2857 = vpop.f32.mrb[0].mxu0
        %2858 = vmatprep.mubr.bf16.mxu0 %v2556
        %2859 = vmatmul.mubr.bf16.gmra.mrb[0].mxu0 %v2555
        %v2860 = vpop.f32.mrb[0].mxu0
        %v2861 = vadd.f32 %v2632, %v2860
        %v2862 = vpop.f32.mrb[0].mxu0
        %v2863 = vpop.f32.mrb[0].mxu0
        %v2864 = vadd.f32 %v2632, %v2863
        %v2865 = vpop.f32.mrb[0].mxu0
        %2866 = vmatprep.mubr.bf16.mxu0 %v2558
        %2867 = vmatmul.mubr.bf16.gmra.mrb[0].mxu0 %v2557
        %v2868 = vpop.f32.mrb[0].mxu0
        %v2869 = vadd.f32 %v2632, %v2868
        %v2870 = vpop.f32.mrb[0].mxu0
        %v2871 = vpop.f32.mrb[0].mxu0
        %v2872 = vadd.f32 %v2632, %v2871
        %v2873 = vpop.f32.mrb[0].mxu0
        %2874 = vmatprep.mubr.bf16.mxu0 %v2560
        %2875 = vmatmul.mubr.bf16.gmra.mrb[0].mxu0 %v2559
        %v2876 = vpop.f32.mrb[0].mxu0
        %v2877 = vadd.f32 %v2632, %v2876
        %v2878 = vpop.f32.mrb[0].mxu0
        %v2879 = vpop.f32.mrb[0].mxu0
        %v2880 = vadd.f32 %v2632, %v2879
        %v2881 = vpop.f32.mrb[0].mxu0
        %2882 = vmatprep.mubr.bf16.mxu0 %v2562
        %2883 = vmatmul.mubr.bf16.gmra.mrb[0].mxu0 %v2561
        %v2884 = vpop.f32.mrb[0].mxu0
        %v2885 = vadd.f32 %v2632, %v2884
        %v2886 = vpop.f32.mrb[0].mxu0
        %v2887 = vpop.f32.mrb[0].mxu0
        %v2888 = vadd.f32 %v2632, %v2887
        %v2889 = vpop.f32.mrb[0].mxu0
        %2890 = vmatprep.mubr.bf16.mxu0 %v2564
        %2891 = vmatmul.mubr.bf16.gmra.mrb[0].mxu0 %v2563
        %v2892 = vpop.f32.mrb[0].mxu0
        %v2893 = vadd.f32 %v2632, %v2892
        %v2894 = vpop.f32.mrb[0].mxu0
        %v2895 = vpop.f32.mrb[0].mxu0
        %v2896 = vadd.f32 %v2632, %v2895
        %v2897 = vpop.f32.mrb[0].mxu0
        %2898 = vmatprep.mubr.bf16.mxu0 %v2566
        %2899 = vmatmul.mubr.bf16.gmra.mrb[0].mxu0 %v2565
        %v2900 = vpop.f32.mrb[0].mxu0
        %v2901 = vadd.f32 %v2632, %v2900
        %v2902 = vpop.f32.mrb[0].mxu0
        %v2903 = vpop.f32.mrb[0].mxu0
        %v2904 = vadd.f32 %v2632, %v2903
        %v2905 = vpop.f32.mrb[0].mxu0
        %2906 = vmatprep.mubr.bf16.mxu0 %v2568
        %2907 = vmatmul.mubr.bf16.gmra.mrb[0].mxu0 %v2567
        %v2908 = vpop.f32.mrb[0].mxu0
        %v2909 = vadd.f32 %v2632, %v2908
        %v2910 = vpop.f32.mrb[0].mxu0
        %v2911 = vpop.f32.mrb[0].mxu0
        %v2912 = vadd.f32 %v2632, %v2911
        %v2913 = vpop.f32.mrb[0].mxu0
        %2914 = vmatprep.mubr.bf16.mxu0 %v2570
        %2915 = vmatmul.mubr.bf16.gmra.mrb[0].mxu0 %v2569
        %v2916 = vpop.f32.mrb[0].mxu0
        %v2917 = vadd.f32 %v2632, %v2916
        %v2918 = vpop.f32.mrb[0].mxu0
        %v2919 = vpop.f32.mrb[0].mxu0
        %v2920 = vadd.f32 %v2632, %v2919
        %v2921 = vpop.f32.mrb[0].mxu0
        %2922 = vmatprep.mubr.bf16.mxu0 %v2572
        %2923 = vmatmul.mubr.bf16.gmra.mrb[0].mxu0 %v2571
        %v2924 = vpop.f32.mrb[0].mxu0
        %v2925 = vadd.f32 %v2632, %v2924
        %v2926 = vpop.f32.mrb[0].mxu0
        %v2927 = vpop.f32.mrb[0].mxu0
        %v2928 = vadd.f32 %v2632, %v2927
        %v2929 = vpop.f32.mrb[0].mxu0
        %2930 = vmatprep.mubr.bf16.mxu0 %v2574
        %2931 = vmatmul.mubr.bf16.gmra.mrb[0].mxu0 %v2573
        %v2932 = vpop.f32.mrb[0].mxu0
        %v2933 = vadd.f32 %v2632, %v2932
        %v2934 = vpop.f32.mrb[0].mxu0
        %v2935 = vpop.f32.mrb[0].mxu0
        %v2936 = vadd.f32 %v2632, %v2935
        %v2937 = vpop.f32.mrb[0].mxu0
        %2938 = vmatprep.mubr.bf16.mxu0 %v2576
        %2939 = vmatmul.mubr.bf16.gmra.mrb[0].mxu0 %v2575
        %v2940 = vpop.f32.mrb[0].mxu0
        %v2941 = vadd.f32 %v2632, %v2940
        %v2942 = vpop.f32.mrb[0].mxu0
        %v2943 = vpop.f32.mrb[0].mxu0
        %v2944 = vadd.f32 %v2632, %v2943
        %v2945 = vpop.f32.mrb[0].mxu0
        %2946 = vmatprep.mubr.bf16.mxu0 %v2578
        %2947 = vmatmul.mubr.bf16.gmra.mrb[0].mxu0 %v2577
        %v2948 = vpop.f32.mrb[0].mxu0
        %v2949 = vadd.f32 %v2632, %v2948
        %v2950 = vpop.f32.mrb[0].mxu0
        %v2951 = vpop.f32.mrb[0].mxu0
        %v2952 = vadd.f32 %v2632, %v2951
        %v2953 = vpop.f32.mrb[0].mxu0
        %2954 = vmatprep.mubr.bf16.mxu0 %v2580
        %2955 = vmatmul.mubr.bf16.gmra.mrb[0].mxu0 %v2579
        %v2956 = vpop.f32.mrb[0].mxu0
        %v2957 = vadd.f32 %v2632, %v2956
        %v2958 = vpop.f32.mrb[0].mxu0
        %v2959 = vpop.f32.mrb[0].mxu0
        %v2960 = vadd.f32 %v2632, %v2959
        %v2961 = vpop.f32.mrb[0].mxu0
        %2962 = vmatprep.mubr.bf16.mxu0 %v2582
        %2963 = vmatmul.mubr.bf16.gmra.mrb[0].mxu0 %v2581
        %v2964 = vpop.f32.mrb[0].mxu0
        %v2965 = vadd.f32 %v2632, %v2964
        %v2966 = vpop.f32.mrb[0].mxu0
        %v2967 = vpop.f32.mrb[0].mxu0
        %v2968 = vadd.f32 %v2632, %v2967
        %v2969 = vpop.f32.mrb[0].mxu0
        %2970 = vmatprep.mubr.bf16.mxu0 %v2584
        %2971 = vmatmul.mubr.bf16.gmra.mrb[0].mxu0 %v2583
        %v2972 = vpop.f32.mrb[0].mxu0
        %v2973 = vadd.f32 %v2632, %v2972
        %v2974 = vpop.f32.mrb[0].mxu0
        %v2975 = vpop.f32.mrb[0].mxu0
        %v2976 = vadd.f32 %v2632, %v2975
        %v2977 = vpop.f32.mrb[0].mxu0
        %2978 = vmatprep.mubr.bf16.mxu0 %v2586
        %2979 = vmatmul.mubr.bf16.gmra.mrb[0].mxu0 %v2585
        %v2980 = vpop.f32.mrb[0].mxu0
        %v2981 = vadd.f32 %v2632, %v2980
        %v2982 = vpop.f32.mrb[0].mxu0
        %v2983 = vpop.f32.mrb[0].mxu0
        %v2984 = vadd.f32 %v2632, %v2983
        %v2985 = vpop.f32.mrb[0].mxu0
        %2986 = vmatprep.mubr.bf16.mxu0 %v2588
        %2987 = vmatmul.mubr.bf16.gmra.mrb[0].mxu0 %v2587
        %v2988 = vpop.f32.mrb[0].mxu0
        %v2989 = vadd.f32 %v2632, %v2988
        %v2990 = vpop.f32.mrb[0].mxu0
        %v2991 = vpop.f32.mrb[0].mxu0
        %v2992 = vadd.f32 %v2632, %v2991
        %v2993 = vpop.f32.mrb[0].mxu0
        %2994 = vmatprep.mubr.bf16.mxu0 %v2590
        %2995 = vmatmul.mubr.bf16.gmra.mrb[0].mxu0 %v2589
        %v2996 = vpop.f32.mrb[0].mxu0
        %v2997 = vadd.f32 %v2632, %v2996
        %v2998 = vpop.f32.mrb[0].mxu0
        %v2999 = vpop.f32.mrb[0].mxu0
        %v3000 = vadd.f32 %v2632, %v2999
        %v3001 = vpop.f32.mrb[0].mxu0
        %3002 = vmatprep.mubr.bf16.mxu0 %v2592
        %3003 = vmatmul.mubr.bf16.gmra.mrb[0].mxu0 %v2591
        %v3004 = vpop.f32.mrb[0].mxu0
        %v3005 = vadd.f32 %v2632, %v3004
        %v3006 = vpop.f32.mrb[0].mxu0
        %v3007 = vpop.f32.mrb[0].mxu0
        %v3008 = vadd.f32 %v2632, %v3007
        %v3009 = vpop.f32.mrb[0].mxu0
        %3010 = vmatprep.mubr.bf16.mxu0 %v2594
        %3011 = vmatmul.mubr.bf16.gmra.mrb[0].mxu0 %v2593
        %v3012 = vpop.f32.mrb[0].mxu0
        %v3013 = vadd.f32 %v2632, %v3012
        %v3014 = vpop.f32.mrb[0].mxu0
        %v3015 = vpop.f32.mrb[0].mxu0
        %v3016 = vadd.f32 %v2632, %v3015
        %v3017 = vpop.f32.mrb[0].mxu0
        %3018 = vdwg.mxu0
        %v3019 = vpack.c.bf16 %v2768, %v2765
        %v3020 = vpack.c.bf16 %v2776, %v2773
        %v3021 = vpack.c.bf16 %v2784, %v2781
        %v3022 = vpack.c.bf16 %v2792, %v2789
        %v3023 = vpack.c.bf16 %v2800, %v2797
        %v3024 = vpack.c.bf16 %v2808, %v2805
        %v3025 = vpack.c.bf16 %v2816, %v2813
        %v3026 = vpack.c.bf16 %v2824, %v2821
        %v3027 = vpack.c.bf16 %v2832, %v2829
        %v3028 = vpack.c.bf16 %v2840, %v2837
        %v3029 = vpack.c.bf16 %v2848, %v2845
        %v3030 = vpack.c.bf16 %v2856, %v2853
        %v3031 = vpack.c.bf16 %v2864, %v2861
        %v3032 = vpack.c.bf16 %v2872, %v2869
        %v3033 = vpack.c.bf16 %v2880, %v2877
        %v3034 = vpack.c.bf16 %v2888, %v2885
        %v3035 = vpack.c.bf16 %v2896, %v2893
        %v3036 = vpack.c.bf16 %v2904, %v2901
        %v3037 = vpack.c.bf16 %v2912, %v2909
        %v3038 = vpack.c.bf16 %v2920, %v2917
        %v3039 = vpack.c.bf16 %v2928, %v2925
        %v3040 = vpack.c.bf16 %v2936, %v2933
        %v3041 = vpack.c.bf16 %v2944, %v2941
        %v3042 = vpack.c.bf16 %v2952, %v2949
        %v3043 = vpack.c.bf16 %v2960, %v2957
        %v3044 = vpack.c.bf16 %v2968, %v2965
        %v3045 = vpack.c.bf16 %v2976, %v2973
        %v3046 = vpack.c.bf16 %v2984, %v2981
        %v3047 = vpack.c.bf16 %v2992, %v2989
        %v3048 = vpack.c.bf16 %v3000, %v2997
        %v3049 = vpack.c.bf16 %v3008, %v3005
        %v3050 = vpack.c.bf16 %v3016, %v3013
        %v3083 = vunpack.c.l.b16 %v3019
        %v3084 = vunpack.c.h.b16 %v3019
        %v3085 = vunpack.c.l.b16 %v3020
        %v3086 = vunpack.c.h.b16 %v3020
        %v3087 = vunpack.c.l.b16 %v3021
        %v3088 = vunpack.c.h.b16 %v3021
        %v3089 = vunpack.c.l.b16 %v3022
        %v3090 = vunpack.c.h.b16 %v3022
        %v3091 = vunpack.c.l.b16 %v3023
        %v3092 = vunpack.c.h.b16 %v3023
        %v3093 = vunpack.c.l.b16 %v3024
        %v3094 = vunpack.c.h.b16 %v3024
        %v3095 = vunpack.c.l.b16 %v3025
        %v3096 = vunpack.c.h.b16 %v3025
        %v3097 = vunpack.c.l.b16 %v3026
        %v3098 = vunpack.c.h.b16 %v3026
        %v3099 = vunpack.c.l.b16 %v3027
        %v3100 = vunpack.c.h.b16 %v3027
        %v3101 = vunpack.c.l.b16 %v3028
        %v3102 = vunpack.c.h.b16 %v3028
        %v3103 = vunpack.c.l.b16 %v3029
        %v3104 = vunpack.c.h.b16 %v3029
        %v3105 = vunpack.c.l.b16 %v3030
        %v3106 = vunpack.c.h.b16 %v3030
        %v3107 = vunpack.c.l.b16 %v3031
        %v3108 = vunpack.c.h.b16 %v3031
        %v3109 = vunpack.c.l.b16 %v3032
        %v3110 = vunpack.c.h.b16 %v3032
        %v3111 = vunpack.c.l.b16 %v3033
        %v3112 = vunpack.c.h.b16 %v3033
        %v3113 = vunpack.c.l.b16 %v3034
        %v3114 = vunpack.c.h.b16 %v3034
        %v3115 = vunpack.c.l.b16 %v3035
        %v3116 = vunpack.c.h.b16 %v3035
        %v3117 = vunpack.c.l.b16 %v3036
        %v3118 = vunpack.c.h.b16 %v3036
        %v3119 = vunpack.c.l.b16 %v3037
        %v3120 = vunpack.c.h.b16 %v3037
        %v3121 = vunpack.c.l.b16 %v3038
        %v3122 = vunpack.c.h.b16 %v3038
        %v3123 = vunpack.c.l.b16 %v3039
        %v3124 = vunpack.c.h.b16 %v3039
        %v3125 = vunpack.c.l.b16 %v3040
        %v3126 = vunpack.c.h.b16 %v3040
        %v3127 = vunpack.c.l.b16 %v3041
        %v3128 = vunpack.c.h.b16 %v3041
        %v3129 = vunpack.c.l.b16 %v3042
        %v3130 = vunpack.c.h.b16 %v3042
        %v3131 = vunpack.c.l.b16 %v3043
        %v3132 = vunpack.c.h.b16 %v3043
        %v3133 = vunpack.c.l.b16 %v3044
        %v3134 = vunpack.c.h.b16 %v3044
        %v3135 = vunpack.c.l.b16 %v3045
        %v3136 = vunpack.c.h.b16 %v3045
        %v3137 = vunpack.c.l.b16 %v3046
        %v3138 = vunpack.c.h.b16 %v3046
        %v3139 = vunpack.c.l.b16 %v3047
        %v3140 = vunpack.c.h.b16 %v3047
        %v3141 = vunpack.c.l.b16 %v3048
        %v3142 = vunpack.c.h.b16 %v3048
        %v3143 = vunpack.c.l.b16 %v3049
        %v3144 = vunpack.c.h.b16 %v3049
        %v3145 = vunpack.c.l.b16 %v3050
        %v3146 = vunpack.c.h.b16 %v3050
        %v3147 = vpack.c.b16 %v3083, %v3083
        %v3148 = vpack.c.b16 %v3084, %v3084
        %v3149 = vpack.c.b16 %v3085, %v3085
        %v3150 = vpack.c.b16 %v3086, %v3086
        %v3151 = vpack.c.b16 %v3087, %v3087
        %v3152 = vpack.c.b16 %v3088, %v3088
        %v3153 = vpack.c.b16 %v3089, %v3089
        %v3154 = vpack.c.b16 %v3090, %v3090
        %v3155 = vpack.c.b16 %v3091, %v3091
        %v3156 = vpack.c.b16 %v3092, %v3092
        %v3157 = vpack.c.b16 %v3093, %v3093
        %v3158 = vpack.c.b16 %v3094, %v3094
        %v3159 = vpack.c.b16 %v3095, %v3095
        %v3160 = vpack.c.b16 %v3096, %v3096
        %v3161 = vpack.c.b16 %v3097, %v3097
        %v3162 = vpack.c.b16 %v3098, %v3098
        %v3163 = vpack.c.b16 %v3099, %v3099
        %v3164 = vpack.c.b16 %v3100, %v3100
        %v3165 = vpack.c.b16 %v3101, %v3101
        %v3166 = vpack.c.b16 %v3102, %v3102
        %v3167 = vpack.c.b16 %v3103, %v3103
        %v3168 = vpack.c.b16 %v3104, %v3104
        %v3169 = vpack.c.b16 %v3105, %v3105
        %v3170 = vpack.c.b16 %v3106, %v3106
        %v3171 = vpack.c.b16 %v3107, %v3107
        %v3172 = vpack.c.b16 %v3108, %v3108
        %v3173 = vpack.c.b16 %v3109, %v3109
        %v3174 = vpack.c.b16 %v3110, %v3110
        %v3175 = vpack.c.b16 %v3111, %v3111
        %v3176 = vpack.c.b16 %v3112, %v3112
        %v3177 = vpack.c.b16 %v3113, %v3113
        %v3178 = vpack.c.b16 %v3114, %v3114
        %v3179 = vpack.c.b16 %v3115, %v3115
        %v3180 = vpack.c.b16 %v3116, %v3116
        %v3181 = vpack.c.b16 %v3117, %v3117
        %v3182 = vpack.c.b16 %v3118, %v3118
        %v3183 = vpack.c.b16 %v3119, %v3119
        %v3184 = vpack.c.b16 %v3120, %v3120
        %v3185 = vpack.c.b16 %v3121, %v3121
        %v3186 = vpack.c.b16 %v3122, %v3122
        %v3187 = vpack.c.b16 %v3123, %v3123
        %v3188 = vpack.c.b16 %v3124, %v3124
        %v3189 = vpack.c.b16 %v3125, %v3125
        %v3190 = vpack.c.b16 %v3126, %v3126
        %v3191 = vpack.c.b16 %v3127, %v3127
        %v3192 = vpack.c.b16 %v3128, %v3128
        %v3193 = vpack.c.b16 %v3129, %v3129
        %v3194 = vpack.c.b16 %v3130, %v3130
        %v3195 = vpack.c.b16 %v3131, %v3131
        %v3196 = vpack.c.b16 %v3132, %v3132
        %v3197 = vpack.c.b16 %v3133, %v3133
        %v3198 = vpack.c.b16 %v3134, %v3134
        %v3199 = vpack.c.b16 %v3135, %v3135
        %v3200 = vpack.c.b16 %v3136, %v3136
        %v3201 = vpack.c.b16 %v3137, %v3137
        %v3202 = vpack.c.b16 %v3138, %v3138
        %v3203 = vpack.c.b16 %v3139, %v3139
        %v3204 = vpack.c.b16 %v3140, %v3140
        %v3205 = vpack.c.b16 %v3141, %v3141
        %v3206 = vpack.c.b16 %v3142, %v3142
        %v3207 = vpack.c.b16 %v3143, %v3143
        %v3208 = vpack.c.b16 %v3144, %v3144
        %v3209 = vpack.c.b16 %v3145, %v3145
        %v3210 = vpack.c.b16 %v3146, %v3146
        %3275 = vst [vmem:[%s326] sm:$0xf] %v3147
        %3276 = vst [vmem:[%s326 + $0x4] sm:$0xf] %v3148
        %3277 = vst [vmem:[%s326 + $0x8] sm:$0xf] %v3149
        %3278 = vst [vmem:[%s326 + $0xc] sm:$0xf] %v3150
        %3279 = vst [vmem:[%s326 + $0x10] sm:$0xf] %v3151
        %3280 = vst [vmem:[%s326 + $0x14] sm:$0xf] %v3152
        %3281 = vst [vmem:[%s326 + $0x18] sm:$0xf] %v3153
        %3282 = vst [vmem:[%s326 + $0x1c] sm:$0xf] %v3154
        %3283 = vst [vmem:[%s326 + $0x20] sm:$0xf] %v3155
        %3284 = vst [vmem:[%s326 + $0x24] sm:$0xf] %v3156
        %3285 = vst [vmem:[%s326 + $0x28] sm:$0xf] %v3157
        %3286 = vst [vmem:[%s326 + $0x2c] sm:$0xf] %v3158
        %3287 = vst [vmem:[%s326 + $0x30] sm:$0xf] %v3159
        %3288 = vst [vmem:[%s326 + $0x34] sm:$0xf] %v3160
        %3289 = vst [vmem:[%s326 + $0x38] sm:$0xf] %v3161
        %3290 = vst [vmem:[%s326 + $0x3c] sm:$0xf] %v3162
        %3291 = vst [vmem:[%s326 + $0x40] sm:$0xf] %v3163
        %3292 = vst [vmem:[%s326 + $0x44] sm:$0xf] %v3164
        %3293 = vst [vmem:[%s326 + $0x48] sm:$0xf] %v3165
        %3294 = vst [vmem:[%s326 + $0x4c] sm:$0xf] %v3166
        %3295 = vst [vmem:[%s326 + $0x50] sm:$0xf] %v3167
        %3296 = vst [vmem:[%s326 + $0x54] sm:$0xf] %v3168
        %3297 = vst [vmem:[%s326 + $0x58] sm:$0xf] %v3169
        %3298 = vst [vmem:[%s326 + $0x5c] sm:$0xf] %v3170
        %3299 = vst [vmem:[%s326 + $0x60] sm:$0xf] %v3171
        %3300 = vst [vmem:[%s326 + $0x64] sm:$0xf] %v3172
        %3301 = vst [vmem:[%s326 + $0x68] sm:$0xf] %v3173
        %3302 = vst [vmem:[%s326 + $0x6c] sm:$0xf] %v3174
        %3303 = vst [vmem:[%s326 + $0x70] sm:$0xf] %v3175
        %3304 = vst [vmem:[%s326 + $0x74] sm:$0xf] %v3176
        %3305 = vst [vmem:[%s326 + $0x78] sm:$0xf] %v3177
        %3306 = vst [vmem:[%s326 + $0x7c] sm:$0xf] %v3178
        %3307 = vst [vmem:[%s326 + $0x80] sm:$0xf] %v3179
        %3308 = vst [vmem:[%s326 + $0x84] sm:$0xf] %v3180
        %3309 = vst [vmem:[%s326 + $0x88] sm:$0xf] %v3181
        %3310 = vst [vmem:[%s326 + $0x8c] sm:$0xf] %v3182
        %3311 = vst [vmem:[%s326 + $0x90] sm:$0xf] %v3183
        %3312 = vst [vmem:[%s326 + $0x94] sm:$0xf] %v3184
        %3313 = vst [vmem:[%s326 + $0x98] sm:$0xf] %v3185
        %3314 = vst [vmem:[%s326 + $0x9c] sm:$0xf] %v3186
        %3315 = vst [vmem:[%s326 + $0xa0] sm:$0xf] %v3187
        %3316 = vst [vmem:[%s326 + $0xa4] sm:$0xf] %v3188
        %3317 = vst [vmem:[%s326 + $0xa8] sm:$0xf] %v3189
        %3318 = vst [vmem:[%s326 + $0xac] sm:$0xf] %v3190
        %3319 = vst [vmem:[%s326 + $0xb0] sm:$0xf] %v3191
        %3320 = vst [vmem:[%s326 + $0xb4] sm:$0xf] %v3192
        %3321 = vst [vmem:[%s326 + $0xb8] sm:$0xf] %v3193
        %3322 = vst [vmem:[%s326 + $0xbc] sm:$0xf] %v3194
        %3323 = vst [vmem:[%s326 + $0xc0] sm:$0xf] %v3195
        %3324 = vst [vmem:[%s326 + $0xc4] sm:$0xf] %v3196
        %3325 = vst [vmem:[%s326 + $0xc8] sm:$0xf] %v3197
        %3326 = vst [vmem:[%s326 + $0xcc] sm:$0xf] %v3198
        %3327 = vst [vmem:[%s326 + $0xd0] sm:$0xf] %v3199
        %3328 = vst [vmem:[%s326 + $0xd4] sm:$0xf] %v3200
        %3329 = vst [vmem:[%s326 + $0xd8] sm:$0xf] %v3201
        %3330 = vst [vmem:[%s326 + $0xdc] sm:$0xf] %v3202
        %3331 = vst [vmem:[%s326 + $0xe0] sm:$0xf] %v3203
        %3332 = vst [vmem:[%s326 + $0xe4] sm:$0xf] %v3204
        %3333 = vst [vmem:[%s326 + $0xe8] sm:$0xf] %v3205
        %3334 = vst [vmem:[%s326 + $0xec] sm:$0xf] %v3206
        %3335 = vst [vmem:[%s326 + $0xf0] sm:$0xf] %v3207
        %3336 = vst [vmem:[%s326 + $0xf4] sm:$0xf] %v3208
        %3337 = vst [vmem:[%s326 + $0xf8] sm:$0xf] %v3209
        %3338 = vst [vmem:[%s326 + $0xfc] sm:$0xf] %v3210
        %s3339 = sand.u32 %s225, 1
        %s3340 = scalar_lea.sflag [#allocation3], %s3339
        %s3341 = sand.u32 %s225, 1
        %s3342 = smul.addr %s3341, 256
        %s3343 = scalar_lea.vmem [#allocation2], %s3342
        // Predicated region
        $region57: #{tpu_custom_call.1} parent=55 // pred_check
          %p3344 = pneg %p235
        $region58: #{tpu_custom_call.1} parent=55 // pred_check_branch
          %3346 = sbr.rel (%p3344) target = $region60
        $region59: #{tpu_custom_call.1} parent=55 // pred_region
          %s3347 = smul.u32 64, %s23
          %s3349 = ssub.s32 4096, 4096
          %3350 = vsyncadd %s3340, %s3349
          %s3351 = smul.addr %s3347, 64
          %s3352 = scalar_lea.hbm %s9, %s3351
          %s3353 = sshll.u32 %s3343, 4
          %s3354 = int_to_ptr.vmem [resolvable:$true] %s3353
          %3359 = dma.vmem_to_hbm [thread:$0]  %s3354, 4096, %s3352, %s3340, 64, 64, 4
        $region60: #{tpu_custom_call.1} parent=55 // pred_fallthru
          _
      $region56: #{tpu_custom_call.1} parent=5 // pred_fallthru
        _
      %p3360 = scmp.le.s32.totalorder 2, %s18
      // Predicated region
      $region61: #{tpu_custom_call.1} parent=5 // pred_check
        %p3361 = pneg %p3360
      $region62: #{tpu_custom_call.1} parent=5 // pred_check_branch
        %3363 = sbr.rel (%p3361) target = $region64
      $region63: #{tpu_custom_call.1} parent=5 // pred_region
        %s3364 = ssub.s32 %s18, 2
        // Predicated region
        $region65: #{tpu_custom_call.1} parent=63 // pred_check
          %p3365 = pneg %p241
        $region66: #{tpu_custom_call.1} parent=63 // pred_check_branch
          %3367 = sbr.rel (%p3365) target = $region68
        $region67: #{tpu_custom_call.1} parent=63 // pred_region
          %s3368 = sand.u32 %s226, 1
          %s3369 = scalar_lea.sflag [#allocation3], %s3368
          %s3370 = sand.u32 %s226, 1
          %s3371 = smul.addr %s3370, 256
          %s3372 = scalar_lea.vmem [#allocation2], %s3371
          %3373 = dma.done %s3369, 4096
        $region68: #{tpu_custom_call.1} parent=63 // pred_fallthru
          _
      $region64: #{tpu_custom_call.1} parent=5 // pred_fallthru
        _
    $region6: #{tpu_custom_call.1} parent=1 // loop_footer
      %s22 = sadd.s32 1, %s18
    $region7: #{tpu_custom_call.1} parent=1 // loop_footer_branch
      %17 = sbr.rel target = $region3
    $region8: #{tpu_custom_call.1} parent=1 // loop_exit
      _
    %3374 = vsyncpa [#allocation3], 1
    %s3375 = scalar_lea.sflag [#allocation3], 1
    %3376 = vsyncpa %s3375, 1

</llo_original>
